<compile_context>
chip_gen: v6e
topology: v6e:2x2x1
jax: 0.10.0
libtpu: 0.0.40
codegen_flags: <defaults>
</compile_context>

<pallas_src>
import functools
import math

import numpy as np
import jax
import jax.numpy as jnp
from jax import lax
from jax.experimental import pallas as pl
from jax.experimental.pallas import tpu as pltpu


# ----------------------------------------------------------------------------
# Single fused forward kernel
# ----------------------------------------------------------------------------
def _dlrm_fused_kernel(*refs, num_emb, n_bottom, n_mid, pairs):
    """refs = (numerical, idx, emb_tables..., (w,b)*bottom,
               w0_bottom, w0_pairs, b0, (w,b)*mid, wlast_t, blast, out)."""
    it = iter(refs)
    num_ref = next(it)                                  # (tile_b, num_numerical)
    idx_ref = next(it)                                  # (tile_b, C) int32
    emb_refs = [next(it) for _ in range(num_emb)]       # (V_c, D) each
    bot_params = [(next(it), next(it)) for _ in range(n_bottom)]
    w0b_ref = next(it)                                  # (D, H0)
    w0p_ref = next(it)                                  # (npairs, H0)
    b0_ref = next(it)                                   # (1, H0)
    mid_params = [(next(it), next(it)) for _ in range(n_mid)]
    wlast_ref = next(it)                                # (out_dim, H_last)
    blast_ref = next(it)                                # (out_dim, 1)
    out_ref = next(it)                                  # (out_dim, tile_b) lane-dense

    tile_b = num_ref.shape[0]

    # ---- bottom MLP (Linear + ReLU per layer) --------------------------------
    x = num_ref[...].astype(jnp.float32)
    for w_ref, b_ref in bot_params:
        x = jnp.maximum(
            jnp.dot(x, w_ref[...], preferred_element_type=jnp.float32) + b_ref[...],
            0.0)
    bottom = x                                          # (tile_b, D)

    # ---- embedding lookups: vectorized one-hot matmul per table --------------
    idx = idx_ref[...]                                  # (tile_b, C)
    feats = [bottom]
    for c, tbl_ref in enumerate(emb_refs):
        v = tbl_ref.shape[0]
        onehot = (lax.broadcasted_iota(jnp.int32, (tile_b, v), 1)
                  == idx[:, c:c + 1]).astype(jnp.float32)          # (tile_b, V)
        feats.append(jnp.dot(onehot, tbl_ref[...],
                             preferred_element_type=jnp.float32))  # (tile_b, D)

    # ---- first top layer with the 'dot' interaction fused in -----------------
    # y = [bottom | pair_dots | 0] @ W0 + b0  ==  bottom @ W0[:D] (MXU)
    #     + sum_k pair_dot_k * W0[D+k] (VPU broadcast FMAs); zero-pad term is 0.
    y = jnp.dot(bottom, w0b_ref[...], preferred_element_type=jnp.float32) + b0_ref[...]
    for k, (i, j) in enumerate(pairs):
        pc = jnp.sum(feats[i] * feats[j], axis=1, keepdims=True)   # (tile_b, 1)
        y = y + pc * w0p_ref[k:k + 1, :]
    x = jnp.maximum(y, 0.0)

    # ---- remaining hidden top layers ------------------------------------------
    for w_ref, b_ref in mid_params:
        x = jnp.maximum(
            jnp.dot(x, w_ref[...], preferred_element_type=jnp.float32) + b_ref[...],
            0.0)

    # ---- last layer + sigmoid; write lane-dense (out_dim, tile_b) -------------
    logits = (jnp.dot(wlast_ref[...], x.T, preferred_element_type=jnp.float32)
              + blast_ref[...])                          # (out_dim, tile_b)
    out_ref[...] = jax.nn.sigmoid(logits).astype(out_ref.dtype)


def dlrm_forward(params, numerical_input, categorical_inputs, *, tile_b=None):
    b, n_num = numerical_input.shape
    c = categorical_inputs.shape[0]
    d = params["embedding_dim"]
    tables = params["embeddings"]
    bw, bb = params["bottom_w"], params["bottom_b"]
    tw, tb = list(params["top_w"]), list(params["top_b"])
    assert len(tw) >= 2, "top MLP must have at least two Linear layers"
    out_dim = tw[-1].shape[1]

    # Batch tile: 128 fills full vregs / MXU rows.  TODO(synk): 256 on v6e/v7x.
    if tile_b is None:
        tile_b = min(b, 128)
    assert b % tile_b == 0
    assert tile_b == b or tile_b % 128 == 0
    grid = (b // tile_b,)

    # tril_indices(F, F, offset=-1) order (row-major).
    num_f = c + 1
    pairs = tuple((i, j) for i in range(num_f) for j in range(i))
    npairs = len(pairs)

    # Indices as a batch-tiled VMEM input (B, C).
    idx_bc = jnp.transpose(categorical_inputs).astype(jnp.int32)

    # Split the first top-layer weight: bottom rows, pair rows; drop zero-pad row.
    w0 = tw[0]
    w0_bottom = w0[:d]                       # (D, H0)
    w0_pairs = w0[d:d + npairs]              # (npairs, H0)
    # Last layer transposed so the kernel writes (out_dim, tile_b) directly.
    wlast_t = jnp.transpose(tw[-1])          # (out_dim, H_last)
    blast = tb[-1].reshape(out_dim, 1)

    def const_spec(shape):
        return pl.BlockSpec(shape, lambda i: (0,) * len(shape))

    args = [numerical_input, idx_bc]
    in_specs = [
        pl.BlockSpec((tile_b, n_num), lambda i: (i, 0)),
        pl.BlockSpec((tile_b, c), lambda i: (i, 0)),
    ]
    for t in tables:
        args.append(t)
        in_specs.append(const_spec(t.shape))
    for w, bias in zip(bw, bb):
        args += [w, bias.reshape(1, -1)]
        in_specs += [const_spec(w.shape), const_spec((1, bias.shape[0]))]
    args += [w0_bottom, w0_pairs, tb[0].reshape(1, -1)]
    in_specs += [const_spec(w0_bottom.shape), const_spec(w0_pairs.shape),
                 const_spec((1, tb[0].shape[0]))]
    for w, bias in zip(tw[1:-1], tb[1:-1]):
        args += [w, bias.reshape(1, -1)]
        in_specs += [const_spec(w.shape), const_spec((1, bias.shape[0]))]
    args += [wlast_t, blast]
    in_specs += [const_spec(wlast_t.shape), const_spec(blast.shape)]

    kernel = functools.partial(
        _dlrm_fused_kernel,
        num_emb=len(tables), n_bottom=len(bw), n_mid=len(tw) - 2, pairs=pairs,
    )

    # Advisory cost estimate (unique bytes; one sigmoid per sample).
    h0 = int(w0.shape[1])
    flops = 2 * b * (
        sum(int(w.shape[0]) * int(w.shape[1]) for w in bw)
        + sum(int(t.shape[0]) * d for t in tables)
        + npairs * d
        + d * h0 + npairs * h0
        + sum(int(w.shape[0]) * int(w.shape[1]) for w in tw[1:])
    )
    weight_bytes = 4 * (
        sum(int(np.prod(t.shape)) for t in tables)
        + sum(int(np.prod(w.shape)) + int(np.prod(x.shape))
              for w, x in zip(bw + tw, bb + tb))
    )
    bytes_accessed = weight_bytes + 4 * b * (n_num + c + out_dim)
    cost = pl.CostEstimate(flops=flops, transcendentals=b * out_dim,
                           bytes_accessed=bytes_accessed)

    out = pl.pallas_call(
        kernel,
        out_shape=jax.ShapeDtypeStruct((out_dim, b), jnp.float32),
        grid=grid,
        in_specs=in_specs,
        out_specs=pl.BlockSpec((out_dim, tile_b), lambda i: (0, i)),
        compiler_params=pltpu.CompilerParams(
            dimension_semantics=("parallel",),          # megacore sharding on v7x
            vmem_limit_bytes=32 * 1024 * 1024,
        ),
        cost_estimate=cost,
    )(*args)

    return jnp.transpose(out)                            # (B, out_dim)


# ----------------------------------------------------------------------------
# Pure JAX reference (matches PyTorch semantics) for a correctness check
# ----------------------------------------------------------------------------
def dlrm_reference(params, numerical_input, categorical_inputs):
    def mlp(x, ws, bs, final_act):
        for i, (w, b) in enumerate(zip(ws, bs)):
            x = x @ w + b
            if i < len(ws) - 1 or final_act == "relu":
                x = jnp.maximum(x, 0.0)
        if final_act == "sigmoid":
            x = jax.nn.sigmoid(x)
        return x

    bottom = mlp(numerical_input, params["bottom_w"], params["bottom_b"], "relu")
    emb_outs = [tbl[categorical_inputs[i]] for i, tbl in enumerate(params["embeddings"])]
    concat = jnp.stack([bottom] + emb_outs, axis=1)
    z = jnp.einsum("bfd,bgd->bfg", concat, concat)
    f = concat.shape[1]
    rows, cols = np.tril_indices(f, k=-1)
    flat = z[:, rows, cols]
    inter = jnp.concatenate(
        [bottom, flat, jnp.zeros((bottom.shape[0], 1), jnp.float32)], axis=1
    )
    return mlp(inter, params["top_w"], params["top_b"], "sigmoid")


# ----------------------------------------------------------------------------
# Deterministic parameter init (mirrors DlrmBase._initialize_mlp_weights and
# the uniform embedding init in Dlrm._create_embeddings)
# ----------------------------------------------------------------------------
def init_params(key, num_numerical, cat_sizes, bottom_sizes, top_sizes, emb_dim):
    keys = iter(jax.random.split(key, 64))
    params = {"embedding_dim": emb_dim}

    embeddings = []
    for v in cat_sizes:
        bound = math.sqrt(1.0 / v)
        embeddings.append(
            jax.random.uniform(next(keys), (v, emb_dim), jnp.float32, -bound, bound)
        )
    params["embeddings"] = embeddings

    def linear(k, din, dout):
        kw, kb = jax.random.split(k)
        w = jax.random.normal(kw, (din, dout), jnp.float32) * math.sqrt(2.0 / (din + dout))
        b = jax.random.normal(kb, (dout,), jnp.float32) * math.sqrt(1.0 / dout)
        return w, b

    bw, bb = [], []
    din = num_numerical
    for dout in bottom_sizes:
        w, b = linear(next(keys), din, dout)
        bw.append(w); bb.append(b); din = dout
    params["bottom_w"], params["bottom_b"] = bw, bb

    num_f = len(cat_sizes) + 1
    num_interactions = num_f * (num_f - 1) // 2 + emb_dim
    tw, tb = [], []
    din = num_interactions + 1
    for dout in top_sizes:
        w, b = linear(next(keys), din, dout)
        tw.append(w); tb.append(b); din = dout
    # PyTorch: nn.init.zeros_(self.top_mlp[0].weight[:, -1]) — zero pad column's weights.
    tw[0] = tw[0].at[-1, :].set(0.0)
    params["top_w"], params["top_b"] = tw, tb
    return params


if __name__ == "__main__":
    B = 256                      # grid of 2 parallel steps at tile_b=128 (both TCs on v7x)
    NUM_NUMERICAL = 13
    CAT_SIZES = [20, 30, 40, 50]
    EMB_DIM = 32
    BOTTOM_SIZES = [64, EMB_DIM]
    TOP_SIZES = [64, 32, 1]

    key = jax.random.PRNGKey(0)
    kp, kn, kc = jax.random.split(key, 3)
    params = init_params(kp, NUM_NUMERICAL, CAT_SIZES, BOTTOM_SIZES, TOP_SIZES, EMB_DIM)

    numerical = jax.random.normal(kn, (B, NUM_NUMERICAL), jnp.float32)
    cat_keys = jax.random.split(kc, len(CAT_SIZES))
    categorical = jnp.stack(
        [jax.random.randint(cat_keys[i], (B,), 0, CAT_SIZES[i], jnp.int32)
         for i in range(len(CAT_SIZES))],
        axis=0,
    )  # [num_categorical_features, batch_size]

    out = dlrm_forward(params, numerical, categorical)
    out = jax.block_until_ready(out)

    ref = dlrm_reference(params, numerical, categorical)
    np.testing.assert_allclose(np.asarray(out), np.asarray(ref), rtol=2e-3, atol=2e-3)

    # TODO(synk): device-placement logic (base_device / mem_donor_devices) and the
    #             hash_indices=True path are not represented here (defaults used).
    print("KERNEL_OK")
</pallas_src>

<mosaic_0001>
module attributes {stable_mosaic.version = 11 : i64} {
  func.func @_dlrm_fused_kernel(%arg0: i32, %arg1: memref<128x13xf32, #tpu.memory_space<vmem>>, %arg2: memref<128x4xi32, #tpu.memory_space<vmem>>, %arg3: memref<20x32xf32, #tpu.memory_space<vmem>>, %arg4: memref<30x32xf32, #tpu.memory_space<vmem>>, %arg5: memref<40x32xf32, #tpu.memory_space<vmem>>, %arg6: memref<50x32xf32, #tpu.memory_space<vmem>>, %arg7: memref<13x64xf32, #tpu.memory_space<vmem>>, %arg8: memref<1x64xf32, #tpu.memory_space<vmem>>, %arg9: memref<64x32xf32, #tpu.memory_space<vmem>>, %arg10: memref<1x32xf32, #tpu.memory_space<vmem>>, %arg11: memref<32x64xf32, #tpu.memory_space<vmem>>, %arg12: memref<10x64xf32, #tpu.memory_space<vmem>>, %arg13: memref<1x64xf32, #tpu.memory_space<vmem>>, %arg14: memref<64x32xf32, #tpu.memory_space<vmem>>, %arg15: memref<1x32xf32, #tpu.memory_space<vmem>>, %arg16: memref<1x32xf32, #tpu.memory_space<vmem>>, %arg17: memref<1x1xf32, #tpu.memory_space<vmem>>, %arg18: memref<1x128xf32, #tpu.memory_space<vmem>>) attributes {dimension_semantics = [#tpu.dimension_semantics<parallel>], iteration_bounds = array<i64: 2>, scalar_prefetch = 0 : i64, scratch_operands = 0 : i64, tpu.core_type = #tpu.core_type<tc>, window_params = [{transform_indices = @transform_0, window_bounds = array<i64: 128, 13>}, {transform_indices = @transform_1, window_bounds = array<i64: 128, 4>}, {pipeline_mode = #tpu.pipeline_mode<synchronous>, transform_indices = @transform_2, window_bounds = array<i64: 20, 32>}, {pipeline_mode = #tpu.pipeline_mode<synchronous>, transform_indices = @transform_3, window_bounds = array<i64: 30, 32>}, {pipeline_mode = #tpu.pipeline_mode<synchronous>, transform_indices = @transform_4, window_bounds = array<i64: 40, 32>}, {pipeline_mode = #tpu.pipeline_mode<synchronous>, transform_indices = @transform_5, window_bounds = array<i64: 50, 32>}, {pipeline_mode = #tpu.pipeline_mode<synchronous>, transform_indices = @transform_6, window_bounds = array<i64: 13, 64>}, {pipeline_mode = #tpu.pipeline_mode<synchronous>, transform_indices = @transform_7, window_bounds = array<i64: 1, 64>}, {pipeline_mode = #tpu.pipeline_mode<synchronous>, transform_indices = @transform_8, window_bounds = array<i64: 64, 32>}, {pipeline_mode = #tpu.pipeline_mode<synchronous>, transform_indices = @transform_9, window_bounds = array<i64: 1, 32>}, {pipeline_mode = #tpu.pipeline_mode<synchronous>, transform_indices = @transform_10, window_bounds = array<i64: 32, 64>}, {pipeline_mode = #tpu.pipeline_mode<synchronous>, transform_indices = @transform_11, window_bounds = array<i64: 10, 64>}, {pipeline_mode = #tpu.pipeline_mode<synchronous>, transform_indices = @transform_12, window_bounds = array<i64: 1, 64>}, {pipeline_mode = #tpu.pipeline_mode<synchronous>, transform_indices = @transform_13, window_bounds = array<i64: 64, 32>}, {pipeline_mode = #tpu.pipeline_mode<synchronous>, transform_indices = @transform_14, window_bounds = array<i64: 1, 32>}, {pipeline_mode = #tpu.pipeline_mode<synchronous>, transform_indices = @transform_15, window_bounds = array<i64: 1, 32>}, {pipeline_mode = #tpu.pipeline_mode<synchronous>, transform_indices = @transform_16, window_bounds = array<i64: 1, 1>}, {transform_indices = @transform_17, window_bounds = array<i64: 1, 128>}]} {
    %c0 = arith.constant 0 : index
    %c0_0 = arith.constant 0 : index
    %0 = vector.load %arg1[%c0, %c0_0] : memref<128x13xf32, #tpu.memory_space<vmem>>, vector<128x13xf32>
    %c0_1 = arith.constant 0 : index
    %c0_2 = arith.constant 0 : index
    %1 = vector.load %arg7[%c0_1, %c0_2] : memref<13x64xf32, #tpu.memory_space<vmem>>, vector<13x64xf32>
    %cst = arith.constant dense<0.000000e+00> : vector<128x64xf32>
    %2 = tpu.matmul %0, %1, %cst {dimension_numbers = #tpu.dot_dimension_numbers<[1], [0], [0], [1], [0, 0, 1, 1], [], []>} : vector<128x13xf32>, vector<13x64xf32>, vector<128x64xf32> -> vector<128x64xf32>
    %c0_3 = arith.constant 0 : index
    %c0_4 = arith.constant 0 : index
    %3 = vector.load %arg8[%c0_3, %c0_4] : memref<1x64xf32, #tpu.memory_space<vmem>>, vector<1x64xf32>
    %4 = vector.broadcast %3 : vector<1x64xf32> to vector<128x64xf32>
    %5 = arith.addf %2, %4 : vector<128x64xf32>
    %cst_5 = arith.constant 0.000000e+00 : f32
    %6 = vector.broadcast %cst_5 : f32 to vector<128x64xf32>
    %7 = arith.maximumf %5, %6 : vector<128x64xf32>
    %c0_6 = arith.constant 0 : index
    %c0_7 = arith.constant 0 : index
    %8 = vector.load %arg9[%c0_6, %c0_7] : memref<64x32xf32, #tpu.memory_space<vmem>>, vector<64x32xf32>
    %cst_8 = arith.constant dense<0.000000e+00> : vector<128x32xf32>
    %9 = tpu.matmul %7, %8, %cst_8 {dimension_numbers = #tpu.dot_dimension_numbers<[1], [0], [0], [1], [0, 0, 1, 1], [], []>} : vector<128x64xf32>, vector<64x32xf32>, vector<128x32xf32> -> vector<128x32xf32>
    %c0_9 = arith.constant 0 : index
    %c0_10 = arith.constant 0 : index
    %10 = vector.load %arg10[%c0_9, %c0_10] : memref<1x32xf32, #tpu.memory_space<vmem>>, vector<1x32xf32>
    %11 = vector.broadcast %10 : vector<1x32xf32> to vector<128x32xf32>
    %12 = arith.addf %9, %11 : vector<128x32xf32>
    %cst_11 = arith.constant 0.000000e+00 : f32
    %13 = vector.broadcast %cst_11 : f32 to vector<128x32xf32>
    %14 = arith.maximumf %12, %13 : vector<128x32xf32>
    %c0_12 = arith.constant 0 : index
    %c0_13 = arith.constant 0 : index
    %15 = vector.load %arg2[%c0_12, %c0_13] : memref<128x4xi32, #tpu.memory_space<vmem>>, vector<128x4xi32>
    %16 = tpu.iota {dimensions = array<i32: 1>} : vector<128x20xi32>
    %17 = vector.extract_strided_slice %15 {offsets = [0, 0], sizes = [128, 1], strides = [1, 1]} : vector<128x4xi32> to vector<128x1xi32>
    %18 = vector.broadcast %17 : vector<128x1xi32> to vector<128x20xi32>
    %19 = arith.cmpi eq, %16, %18 : vector<128x20xi32>
    %20 = arith.extui %19 : vector<128x20xi1> to vector<128x20xi32>
    %21 = arith.sitofp %20 : vector<128x20xi32> to vector<128x20xf32>
    %c0_14 = arith.constant 0 : index
    %c0_15 = arith.constant 0 : index
    %22 = vector.load %arg3[%c0_14, %c0_15] : memref<20x32xf32, #tpu.memory_space<vmem>>, vector<20x32xf32>
    %cst_16 = arith.constant dense<0.000000e+00> : vector<128x32xf32>
    %23 = tpu.matmul %21, %22, %cst_16 {dimension_numbers = #tpu.dot_dimension_numbers<[1], [0], [0], [1], [0, 0, 1, 1], [], []>} : vector<128x20xf32>, vector<20x32xf32>, vector<128x32xf32> -> vector<128x32xf32>
    %24 = tpu.iota {dimensions = array<i32: 1>} : vector<128x30xi32>
    %25 = vector.extract_strided_slice %15 {offsets = [0, 1], sizes = [128, 1], strides = [1, 1]} : vector<128x4xi32> to vector<128x1xi32>
    %26 = vector.broadcast %25 : vector<128x1xi32> to vector<128x30xi32>
    %27 = arith.cmpi eq, %24, %26 : vector<128x30xi32>
    %28 = arith.extui %27 : vector<128x30xi1> to vector<128x30xi32>
    %29 = arith.sitofp %28 : vector<128x30xi32> to vector<128x30xf32>
    %c0_17 = arith.constant 0 : index
    %c0_18 = arith.constant 0 : index
    %30 = vector.load %arg4[%c0_17, %c0_18] : memref<30x32xf32, #tpu.memory_space<vmem>>, vector<30x32xf32>
    %cst_19 = arith.constant dense<0.000000e+00> : vector<128x32xf32>
    %31 = tpu.matmul %29, %30, %cst_19 {dimension_numbers = #tpu.dot_dimension_numbers<[1], [0], [0], [1], [0, 0, 1, 1], [], []>} : vector<128x30xf32>, vector<30x32xf32>, vector<128x32xf32> -> vector<128x32xf32>
    %32 = tpu.iota {dimensions = array<i32: 1>} : vector<128x40xi32>
    %33 = vector.extract_strided_slice %15 {offsets = [0, 2], sizes = [128, 1], strides = [1, 1]} : vector<128x4xi32> to vector<128x1xi32>
    %34 = vector.broadcast %33 : vector<128x1xi32> to vector<128x40xi32>
    %35 = arith.cmpi eq, %32, %34 : vector<128x40xi32>
    %36 = arith.extui %35 : vector<128x40xi1> to vector<128x40xi32>
    %37 = arith.sitofp %36 : vector<128x40xi32> to vector<128x40xf32>
    %c0_20 = arith.constant 0 : index
    %c0_21 = arith.constant 0 : index
    %38 = vector.load %arg5[%c0_20, %c0_21] : memref<40x32xf32, #tpu.memory_space<vmem>>, vector<40x32xf32>
    %cst_22 = arith.constant dense<0.000000e+00> : vector<128x32xf32>
    %39 = tpu.matmul %37, %38, %cst_22 {dimension_numbers = #tpu.dot_dimension_numbers<[1], [0], [0], [1], [0, 0, 1, 1], [], []>} : vector<128x40xf32>, vector<40x32xf32>, vector<128x32xf32> -> vector<128x32xf32>
    %40 = tpu.iota {dimensions = array<i32: 1>} : vector<128x50xi32>
    %41 = vector.extract_strided_slice %15 {offsets = [0, 3], sizes = [128, 1], strides = [1, 1]} : vector<128x4xi32> to vector<128x1xi32>
    %42 = vector.broadcast %41 : vector<128x1xi32> to vector<128x50xi32>
    %43 = arith.cmpi eq, %40, %42 : vector<128x50xi32>
    %44 = arith.extui %43 : vector<128x50xi1> to vector<128x50xi32>
    %45 = arith.sitofp %44 : vector<128x50xi32> to vector<128x50xf32>
    %c0_23 = arith.constant 0 : index
    %c0_24 = arith.constant 0 : index
    %46 = vector.load %arg6[%c0_23, %c0_24] : memref<50x32xf32, #tpu.memory_space<vmem>>, vector<50x32xf32>
    %cst_25 = arith.constant dense<0.000000e+00> : vector<128x32xf32>
    %47 = tpu.matmul %45, %46, %cst_25 {dimension_numbers = #tpu.dot_dimension_numbers<[1], [0], [0], [1], [0, 0, 1, 1], [], []>} : vector<128x50xf32>, vector<50x32xf32>, vector<128x32xf32> -> vector<128x32xf32>
    %c0_26 = arith.constant 0 : index
    %c0_27 = arith.constant 0 : index
    %48 = vector.load %arg11[%c0_26, %c0_27] : memref<32x64xf32, #tpu.memory_space<vmem>>, vector<32x64xf32>
    %cst_28 = arith.constant dense<0.000000e+00> : vector<128x64xf32>
    %49 = tpu.matmul %14, %48, %cst_28 {dimension_numbers = #tpu.dot_dimension_numbers<[1], [0], [0], [1], [0, 0, 1, 1], [], []>} : vector<128x32xf32>, vector<32x64xf32>, vector<128x64xf32> -> vector<128x64xf32>
    %c0_29 = arith.constant 0 : index
    %c0_30 = arith.constant 0 : index
    %50 = vector.load %arg13[%c0_29, %c0_30] : memref<1x64xf32, #tpu.memory_space<vmem>>, vector<1x64xf32>
    %51 = vector.broadcast %50 : vector<1x64xf32> to vector<128x64xf32>
    %52 = arith.addf %49, %51 : vector<128x64xf32>
    %53 = arith.mulf %23, %14 : vector<128x32xf32>
    %cst_31 = arith.constant dense<0.000000e+00> : vector<128xf32>
    %54 = vector.multi_reduction <add>, %53, %cst_31 [1] : vector<128x32xf32> to vector<128xf32>
    %55 = vector.shape_cast %54 : vector<128xf32> to vector<128x1xf32>
    %c0_32 = arith.constant 0 : index
    %c0_33 = arith.constant 0 : index
    %56 = vector.load %arg12[%c0_32, %c0_33] : memref<10x64xf32, #tpu.memory_space<vmem>>, vector<1x64xf32>
    %57 = vector.broadcast %55 : vector<128x1xf32> to vector<128x64xf32>
    %58 = vector.broadcast %56 : vector<1x64xf32> to vector<128x64xf32>
    %59 = arith.mulf %57, %58 : vector<128x64xf32>
    %60 = arith.addf %52, %59 : vector<128x64xf32>
    %61 = arith.mulf %31, %14 : vector<128x32xf32>
    %cst_34 = arith.constant dense<0.000000e+00> : vector<128xf32>
    %62 = vector.multi_reduction <add>, %61, %cst_34 [1] : vector<128x32xf32> to vector<128xf32>
    %63 = vector.shape_cast %62 : vector<128xf32> to vector<128x1xf32>
    %c1 = arith.constant 1 : index
    %c0_35 = arith.constant 0 : index
    %64 = vector.load %arg12[%c1, %c0_35] : memref<10x64xf32, #tpu.memory_space<vmem>>, vector<1x64xf32>
    %65 = vector.broadcast %63 : vector<128x1xf32> to vector<128x64xf32>
    %66 = vector.broadcast %64 : vector<1x64xf32> to vector<128x64xf32>
    %67 = arith.mulf %65, %66 : vector<128x64xf32>
    %68 = arith.addf %60, %67 : vector<128x64xf32>
    %69 = arith.mulf %31, %23 : vector<128x32xf32>
    %cst_36 = arith.constant dense<0.000000e+00> : vector<128xf32>
    %70 = vector.multi_reduction <add>, %69, %cst_36 [1] : vector<128x32xf32> to vector<128xf32>
    %71 = vector.shape_cast %70 : vector<128xf32> to vector<128x1xf32>
    %c2 = arith.constant 2 : index
    %c0_37 = arith.constant 0 : index
    %72 = vector.load %arg12[%c2, %c0_37] : memref<10x64xf32, #tpu.memory_space<vmem>>, vector<1x64xf32>
    %73 = vector.broadcast %71 : vector<128x1xf32> to vector<128x64xf32>
    %74 = vector.broadcast %72 : vector<1x64xf32> to vector<128x64xf32>
    %75 = arith.mulf %73, %74 : vector<128x64xf32>
    %76 = arith.addf %68, %75 : vector<128x64xf32>
    %77 = arith.mulf %39, %14 : vector<128x32xf32>
    %cst_38 = arith.constant dense<0.000000e+00> : vector<128xf32>
    %78 = vector.multi_reduction <add>, %77, %cst_38 [1] : vector<128x32xf32> to vector<128xf32>
    %79 = vector.shape_cast %78 : vector<128xf32> to vector<128x1xf32>
    %c3 = arith.constant 3 : index
    %c0_39 = arith.constant 0 : index
    %80 = vector.load %arg12[%c3, %c0_39] : memref<10x64xf32, #tpu.memory_space<vmem>>, vector<1x64xf32>
    %81 = vector.broadcast %79 : vector<128x1xf32> to vector<128x64xf32>
    %82 = vector.broadcast %80 : vector<1x64xf32> to vector<128x64xf32>
    %83 = arith.mulf %81, %82 : vector<128x64xf32>
    %84 = arith.addf %76, %83 : vector<128x64xf32>
    %85 = arith.mulf %39, %23 : vector<128x32xf32>
    %cst_40 = arith.constant dense<0.000000e+00> : vector<128xf32>
    %86 = vector.multi_reduction <add>, %85, %cst_40 [1] : vector<128x32xf32> to vector<128xf32>
    %87 = vector.shape_cast %86 : vector<128xf32> to vector<128x1xf32>
    %c4 = arith.constant 4 : index
    %c0_41 = arith.constant 0 : index
    %88 = vector.load %arg12[%c4, %c0_41] : memref<10x64xf32, #tpu.memory_space<vmem>>, vector<1x64xf32>
    %89 = vector.broadcast %87 : vector<128x1xf32> to vector<128x64xf32>
    %90 = vector.broadcast %88 : vector<1x64xf32> to vector<128x64xf32>
    %91 = arith.mulf %89, %90 : vector<128x64xf32>
    %92 = arith.addf %84, %91 : vector<128x64xf32>
    %93 = arith.mulf %39, %31 : vector<128x32xf32>
    %cst_42 = arith.constant dense<0.000000e+00> : vector<128xf32>
    %94 = vector.multi_reduction <add>, %93, %cst_42 [1] : vector<128x32xf32> to vector<128xf32>
    %95 = vector.shape_cast %94 : vector<128xf32> to vector<128x1xf32>
    %c5 = arith.constant 5 : index
    %c0_43 = arith.constant 0 : index
    %96 = vector.load %arg12[%c5, %c0_43] : memref<10x64xf32, #tpu.memory_space<vmem>>, vector<1x64xf32>
    %97 = vector.broadcast %95 : vector<128x1xf32> to vector<128x64xf32>
    %98 = vector.broadcast %96 : vector<1x64xf32> to vector<128x64xf32>
    %99 = arith.mulf %97, %98 : vector<128x64xf32>
    %100 = arith.addf %92, %99 : vector<128x64xf32>
    %101 = arith.mulf %47, %14 : vector<128x32xf32>
    %cst_44 = arith.constant dense<0.000000e+00> : vector<128xf32>
    %102 = vector.multi_reduction <add>, %101, %cst_44 [1] : vector<128x32xf32> to vector<128xf32>
    %103 = vector.shape_cast %102 : vector<128xf32> to vector<128x1xf32>
    %c6 = arith.constant 6 : index
    %c0_45 = arith.constant 0 : index
    %104 = vector.load %arg12[%c6, %c0_45] : memref<10x64xf32, #tpu.memory_space<vmem>>, vector<1x64xf32>
    %105 = vector.broadcast %103 : vector<128x1xf32> to vector<128x64xf32>
    %106 = vector.broadcast %104 : vector<1x64xf32> to vector<128x64xf32>
    %107 = arith.mulf %105, %106 : vector<128x64xf32>
    %108 = arith.addf %100, %107 : vector<128x64xf32>
    %109 = arith.mulf %47, %23 : vector<128x32xf32>
    %cst_46 = arith.constant dense<0.000000e+00> : vector<128xf32>
    %110 = vector.multi_reduction <add>, %109, %cst_46 [1] : vector<128x32xf32> to vector<128xf32>
    %111 = vector.shape_cast %110 : vector<128xf32> to vector<128x1xf32>
    %c7 = arith.constant 7 : index
    %c0_47 = arith.constant 0 : index
    %112 = vector.load %arg12[%c7, %c0_47] : memref<10x64xf32, #tpu.memory_space<vmem>>, vector<1x64xf32>
    %113 = vector.broadcast %111 : vector<128x1xf32> to vector<128x64xf32>
    %114 = vector.broadcast %112 : vector<1x64xf32> to vector<128x64xf32>
    %115 = arith.mulf %113, %114 : vector<128x64xf32>
    %116 = arith.addf %108, %115 : vector<128x64xf32>
    %117 = arith.mulf %47, %31 : vector<128x32xf32>
    %cst_48 = arith.constant dense<0.000000e+00> : vector<128xf32>
    %118 = vector.multi_reduction <add>, %117, %cst_48 [1] : vector<128x32xf32> to vector<128xf32>
    %119 = vector.shape_cast %118 : vector<128xf32> to vector<128x1xf32>
    %c8 = arith.constant 8 : index
    %c0_49 = arith.constant 0 : index
    %120 = vector.load %arg12[%c8, %c0_49] : memref<10x64xf32, #tpu.memory_space<vmem>>, vector<1x64xf32>
    %121 = vector.broadcast %119 : vector<128x1xf32> to vector<128x64xf32>
    %122 = vector.broadcast %120 : vector<1x64xf32> to vector<128x64xf32>
    %123 = arith.mulf %121, %122 : vector<128x64xf32>
    %124 = arith.addf %116, %123 : vector<128x64xf32>
    %125 = arith.mulf %47, %39 : vector<128x32xf32>
    %cst_50 = arith.constant dense<0.000000e+00> : vector<128xf32>
    %126 = vector.multi_reduction <add>, %125, %cst_50 [1] : vector<128x32xf32> to vector<128xf32>
    %127 = vector.shape_cast %126 : vector<128xf32> to vector<128x1xf32>
    %c9 = arith.constant 9 : index
    %c0_51 = arith.constant 0 : index
    %128 = vector.load %arg12[%c9, %c0_51] : memref<10x64xf32, #tpu.memory_space<vmem>>, vector<1x64xf32>
    %129 = vector.broadcast %127 : vector<128x1xf32> to vector<128x64xf32>
    %130 = vector.broadcast %128 : vector<1x64xf32> to vector<128x64xf32>
    %131 = arith.mulf %129, %130 : vector<128x64xf32>
    %132 = arith.addf %124, %131 : vector<128x64xf32>
    %cst_52 = arith.constant 0.000000e+00 : f32
    %133 = vector.broadcast %cst_52 : f32 to vector<128x64xf32>
    %134 = arith.maximumf %132, %133 : vector<128x64xf32>
    %c0_53 = arith.constant 0 : index
    %c0_54 = arith.constant 0 : index
    %135 = vector.load %arg14[%c0_53, %c0_54] : memref<64x32xf32, #tpu.memory_space<vmem>>, vector<64x32xf32>
    %cst_55 = arith.constant dense<0.000000e+00> : vector<128x32xf32>
    %136 = tpu.matmul %134, %135, %cst_55 {dimension_numbers = #tpu.dot_dimension_numbers<[1], [0], [0], [1], [0, 0, 1, 1], [], []>} : vector<128x64xf32>, vector<64x32xf32>, vector<128x32xf32> -> vector<128x32xf32>
    %c0_56 = arith.constant 0 : index
    %c0_57 = arith.constant 0 : index
    %137 = vector.load %arg15[%c0_56, %c0_57] : memref<1x32xf32, #tpu.memory_space<vmem>>, vector<1x32xf32>
    %138 = vector.broadcast %137 : vector<1x32xf32> to vector<128x32xf32>
    %139 = arith.addf %136, %138 : vector<128x32xf32>
    %cst_58 = arith.constant 0.000000e+00 : f32
    %140 = vector.broadcast %cst_58 : f32 to vector<128x32xf32>
    %141 = arith.maximumf %139, %140 : vector<128x32xf32>
    %c0_59 = arith.constant 0 : index
    %c0_60 = arith.constant 0 : index
    %142 = vector.load %arg16[%c0_59, %c0_60] : memref<1x32xf32, #tpu.memory_space<vmem>>, vector<1x32xf32>
    %143 = tpu.transpose %141, [1, 0] : vector<128x32xf32> -> vector<32x128xf32>
    %cst_61 = arith.constant dense<0.000000e+00> : vector<1x128xf32>
    %144 = tpu.matmul %142, %143, %cst_61 {dimension_numbers = #tpu.dot_dimension_numbers<[1], [0], [0], [1], [0, 0, 1, 1], [], []>} : vector<1x32xf32>, vector<32x128xf32>, vector<1x128xf32> -> vector<1x128xf32>
    %c0_62 = arith.constant 0 : index
    %c0_63 = arith.constant 0 : index
    %145 = vector.load %arg17[%c0_62, %c0_63] : memref<1x1xf32, #tpu.memory_space<vmem>>, vector<1x1xf32>
    %146 = vector.broadcast %145 : vector<1x1xf32> to vector<1x128xf32>
    %147 = arith.addf %144, %146 : vector<1x128xf32>
    %148 = arith.negf %147 : vector<1x128xf32>
    %149 = math.exp %148 : vector<1x128xf32>
    %cst_64 = arith.constant 1.000000e+00 : f32
    %150 = vector.broadcast %cst_64 : f32 to vector<1x128xf32>
    %151 = arith.addf %150, %149 : vector<1x128xf32>
    %152 = arith.divf %150, %151 : vector<1x128xf32>
    %c0_65 = arith.constant 0 : index
    %c0_66 = arith.constant 0 : index
    %153 = vector.load %arg18[%c0_65, %c0_66] : memref<1x128xf32, #tpu.memory_space<vmem>>, vector<1x128xf32>
    tpu.vector_store %arg18[%c0_65, %c0_66], %152 {strides = array<i32>} : memref<1x128xf32, #tpu.memory_space<vmem>>, vector<1x128xf32>,
    return
  }
  func.func @transform_0(%arg0: i32) -> (i32, i32) {
    %c0_i32 = arith.constant 0 : i32
    %c0_i32_0 = arith.constant 0 : i32
    return %arg0, %c0_i32 : i32, i32
  }
  func.func @transform_1(%arg0: i32) -> (i32, i32) {
    %c0_i32 = arith.constant 0 : i32
    %c0_i32_0 = arith.constant 0 : i32
    return %arg0, %c0_i32 : i32, i32
  }
  func.func @transform_2(%arg0: i32) -> (i32, i32) {
    %c0_i32 = arith.constant 0 : i32
    %c0_i32_0 = arith.constant 0 : i32
    %c0_i32_1 = arith.constant 0 : i32
    return %c0_i32, %c0_i32_0 : i32, i32
  }
  func.func @transform_3(%arg0: i32) -> (i32, i32) {
    %c0_i32 = arith.constant 0 : i32
    %c0_i32_0 = arith.constant 0 : i32
    %c0_i32_1 = arith.constant 0 : i32
    return %c0_i32, %c0_i32_0 : i32, i32
  }
  func.func @transform_4(%arg0: i32) -> (i32, i32) {
    %c0_i32 = arith.constant 0 : i32
    %c0_i32_0 = arith.constant 0 : i32
    %c0_i32_1 = arith.constant 0 : i32
    return %c0_i32, %c0_i32_0 : i32, i32
  }
  func.func @transform_5(%arg0: i32) -> (i32, i32) {
    %c0_i32 = arith.constant 0 : i32
    %c0_i32_0 = arith.constant 0 : i32
    %c0_i32_1 = arith.constant 0 : i32
    return %c0_i32, %c0_i32_0 : i32, i32
  }
  func.func @transform_6(%arg0: i32) -> (i32, i32) {
    %c0_i32 = arith.constant 0 : i32
    %c0_i32_0 = arith.constant 0 : i32
    %c0_i32_1 = arith.constant 0 : i32
    return %c0_i32, %c0_i32_0 : i32, i32
  }
  func.func @transform_7(%arg0: i32) -> (i32, i32) {
    %c0_i32 = arith.constant 0 : i32
    %c0_i32_0 = arith.constant 0 : i32
    %c0_i32_1 = arith.constant 0 : i32
    return %c0_i32, %c0_i32_0 : i32, i32
  }
  func.func @transform_8(%arg0: i32) -> (i32, i32) {
    %c0_i32 = arith.constant 0 : i32
    %c0_i32_0 = arith.constant 0 : i32
    %c0_i32_1 = arith.constant 0 : i32
    return %c0_i32, %c0_i32_0 : i32, i32
  }
  func.func @transform_9(%arg0: i32) -> (i32, i32) {
    %c0_i32 = arith.constant 0 : i32
    %c0_i32_0 = arith.constant 0 : i32
    %c0_i32_1 = arith.constant 0 : i32
    return %c0_i32, %c0_i32_0 : i32, i32
  }
  func.func @transform_10(%arg0: i32) -> (i32, i32) {
    %c0_i32 = arith.constant 0 : i32
    %c0_i32_0 = arith.constant 0 : i32
    %c0_i32_1 = arith.constant 0 : i32
    return %c0_i32, %c0_i32_0 : i32, i32
  }
  func.func @transform_11(%arg0: i32) -> (i32, i32) {
    %c0_i32 = arith.constant 0 : i32
    %c0_i32_0 = arith.constant 0 : i32
    %c0_i32_1 = arith.constant 0 : i32
    return %c0_i32, %c0_i32_0 : i32, i32
  }
  func.func @transform_12(%arg0: i32) -> (i32, i32) {
    %c0_i32 = arith.constant 0 : i32
    %c0_i32_0 = arith.constant 0 : i32
    %c0_i32_1 = arith.constant 0 : i32
    return %c0_i32, %c0_i32_0 : i32, i32
  }
  func.func @transform_13(%arg0: i32) -> (i32, i32) {
    %c0_i32 = arith.constant 0 : i32
    %c0_i32_0 = arith.constant 0 : i32
    %c0_i32_1 = arith.constant 0 : i32
    return %c0_i32, %c0_i32_0 : i32, i32
  }
  func.func @transform_14(%arg0: i32) -> (i32, i32) {
    %c0_i32 = arith.constant 0 : i32
    %c0_i32_0 = arith.constant 0 : i32
    %c0_i32_1 = arith.constant 0 : i32
    return %c0_i32, %c0_i32_0 : i32, i32
  }
  func.func @transform_15(%arg0: i32) -> (i32, i32) {
    %c0_i32 = arith.constant 0 : i32
    %c0_i32_0 = arith.constant 0 : i32
    %c0_i32_1 = arith.constant 0 : i32
    return %c0_i32, %c0_i32_0 : i32, i32
  }
  func.func @transform_16(%arg0: i32) -> (i32, i32) {
    %c0_i32 = arith.constant 0 : i32
    %c0_i32_0 = arith.constant 0 : i32
    %c0_i32_1 = arith.constant 0 : i32
    return %c0_i32, %c0_i32_0 : i32, i32
  }
  func.func @transform_17(%arg0: i32) -> (i32, i32) {
    %c0_i32 = arith.constant 0 : i32
    %c0_i32_0 = arith.constant 0 : i32
    return %c0_i32, %arg0 : i32, i32
  }
}

</mosaic_0001>

<llo_original>
// kernel: tpu_custom_call.1
$region0: #{tpu_custom_call.1}
  #allocation0 [shape = 'u32[]', space=smem, size = 0x4, offset = 0x4, fixed_abs, tag = 'smem constant byte address 0x4 - core index']
  #allocation1 [shape = 'u32[144,128]{1,0:T(1,128)}', space=vmem, size = 0x12000, scoped, tag = 'internal scratch']
  #allocation2 [shape = 'f32[1,1]{1,0:T(1,128)S(1)}', space=vmem, size = 0x200, scoped, tag = 'scoped memory for tpu_custom_call.1']
  %s0 = inlined_call_operand.vmem [shape: f32[256,13], index: 0, kind: input, shape index: {}]
  %s1 = inlined_call_operand.vmem [shape: s32[256,4], index: 1, kind: input, shape index: {}]
  %s2 = inlined_call_operand.vmem [shape: f32[20,32], index: 2, kind: input, shape index: {}]
  %s3 = inlined_call_operand.vmem [shape: f32[30,32], index: 3, kind: input, shape index: {}]
  %s4 = inlined_call_operand.vmem [shape: f32[40,32], index: 4, kind: input, shape index: {}]
  %s5 = inlined_call_operand.vmem [shape: f32[50,32], index: 5, kind: input, shape index: {}]
  %s6 = inlined_call_operand.vmem [shape: f32[13,64], index: 6, kind: input, shape index: {}]
  %s7 = inlined_call_operand.vmem [shape: f32[1,64], index: 7, kind: input, shape index: {}]
  %s8 = inlined_call_operand.vmem [shape: f32[64,32], index: 8, kind: input, shape index: {}]
  %s9 = inlined_call_operand.vmem [shape: f32[1,32], index: 9, kind: input, shape index: {}]
  %s10 = inlined_call_operand.vmem [shape: f32[32,64], index: 10, kind: input, shape index: {}]
  %s11 = inlined_call_operand.vmem [shape: f32[10,64], index: 11, kind: input, shape index: {}]
  %s12 = inlined_call_operand.vmem [shape: f32[1,64], index: 12, kind: input, shape index: {}]
  %s13 = inlined_call_operand.vmem [shape: f32[64,32], index: 13, kind: input, shape index: {}]
  %s14 = inlined_call_operand.vmem [shape: f32[1,32], index: 14, kind: input, shape index: {}]
  %s15 = inlined_call_operand.vmem [shape: f32[1,32], index: 15, kind: input, shape index: {}]
  %s16 = inlined_call_operand.<no memory space> [shape: f32[1,1], index: 16, kind: input, shape index: {}]
  %s17 = inlined_call_operand.hbm [shape: f32[1,256], index: 17, kind: output, shape index: {}]
  %s18 = sld [smem:[#allocation0]]
  $region101: #{tpu_custom_call.1} parent=0
    _
  %s20 = ssub.s32 1, %s18
  %s21 = scalar_select 0, %s20, %s18
  %v22 = vstv %s16
  %23 = vst [vmem:[#allocation2] sm:$0x1] %v22
  $region1: #{tpu_custom_call.1} parent=0
    #allocation3 [shape = 'u8[1024]{0}', space=vmem, size = 0x400, scoped, tag = 'output window, operand 0']
    #allocation4 [shape = 's32[2]{0}', space=sflag, size = 0x8, scoped, tag = 'scoped memory for tpu_custom_call.1']
    %24 = vsyncpa [#allocation4], 0
    %s25 = scalar_lea.sflag [#allocation4], 1
    %26 = vsyncpa %s25, 0
    loop: start=0, step=1, limit=4
    $region2: #{tpu_custom_call.1} parent=1 // loop_pre_header
      _
    $region3: #{tpu_custom_call.1} parent=1 // loop_header
      %s28 = sphi 0, %s32
      %p29 = scmp.ge.s32.totalorder %s28, 4
      %s38 = sphi 0, %s40
      %s41 = sphi 0, %s38
      %s42 = sphi 0, %s41
      %s58 = sphi 0, %s42
      %s64 = sphi 0, %s66
      %s67 = sphi 0, %s64
      %s68 = sphi 0, %s67
      %s84 = sphi 0, %s68
      %s88 = sphi 0, %s88
      %s90 = sphi 0, %s88
      %s91 = sphi 0, %s90
      %s105 = sphi 0, %s91
      %s109 = sphi 0, %s109
      %s111 = sphi 0, %s109
      %s112 = sphi 0, %s111
      %s126 = sphi 0, %s112
      %s130 = sphi 0, %s130
      %s132 = sphi 0, %s130
      %s133 = sphi 0, %s132
      %s147 = sphi 0, %s133
      %s151 = sphi 0, %s151
      %s153 = sphi 0, %s151
      %s154 = sphi 0, %s153
      %s168 = sphi 0, %s154
      %s172 = sphi 0, %s172
      %s174 = sphi 0, %s172
      %s175 = sphi 0, %s174
      %s189 = sphi 0, %s175
      %s193 = sphi 0, %s193
      %s195 = sphi 0, %s193
      %s196 = sphi 0, %s195
      %s210 = sphi 0, %s196
      %s214 = sphi 0, %s214
      %s216 = sphi 0, %s214
      %s217 = sphi 0, %s216
      %s231 = sphi 0, %s217
      %s235 = sphi 0, %s235
      %s237 = sphi 0, %s235
      %s238 = sphi 0, %s237
      %s252 = sphi 0, %s238
      %s256 = sphi 0, %s256
      %s258 = sphi 0, %s256
      %s259 = sphi 0, %s258
      %s273 = sphi 0, %s259
      %s277 = sphi 0, %s277
      %s279 = sphi 0, %s277
      %s280 = sphi 0, %s279
      %s294 = sphi 0, %s280
      %s298 = sphi 0, %s298
      %s300 = sphi 0, %s298
      %s301 = sphi 0, %s300
      %s315 = sphi 0, %s301
      %s319 = sphi 0, %s319
      %s321 = sphi 0, %s319
      %s322 = sphi 0, %s321
      %s336 = sphi 0, %s322
      %s340 = sphi 0, %s340
      %s342 = sphi 0, %s340
      %s343 = sphi 0, %s342
      %s357 = sphi 0, %s343
      %s361 = sphi 0, %s361
      %s363 = sphi 0, %s361
      %s364 = sphi 0, %s363
      %s378 = sphi 0, %s364
      %s382 = sphi 0, %s382
      %s384 = sphi 0, %s382
      %s385 = sphi 0, %s384
      %s399 = sphi 0, %s385
      %s405 = sphi 0, %s407
      %s408 = sphi 0, %s405
      %s409 = sphi 0, %s408
      %s425 = sphi 0, %s409
    $region4: #{tpu_custom_call.1} parent=1 // loop_header_branch
      %31 = sbr.rel (%p29) target = $region8
    $region5: #{tpu_custom_call.1} parent=1 // loop_body
      %s33 = ssub.s32 %s28, 1
      %s34 = ssub.s32 %s28, 2
      %s35 = sadd.s32 %s28, 1
      %s36 = ssub.s32 %s28, %s35
      %p37 = scmp.eq.s32.totalorder %s36, 0
      %s39 = sadd.s32 %s38, 1
      %s40 = scalar_select %p37, %s38, %s39
      %p43 = pneg %p37
      %p44 = scmp.eq.s32.totalorder %s28, 1
      %p45 = por %p43, %p44
      %p46 = scmp.ne.s32.totalorder %s38, %s41
      %p47 = scmp.eq.s32.totalorder %s28, 0
      %p48 = por %p46, %p47
      %p49 = scmp.ne.s32.totalorder %s38, %s41
      %p50 = scmp.eq.s32.totalorder %s33, 1
      %p51 = por %p49, %p50
      %p52 = scmp.ne.s32.totalorder %s41, %s42
      %p53 = scmp.eq.s32.totalorder %s33, 0
      %p54 = por %p52, %p53
      %p55 = scmp.ne.s32.totalorder %s41, %s42
      %p56 = scmp.eq.s32.totalorder %s34, 1
      %p57 = por %p55, %p56
      %p59 = scmp.ne.s32.totalorder %s42, %s58
      %p60 = scmp.eq.s32.totalorder %s34, 0
      %p61 = por %p59, %p60
      %s62 = ssub.s32 %s28, %s35
      %p63 = scmp.eq.s32.totalorder %s62, 0
      %s65 = sadd.s32 %s64, 1
      %s66 = scalar_select %p63, %s64, %s65
      %p69 = pneg %p63
      %p70 = scmp.eq.s32.totalorder %s28, 1
      %p71 = por %p69, %p70
      %p72 = scmp.ne.s32.totalorder %s64, %s67
      %p73 = scmp.eq.s32.totalorder %s28, 0
      %p74 = por %p72, %p73
      %p75 = scmp.ne.s32.totalorder %s64, %s67
      %p76 = scmp.eq.s32.totalorder %s33, 1
      %p77 = por %p75, %p76
      %p78 = scmp.ne.s32.totalorder %s67, %s68
      %p79 = scmp.eq.s32.totalorder %s33, 0
      %p80 = por %p78, %p79
      %p81 = scmp.ne.s32.totalorder %s67, %s68
      %p82 = scmp.eq.s32.totalorder %s34, 1
      %p83 = por %p81, %p82
      %p85 = scmp.ne.s32.totalorder %s68, %s84
      %p86 = scmp.eq.s32.totalorder %s34, 0
      %p87 = por %p85, %p86
      %s89 = sadd.s32 %s88, 1
      %p92 = scmp.eq.s32.totalorder %s28, 1
      %p93 = scmp.ne.s32.totalorder %s88, %s90
      %p94 = scmp.eq.s32.totalorder %s28, 0
      %p95 = por %p93, %p94
      %p96 = scmp.ne.s32.totalorder %s88, %s90
      %p97 = scmp.eq.s32.totalorder %s33, 1
      %p98 = por %p96, %p97
      %p99 = scmp.ne.s32.totalorder %s90, %s91
      %p100 = scmp.eq.s32.totalorder %s33, 0
      %p101 = por %p99, %p100
      %p102 = scmp.ne.s32.totalorder %s90, %s91
      %p103 = scmp.eq.s32.totalorder %s34, 1
      %p104 = por %p102, %p103
      %p106 = scmp.ne.s32.totalorder %s91, %s105
      %p107 = scmp.eq.s32.totalorder %s34, 0
      %p108 = por %p106, %p107
      %s110 = sadd.s32 %s109, 1
      %p113 = scmp.eq.s32.totalorder %s28, 1
      %p114 = scmp.ne.s32.totalorder %s109, %s111
      %p115 = scmp.eq.s32.totalorder %s28, 0
      %p116 = por %p114, %p115
      %p117 = scmp.ne.s32.totalorder %s109, %s111
      %p118 = scmp.eq.s32.totalorder %s33, 1
      %p119 = por %p117, %p118
      %p120 = scmp.ne.s32.totalorder %s111, %s112
      %p121 = scmp.eq.s32.totalorder %s33, 0
      %p122 = por %p120, %p121
      %p123 = scmp.ne.s32.totalorder %s111, %s112
      %p124 = scmp.eq.s32.totalorder %s34, 1
      %p125 = por %p123, %p124
      %p127 = scmp.ne.s32.totalorder %s112, %s126
      %p128 = scmp.eq.s32.totalorder %s34, 0
      %p129 = por %p127, %p128
      %s131 = sadd.s32 %s130, 1
      %p134 = scmp.eq.s32.totalorder %s28, 1
      %p135 = scmp.ne.s32.totalorder %s130, %s132
      %p136 = scmp.eq.s32.totalorder %s28, 0
      %p137 = por %p135, %p136
      %p138 = scmp.ne.s32.totalorder %s130, %s132
      %p139 = scmp.eq.s32.totalorder %s33, 1
      %p140 = por %p138, %p139
      %p141 = scmp.ne.s32.totalorder %s132, %s133
      %p142 = scmp.eq.s32.totalorder %s33, 0
      %p143 = por %p141, %p142
      %p144 = scmp.ne.s32.totalorder %s132, %s133
      %p145 = scmp.eq.s32.totalorder %s34, 1
      %p146 = por %p144, %p145
      %p148 = scmp.ne.s32.totalorder %s133, %s147
      %p149 = scmp.eq.s32.totalorder %s34, 0
      %p150 = por %p148, %p149
      %s152 = sadd.s32 %s151, 1
      %p155 = scmp.eq.s32.totalorder %s28, 1
      %p156 = scmp.ne.s32.totalorder %s151, %s153
      %p157 = scmp.eq.s32.totalorder %s28, 0
      %p158 = por %p156, %p157
      %p159 = scmp.ne.s32.totalorder %s151, %s153
      %p160 = scmp.eq.s32.totalorder %s33, 1
      %p161 = por %p159, %p160
      %p162 = scmp.ne.s32.totalorder %s153, %s154
      %p163 = scmp.eq.s32.totalorder %s33, 0
      %p164 = por %p162, %p163
      %p165 = scmp.ne.s32.totalorder %s153, %s154
      %p166 = scmp.eq.s32.totalorder %s34, 1
      %p167 = por %p165, %p166
      %p169 = scmp.ne.s32.totalorder %s154, %s168
      %p170 = scmp.eq.s32.totalorder %s34, 0
      %p171 = por %p169, %p170
      %s173 = sadd.s32 %s172, 1
      %p176 = scmp.eq.s32.totalorder %s28, 1
      %p177 = scmp.ne.s32.totalorder %s172, %s174
      %p178 = scmp.eq.s32.totalorder %s28, 0
      %p179 = por %p177, %p178
      %p180 = scmp.ne.s32.totalorder %s172, %s174
      %p181 = scmp.eq.s32.totalorder %s33, 1
      %p182 = por %p180, %p181
      %p183 = scmp.ne.s32.totalorder %s174, %s175
      %p184 = scmp.eq.s32.totalorder %s33, 0
      %p185 = por %p183, %p184
      %p186 = scmp.ne.s32.totalorder %s174, %s175
      %p187 = scmp.eq.s32.totalorder %s34, 1
      %p188 = por %p186, %p187
      %p190 = scmp.ne.s32.totalorder %s175, %s189
      %p191 = scmp.eq.s32.totalorder %s34, 0
      %p192 = por %p190, %p191
      %s194 = sadd.s32 %s193, 1
      %p197 = scmp.eq.s32.totalorder %s28, 1
      %p198 = scmp.ne.s32.totalorder %s193, %s195
      %p199 = scmp.eq.s32.totalorder %s28, 0
      %p200 = por %p198, %p199
      %p201 = scmp.ne.s32.totalorder %s193, %s195
      %p202 = scmp.eq.s32.totalorder %s33, 1
      %p203 = por %p201, %p202
      %p204 = scmp.ne.s32.totalorder %s195, %s196
      %p205 = scmp.eq.s32.totalorder %s33, 0
      %p206 = por %p204, %p205
      %p207 = scmp.ne.s32.totalorder %s195, %s196
      %p208 = scmp.eq.s32.totalorder %s34, 1
      %p209 = por %p207, %p208
      %p211 = scmp.ne.s32.totalorder %s196, %s210
      %p212 = scmp.eq.s32.totalorder %s34, 0
      %p213 = por %p211, %p212
      %s215 = sadd.s32 %s214, 1
      %p218 = scmp.eq.s32.totalorder %s28, 1
      %p219 = scmp.ne.s32.totalorder %s214, %s216
      %p220 = scmp.eq.s32.totalorder %s28, 0
      %p221 = por %p219, %p220
      %p222 = scmp.ne.s32.totalorder %s214, %s216
      %p223 = scmp.eq.s32.totalorder %s33, 1
      %p224 = por %p222, %p223
      %p225 = scmp.ne.s32.totalorder %s216, %s217
      %p226 = scmp.eq.s32.totalorder %s33, 0
      %p227 = por %p225, %p226
      %p228 = scmp.ne.s32.totalorder %s216, %s217
      %p229 = scmp.eq.s32.totalorder %s34, 1
      %p230 = por %p228, %p229
      %p232 = scmp.ne.s32.totalorder %s217, %s231
      %p233 = scmp.eq.s32.totalorder %s34, 0
      %p234 = por %p232, %p233
      %s236 = sadd.s32 %s235, 1
      %p239 = scmp.eq.s32.totalorder %s28, 1
      %p240 = scmp.ne.s32.totalorder %s235, %s237
      %p241 = scmp.eq.s32.totalorder %s28, 0
      %p242 = por %p240, %p241
      %p243 = scmp.ne.s32.totalorder %s235, %s237
      %p244 = scmp.eq.s32.totalorder %s33, 1
      %p245 = por %p243, %p244
      %p246 = scmp.ne.s32.totalorder %s237, %s238
      %p247 = scmp.eq.s32.totalorder %s33, 0
      %p248 = por %p246, %p247
      %p249 = scmp.ne.s32.totalorder %s237, %s238
      %p250 = scmp.eq.s32.totalorder %s34, 1
      %p251 = por %p249, %p250
      %p253 = scmp.ne.s32.totalorder %s238, %s252
      %p254 = scmp.eq.s32.totalorder %s34, 0
      %p255 = por %p253, %p254
      %s257 = sadd.s32 %s256, 1
      %p260 = scmp.eq.s32.totalorder %s28, 1
      %p261 = scmp.ne.s32.totalorder %s256, %s258
      %p262 = scmp.eq.s32.totalorder %s28, 0
      %p263 = por %p261, %p262
      %p264 = scmp.ne.s32.totalorder %s256, %s258
      %p265 = scmp.eq.s32.totalorder %s33, 1
      %p266 = por %p264, %p265
      %p267 = scmp.ne.s32.totalorder %s258, %s259
      %p268 = scmp.eq.s32.totalorder %s33, 0
      %p269 = por %p267, %p268
      %p270 = scmp.ne.s32.totalorder %s258, %s259
      %p271 = scmp.eq.s32.totalorder %s34, 1
      %p272 = por %p270, %p271
      %p274 = scmp.ne.s32.totalorder %s259, %s273
      %p275 = scmp.eq.s32.totalorder %s34, 0
      %p276 = por %p274, %p275
      %s278 = sadd.s32 %s277, 1
      %p281 = scmp.eq.s32.totalorder %s28, 1
      %p282 = scmp.ne.s32.totalorder %s277, %s279
      %p283 = scmp.eq.s32.totalorder %s28, 0
      %p284 = por %p282, %p283
      %p285 = scmp.ne.s32.totalorder %s277, %s279
      %p286 = scmp.eq.s32.totalorder %s33, 1
      %p287 = por %p285, %p286
      %p288 = scmp.ne.s32.totalorder %s279, %s280
      %p289 = scmp.eq.s32.totalorder %s33, 0
      %p290 = por %p288, %p289
      %p291 = scmp.ne.s32.totalorder %s279, %s280
      %p292 = scmp.eq.s32.totalorder %s34, 1
      %p293 = por %p291, %p292
      %p295 = scmp.ne.s32.totalorder %s280, %s294
      %p296 = scmp.eq.s32.totalorder %s34, 0
      %p297 = por %p295, %p296
      %s299 = sadd.s32 %s298, 1
      %p302 = scmp.eq.s32.totalorder %s28, 1
      %p303 = scmp.ne.s32.totalorder %s298, %s300
      %p304 = scmp.eq.s32.totalorder %s28, 0
      %p305 = por %p303, %p304
      %p306 = scmp.ne.s32.totalorder %s298, %s300
      %p307 = scmp.eq.s32.totalorder %s33, 1
      %p308 = por %p306, %p307
      %p309 = scmp.ne.s32.totalorder %s300, %s301
      %p310 = scmp.eq.s32.totalorder %s33, 0
      %p311 = por %p309, %p310
      %p312 = scmp.ne.s32.totalorder %s300, %s301
      %p313 = scmp.eq.s32.totalorder %s34, 1
      %p314 = por %p312, %p313
      %p316 = scmp.ne.s32.totalorder %s301, %s315
      %p317 = scmp.eq.s32.totalorder %s34, 0
      %p318 = por %p316, %p317
      %s320 = sadd.s32 %s319, 1
      %p323 = scmp.eq.s32.totalorder %s28, 1
      %p324 = scmp.ne.s32.totalorder %s319, %s321
      %p325 = scmp.eq.s32.totalorder %s28, 0
      %p326 = por %p324, %p325
      %p327 = scmp.ne.s32.totalorder %s319, %s321
      %p328 = scmp.eq.s32.totalorder %s33, 1
      %p329 = por %p327, %p328
      %p330 = scmp.ne.s32.totalorder %s321, %s322
      %p331 = scmp.eq.s32.totalorder %s33, 0
      %p332 = por %p330, %p331
      %p333 = scmp.ne.s32.totalorder %s321, %s322
      %p334 = scmp.eq.s32.totalorder %s34, 1
      %p335 = por %p333, %p334
      %p337 = scmp.ne.s32.totalorder %s322, %s336
      %p338 = scmp.eq.s32.totalorder %s34, 0
      %p339 = por %p337, %p338
      %s341 = sadd.s32 %s340, 1
      %p344 = scmp.eq.s32.totalorder %s28, 1
      %p345 = scmp.ne.s32.totalorder %s340, %s342
      %p346 = scmp.eq.s32.totalorder %s28, 0
      %p347 = por %p345, %p346
      %p348 = scmp.ne.s32.totalorder %s340, %s342
      %p349 = scmp.eq.s32.totalorder %s33, 1
      %p350 = por %p348, %p349
      %p351 = scmp.ne.s32.totalorder %s342, %s343
      %p352 = scmp.eq.s32.totalorder %s33, 0
      %p353 = por %p351, %p352
      %p354 = scmp.ne.s32.totalorder %s342, %s343
      %p355 = scmp.eq.s32.totalorder %s34, 1
      %p356 = por %p354, %p355
      %p358 = scmp.ne.s32.totalorder %s343, %s357
      %p359 = scmp.eq.s32.totalorder %s34, 0
      %p360 = por %p358, %p359
      %s362 = sadd.s32 %s361, 1
      %p365 = scmp.eq.s32.totalorder %s28, 1
      %p366 = scmp.ne.s32.totalorder %s361, %s363
      %p367 = scmp.eq.s32.totalorder %s28, 0
      %p368 = por %p366, %p367
      %p369 = scmp.ne.s32.totalorder %s361, %s363
      %p370 = scmp.eq.s32.totalorder %s33, 1
      %p371 = por %p369, %p370
      %p372 = scmp.ne.s32.totalorder %s363, %s364
      %p373 = scmp.eq.s32.totalorder %s33, 0
      %p374 = por %p372, %p373
      %p375 = scmp.ne.s32.totalorder %s363, %s364
      %p376 = scmp.eq.s32.totalorder %s34, 1
      %p377 = por %p375, %p376
      %p379 = scmp.ne.s32.totalorder %s364, %s378
      %p380 = scmp.eq.s32.totalorder %s34, 0
      %p381 = por %p379, %p380
      %s383 = sadd.s32 %s382, 1
      %p386 = scmp.eq.s32.totalorder %s28, 1
      %p387 = scmp.ne.s32.totalorder %s382, %s384
      %p388 = scmp.eq.s32.totalorder %s28, 0
      %p389 = por %p387, %p388
      %p390 = scmp.ne.s32.totalorder %s382, %s384
      %p391 = scmp.eq.s32.totalorder %s33, 1
      %p392 = por %p390, %p391
      %p393 = scmp.ne.s32.totalorder %s384, %s385
      %p394 = scmp.eq.s32.totalorder %s33, 0
      %p395 = por %p393, %p394
      %p396 = scmp.ne.s32.totalorder %s384, %s385
      %p397 = scmp.eq.s32.totalorder %s34, 1
      %p398 = por %p396, %p397
      %p400 = scmp.ne.s32.totalorder %s385, %s399
      %p401 = scmp.eq.s32.totalorder %s34, 0
      %p402 = por %p400, %p401
      %s403 = ssub.s32 %s28, %s35
      %p404 = scmp.eq.s32.totalorder %s403, 0
      %s406 = sadd.s32 %s405, 1
      %s407 = scalar_select %p404, %s405, %s406
      %p410 = pneg %p404
      %p411 = scmp.eq.s32.totalorder %s28, 1
      %p412 = por %p410, %p411
      %p413 = scmp.ne.s32.totalorder %s405, %s408
      %p414 = scmp.eq.s32.totalorder %s28, 0
      %p415 = por %p413, %p414
      %p416 = scmp.ne.s32.totalorder %s405, %s408
      %p417 = scmp.eq.s32.totalorder %s33, 1
      %p418 = por %p416, %p417
      %p419 = scmp.ne.s32.totalorder %s408, %s409
      %p420 = scmp.eq.s32.totalorder %s33, 0
      %p421 = por %p419, %p420
      %p422 = scmp.ne.s32.totalorder %s408, %s409
      %p423 = scmp.eq.s32.totalorder %s34, 1
      %p424 = por %p422, %p423
      %p426 = scmp.ne.s32.totalorder %s409, %s425
      %p427 = scmp.eq.s32.totalorder %s34, 0
      %p428 = por %p426, %p427
      %p429 = scmp.le.s32.totalorder 1, %s28
      %p430 = scmp.lt.s32.totalorder %s28, 3
      %p431 = pnand %p429, %p430
      %p432 = pneg %p431
      // Predicated region
      $region9: #{tpu_custom_call.1} parent=5 // pred_check
        _
      $region10: #{tpu_custom_call.1} parent=5 // pred_check_branch
        %434 = sbr.rel (%p431) target = $region12
      $region11: #{tpu_custom_call.1} parent=5 // pred_region
        %s435 = ssub.s32 %s28, 1
        // Predicated region
        $region13: #{tpu_custom_call.1} parent=11 // pred_check
          %p436 = pneg %p101
        $region14: #{tpu_custom_call.1} parent=11 // pred_check_branch
          %438 = sbr.rel (%p436) target = $region16
        $region15: #{tpu_custom_call.1} parent=11 // pred_region
          _
        $region16: #{tpu_custom_call.1} parent=11 // pred_fallthru
          _
        // Predicated region
        $region17: #{tpu_custom_call.1} parent=11 // pred_check
          %p439 = pneg %p122
        $region18: #{tpu_custom_call.1} parent=11 // pred_check_branch
          %441 = sbr.rel (%p439) target = $region20
        $region19: #{tpu_custom_call.1} parent=11 // pred_region
          _
        $region20: #{tpu_custom_call.1} parent=11 // pred_fallthru
          _
        // Predicated region
        $region21: #{tpu_custom_call.1} parent=11 // pred_check
          %p442 = pneg %p143
        $region22: #{tpu_custom_call.1} parent=11 // pred_check_branch
          %444 = sbr.rel (%p442) target = $region24
        $region23: #{tpu_custom_call.1} parent=11 // pred_region
          _
        $region24: #{tpu_custom_call.1} parent=11 // pred_fallthru
          _
        // Predicated region
        $region25: #{tpu_custom_call.1} parent=11 // pred_check
          %p445 = pneg %p164
        $region26: #{tpu_custom_call.1} parent=11 // pred_check_branch
          %447 = sbr.rel (%p445) target = $region28
        $region27: #{tpu_custom_call.1} parent=11 // pred_region
          _
        $region28: #{tpu_custom_call.1} parent=11 // pred_fallthru
          _
        // Predicated region
        $region29: #{tpu_custom_call.1} parent=11 // pred_check
          %p448 = pneg %p185
        $region30: #{tpu_custom_call.1} parent=11 // pred_check_branch
          %450 = sbr.rel (%p448) target = $region32
        $region31: #{tpu_custom_call.1} parent=11 // pred_region
          _
        $region32: #{tpu_custom_call.1} parent=11 // pred_fallthru
          _
        // Predicated region
        $region33: #{tpu_custom_call.1} parent=11 // pred_check
          %p451 = pneg %p206
        $region34: #{tpu_custom_call.1} parent=11 // pred_check_branch
          %453 = sbr.rel (%p451) target = $region36
        $region35: #{tpu_custom_call.1} parent=11 // pred_region
          _
        $region36: #{tpu_custom_call.1} parent=11 // pred_fallthru
          _
        // Predicated region
        $region37: #{tpu_custom_call.1} parent=11 // pred_check
          %p454 = pneg %p227
        $region38: #{tpu_custom_call.1} parent=11 // pred_check_branch
          %456 = sbr.rel (%p454) target = $region40
        $region39: #{tpu_custom_call.1} parent=11 // pred_region
          _
        $region40: #{tpu_custom_call.1} parent=11 // pred_fallthru
          _
        // Predicated region
        $region41: #{tpu_custom_call.1} parent=11 // pred_check
          %p457 = pneg %p248
        $region42: #{tpu_custom_call.1} parent=11 // pred_check_branch
          %459 = sbr.rel (%p457) target = $region44
        $region43: #{tpu_custom_call.1} parent=11 // pred_region
          _
        $region44: #{tpu_custom_call.1} parent=11 // pred_fallthru
          _
        // Predicated region
        $region45: #{tpu_custom_call.1} parent=11 // pred_check
          %p460 = pneg %p269
        $region46: #{tpu_custom_call.1} parent=11 // pred_check_branch
          %462 = sbr.rel (%p460) target = $region48
        $region47: #{tpu_custom_call.1} parent=11 // pred_region
          _
        $region48: #{tpu_custom_call.1} parent=11 // pred_fallthru
          _
        // Predicated region
        $region49: #{tpu_custom_call.1} parent=11 // pred_check
          %p463 = pneg %p290
        $region50: #{tpu_custom_call.1} parent=11 // pred_check_branch
          %465 = sbr.rel (%p463) target = $region52
        $region51: #{tpu_custom_call.1} parent=11 // pred_region
          _
        $region52: #{tpu_custom_call.1} parent=11 // pred_fallthru
          _
        // Predicated region
        $region53: #{tpu_custom_call.1} parent=11 // pred_check
          %p466 = pneg %p311
        $region54: #{tpu_custom_call.1} parent=11 // pred_check_branch
          %468 = sbr.rel (%p466) target = $region56
        $region55: #{tpu_custom_call.1} parent=11 // pred_region
          _
        $region56: #{tpu_custom_call.1} parent=11 // pred_fallthru
          _
        // Predicated region
        $region57: #{tpu_custom_call.1} parent=11 // pred_check
          %p469 = pneg %p332
        $region58: #{tpu_custom_call.1} parent=11 // pred_check_branch
          %471 = sbr.rel (%p469) target = $region60
        $region59: #{tpu_custom_call.1} parent=11 // pred_region
          _
        $region60: #{tpu_custom_call.1} parent=11 // pred_fallthru
          _
        // Predicated region
        $region61: #{tpu_custom_call.1} parent=11 // pred_check
          %p472 = pneg %p353
        $region62: #{tpu_custom_call.1} parent=11 // pred_check_branch
          %474 = sbr.rel (%p472) target = $region64
        $region63: #{tpu_custom_call.1} parent=11 // pred_region
          _
        $region64: #{tpu_custom_call.1} parent=11 // pred_fallthru
          _
        // Predicated region
        $region65: #{tpu_custom_call.1} parent=11 // pred_check
          %p475 = pneg %p374
        $region66: #{tpu_custom_call.1} parent=11 // pred_check_branch
          %477 = sbr.rel (%p475) target = $region68
        $region67: #{tpu_custom_call.1} parent=11 // pred_region
          _
        $region68: #{tpu_custom_call.1} parent=11 // pred_fallthru
          _
        // Predicated region
        $region69: #{tpu_custom_call.1} parent=11 // pred_check
          %p478 = pneg %p395
        $region70: #{tpu_custom_call.1} parent=11 // pred_check_branch
          %480 = sbr.rel (%p478) target = $region72
        $region71: #{tpu_custom_call.1} parent=11 // pred_region
          _
        $region72: #{tpu_custom_call.1} parent=11 // pred_fallthru
          _
      $region12: #{tpu_custom_call.1} parent=5 // pred_fallthru
        _
      %p481 = scmp.lt.s32.totalorder %s28, 2
      // Predicated region
      $region73: #{tpu_custom_call.1} parent=5 // pred_check
        %p482 = pneg %p481
      $region74: #{tpu_custom_call.1} parent=5 // pred_check_branch
        %484 = sbr.rel (%p482) target = $region76
      $region75: #{tpu_custom_call.1} parent=5 // pred_region
        // Predicated region
        $region77: #{tpu_custom_call.1} parent=75 // pred_check
          %p485 = pneg %p48
        $region78: #{tpu_custom_call.1} parent=75 // pred_check_branch
          %487 = sbr.rel (%p485) target = $region80
        $region79: #{tpu_custom_call.1} parent=75 // pred_region
          %s488 = smul.u32 16, %s28
          %p489 = scmp.lt.s32.totalorder %s488, 31
          %s490 = scalar_select %p489, %s488, 31
          %s491 = smul.addr %s490, 8
          %s492 = scalar_lea.vmem %s0, %s491
          %s493 = smul.u32 16, %s28
        $region80: #{tpu_custom_call.1} parent=75 // pred_fallthru
          _
        // Predicated region
        $region81: #{tpu_custom_call.1} parent=75 // pred_check
          %p494 = pneg %p74
        $region82: #{tpu_custom_call.1} parent=75 // pred_check_branch
          %496 = sbr.rel (%p494) target = $region84
        $region83: #{tpu_custom_call.1} parent=75 // pred_region
          %s497 = smul.u32 16, %s28
          %p498 = scmp.lt.s32.totalorder %s497, 31
          %s499 = scalar_select %p498, %s497, 31
          %s500 = smul.addr %s499, 8
          %s501 = scalar_lea.vmem %s1, %s500
          %s502 = smul.u32 16, %s28
        $region84: #{tpu_custom_call.1} parent=75 // pred_fallthru
          _
      $region76: #{tpu_custom_call.1} parent=5 // pred_fallthru
        _
      %p503 = scmp.le.s32.totalorder 1, %s28
      %p504 = scmp.lt.s32.totalorder %s28, 3
      %p505 = pnand %p503, %p504
      %p506 = pneg %p505
      // Predicated region
      $region85: #{tpu_custom_call.1} parent=5 // pred_check
        _
      $region86: #{tpu_custom_call.1} parent=5 // pred_check_branch
        %508 = sbr.rel (%p505) target = $region88
      $region87: #{tpu_custom_call.1} parent=5 // pred_region
        %s509 = ssub.s32 %s28, 1
        %s510 = smul.u32 16, %s33
        %p511 = scmp.lt.s32.totalorder %s510, 31
        %s512 = scalar_select %p511, %s510, 31
        %s513 = smul.addr %s512, 8
        %s514 = scalar_lea.vmem %s0, %s513
        %p515 = pneg %p54
        %p516 = pneg %p51
        %s517 = smul.u32 16, %s33
        %p518 = scmp.lt.s32.totalorder %s517, 31
        %s519 = scalar_select %p518, %s517, 31
        %s520 = smul.addr %s519, 8
        %s521 = scalar_lea.vmem %s1, %s520
        %p522 = pneg %p80
        %p523 = pneg %p77
        %p524 = pneg %p101
        %p525 = pneg %p98
        %p526 = pneg %p122
        %p527 = pneg %p119
        %p528 = pneg %p143
        %p529 = pneg %p140
        %p530 = pneg %p164
        %p531 = pneg %p161
        %p532 = pneg %p185
        %p533 = pneg %p182
        %p534 = pneg %p206
        %p535 = pneg %p203
        %p536 = pneg %p227
        %p537 = pneg %p224
        %p538 = pneg %p248
        %p539 = pneg %p245
        %p540 = pneg %p269
        %p541 = pneg %p266
        %p542 = pneg %p290
        %p543 = pneg %p287
        %p544 = pneg %p311
        %p545 = pneg %p308
        %p546 = pneg %p332
        %p547 = pneg %p329
        %p548 = pneg %p353
        %p549 = pneg %p350
        %p550 = pneg %p374
        %p551 = pneg %p371
        %p552 = pneg %p395
        %p553 = pneg %p392
        %p554 = pneg %p421
        %p555 = pneg %p418
        %s556 = sand.u32 %s408, 1
        %s557 = scalar_lea.sflag [#allocation4], %s556
        %s558 = sand.u32 %s408, 1
        %s559 = scalar_lea.vmem [#allocation3], %s558
        %s560 = smul.u32 16, %s33
        %p561 = scmp.lt.s32.totalorder %s560, 31
        %s562 = scalar_select %p561, %s560, 31
        %s563 = smul.addr %s562, 8
        %s564 = scalar_lea.vmem %s0, %s563
        %s565 = smul.u32 16, %s33
        %s566 = smul.u32 16, %s33
        %p567 = scmp.lt.s32.totalorder %s566, 31
        %s568 = scalar_select %p567, %s566, 31
        %s569 = smul.addr %s568, 8
        %s570 = scalar_lea.vmem %s1, %s569
        %s571 = smul.u32 16, %s33
        %v572 = vld [vmem:[%s564] sm:$0xff]
        %v573 = vld [vmem:[%s564 + $0x8] sm:$0xff]
        %v574 = vld [vmem:[%s564 + $0x10] sm:$0xff]
        %v575 = vld [vmem:[%s564 + $0x18] sm:$0xff]
        %v576 = vld [vmem:[%s564 + $0x20] sm:$0xff]
        %v577 = vld [vmem:[%s564 + $0x28] sm:$0xff]
        %v578 = vld [vmem:[%s564 + $0x30] sm:$0xff]
        %v579 = vld [vmem:[%s564 + $0x38] sm:$0xff]
        %v580 = vld [vmem:[%s564 + $0x40] sm:$0xff]
        %v581 = vld [vmem:[%s564 + $0x48] sm:$0xff]
        %v582 = vld [vmem:[%s564 + $0x50] sm:$0xff]
        %v583 = vld [vmem:[%s564 + $0x58] sm:$0xff]
        %v584 = vld [vmem:[%s564 + $0x60] sm:$0xff]
        %v585 = vld [vmem:[%s564 + $0x68] sm:$0xff]
        %v586 = vld [vmem:[%s564 + $0x70] sm:$0xff]
        %v587 = vld [vmem:[%s564 + $0x78] sm:$0xff]
        %v588 = vld [vmem:[%s6] sm:$0xff]
        %v589 = vld [vmem:[%s6 + $0x8] sm:$0x1f]
        %v590 = vld [vmem:[%s7] sm:$0x1]
        %v592 = vlaneseq
        %v593 = vshrl.u32 %v592, 7
        %v594 = vsub.s32 0, %v593
        %v595 = vrot.slane %v590, %v594
        %vm597 = vcmask 105472
        %v599 = vsel %vm597, %v572, 0
        %v602 = vsel %vm597, %v573, 0
        %v605 = vsel %vm597, %v574, 0
        %v608 = vsel %vm597, %v575, 0
        %v611 = vsel %vm597, %v576, 0
        %v614 = vsel %vm597, %v577, 0
        %v617 = vsel %vm597, %v578, 0
        %v620 = vsel %vm597, %v579, 0
        %v623 = vsel %vm597, %v580, 0
        %v626 = vsel %vm597, %v581, 0
        %v629 = vsel %vm597, %v582, 0
        %v632 = vsel %vm597, %v583, 0
        %v635 = vsel %vm597, %v584, 0
        %v638 = vsel %vm597, %v585, 0
        %v641 = vsel %vm597, %v586, 0
        %v644 = vsel %vm597, %v587, 0
        %vm646 = vcmask 1044480
        %v648 = vsel %vm646, %v589, 0
        %650 = vmatprep.subr.mxu0 0.0
        %651 = vmatpush1.msra.mxu0 0.0
        %652 = vmatprep.subr.mxu0 0.0
        %653 = vmatpush1.msra.mxu0 0.0
        %654 = vmatprep.subr.mxu0 0.0
        %655 = vmatpush1.msra.mxu0 0.0
        %656 = vmatprep.subr.mxu0 0.0
        %657 = vmatpush1.msra.mxu0 0.0
        %658 = vmatprep.subr.mxu0 0.0
        %659 = vmatpush1.msra.mxu0 0.0
        %660 = vmatprep.subr.mxu0 0.0
        %661 = vmatpush1.msra.mxu0 0.0
        %662 = vmatprep.subr.mxu0 0.0
        %663 = vmatpush1.msra.mxu0 0.0
        %664 = vmatprep.subr.mxu0 0.0
        %665 = vmatpush1.msra.mxu0 0.0
        %666 = vmatprep.subr.mxu0 0.0
        %667 = vmatpush1.msra.mxu0 0.0
        %668 = vmatprep.subr.mxu0 0.0
        %669 = vmatpush1.msra.mxu0 0.0
        %670 = vmatprep.subr.mxu0 0.0
        %671 = vmatpush1.msra.mxu0 0.0
        %672 = vmatprep.subr.mxu0 0.0
        %673 = vmatpush1.msra.mxu0 0.0
        %674 = vmatprep.subr.mxu0 0.0
        %675 = vmatpush1.msra.mxu0 0.0
        %676 = vmatprep.subr.mxu0 0.0
        %677 = vmatpush1.msra.mxu0 0.0
        %678 = vmatprep.subr.mxu0 0.0
        %679 = vmatpush1.msra.mxu0 %v648
        %680 = vmatprep.subr.mxu0 0.0
        %681 = vmatpush1.msra.mxu0 %v588
        %682 = vmatprep.subr.mxu0 0.0
        %683 = vmatpush2.msra.mxu0 0.0
        %684 = vmatprep.subr.mxu0 0.0
        %685 = vmatpush2.msra.mxu0 0.0
        %686 = vmatprep.subr.mxu0 0.0
        %687 = vmatpush2.msra.mxu0 0.0
        %688 = vmatprep.subr.mxu0 0.0
        %689 = vmatpush2.msra.mxu0 0.0
        %690 = vmatprep.subr.mxu0 0.0
        %691 = vmatpush2.msra.mxu0 0.0
        %692 = vmatprep.subr.mxu0 0.0
        %693 = vmatpush2.msra.mxu0 0.0
        %694 = vmatprep.subr.mxu0 0.0
        %695 = vmatpush2.msra.mxu0 0.0
        %696 = vmatprep.subr.mxu0 0.0
        %697 = vmatpush2.msra.mxu0 0.0
        %698 = vmatprep.subr.mxu0 0.0
        %699 = vmatpush2.msra.mxu0 0.0
        %700 = vmatprep.subr.mxu0 0.0
        %701 = vmatpush2.msra.mxu0 0.0
        %702 = vmatprep.subr.mxu0 0.0
        %703 = vmatpush2.msra.mxu0 0.0
        %704 = vmatprep.subr.mxu0 0.0
        %705 = vmatpush2.msra.mxu0 0.0
        %706 = vmatprep.subr.mxu0 0.0
        %707 = vmatpush2.msra.mxu0 0.0
        %708 = vmatprep.subr.mxu0 0.0
        %709 = vmatpush2.msra.mxu0 0.0
        %710 = vmatprep.subr.mxu0 0.0
        %711 = vmatpush2.msra.mxu0 0.0
        %712 = vmatprep.subr.mxu0 0.0
        %713 = vmatpush2.msra.mxu0 0.0
        %714 = vmatprep.mubr.f32.mxu0 0.0
        %715 = vmatmul.mubr.f32.gmra.mxu0 %v599
        %v716 = vpop.f32.mrf.mxu0
        %v717 = vadd.f32 %v595, %v716
        %v718 = vpop.f32.mrf.mxu0
        %719 = vmatprep.mubr.f32.mxu0 0.0
        %720 = vmatmul.mubr.f32.gmra.mxu0 %v602
        %v721 = vpop.f32.mrf.mxu0
        %v722 = vadd.f32 %v595, %v721
        %v723 = vpop.f32.mrf.mxu0
        %724 = vmatprep.mubr.f32.mxu0 0.0
        %725 = vmatmul.mubr.f32.gmra.mxu0 %v605
        %v726 = vpop.f32.mrf.mxu0
        %v727 = vadd.f32 %v595, %v726
        %v728 = vpop.f32.mrf.mxu0
        %729 = vmatprep.mubr.f32.mxu0 0.0
        %730 = vmatmul.mubr.f32.gmra.mxu0 %v608
        %v731 = vpop.f32.mrf.mxu0
        %v732 = vadd.f32 %v595, %v731
        %v733 = vpop.f32.mrf.mxu0
        %734 = vmatprep.mubr.f32.mxu0 0.0
        %735 = vmatmul.mubr.f32.gmra.mxu0 %v611
        %v736 = vpop.f32.mrf.mxu0
        %v737 = vadd.f32 %v595, %v736
        %v738 = vpop.f32.mrf.mxu0
        %739 = vmatprep.mubr.f32.mxu0 0.0
        %740 = vmatmul.mubr.f32.gmra.mxu0 %v614
        %v741 = vpop.f32.mrf.mxu0
        %v742 = vadd.f32 %v595, %v741
        %v743 = vpop.f32.mrf.mxu0
        %744 = vmatprep.mubr.f32.mxu0 0.0
        %745 = vmatmul.mubr.f32.gmra.mxu0 %v617
        %v746 = vpop.f32.mrf.mxu0
        %v747 = vadd.f32 %v595, %v746
        %v748 = vpop.f32.mrf.mxu0
        %749 = vmatprep.mubr.f32.mxu0 0.0
        %750 = vmatmul.mubr.f32.gmra.mxu0 %v620
        %v751 = vpop.f32.mrf.mxu0
        %v752 = vadd.f32 %v595, %v751
        %v753 = vpop.f32.mrf.mxu0
        %754 = vmatprep.mubr.f32.mxu0 0.0
        %755 = vmatmul.mubr.f32.gmra.mxu0 %v623
        %v756 = vpop.f32.mrf.mxu0
        %v757 = vadd.f32 %v595, %v756
        %v758 = vpop.f32.mrf.mxu0
        %759 = vmatprep.mubr.f32.mxu0 0.0
        %760 = vmatmul.mubr.f32.gmra.mxu0 %v626
        %v761 = vpop.f32.mrf.mxu0
        %v762 = vadd.f32 %v595, %v761
        %v763 = vpop.f32.mrf.mxu0
        %764 = vmatprep.mubr.f32.mxu0 0.0
        %765 = vmatmul.mubr.f32.gmra.mxu0 %v629
        %v766 = vpop.f32.mrf.mxu0
        %v767 = vadd.f32 %v595, %v766
        %v768 = vpop.f32.mrf.mxu0
        %769 = vmatprep.mubr.f32.mxu0 0.0
        %770 = vmatmul.mubr.f32.gmra.mxu0 %v632
        %v771 = vpop.f32.mrf.mxu0
        %v772 = vadd.f32 %v595, %v771
        %v773 = vpop.f32.mrf.mxu0
        %774 = vmatprep.mubr.f32.mxu0 0.0
        %775 = vmatmul.mubr.f32.gmra.mxu0 %v635
        %v776 = vpop.f32.mrf.mxu0
        %v777 = vadd.f32 %v595, %v776
        %v778 = vpop.f32.mrf.mxu0
        %779 = vmatprep.mubr.f32.mxu0 0.0
        %780 = vmatmul.mubr.f32.gmra.mxu0 %v638
        %v781 = vpop.f32.mrf.mxu0
        %v782 = vadd.f32 %v595, %v781
        %v783 = vpop.f32.mrf.mxu0
        %784 = vmatprep.mubr.f32.mxu0 0.0
        %785 = vmatmul.mubr.f32.gmra.mxu0 %v641
        %v786 = vpop.f32.mrf.mxu0
        %v787 = vadd.f32 %v595, %v786
        %v788 = vpop.f32.mrf.mxu0
        %789 = vmatprep.mubr.f32.mxu0 0.0
        %790 = vmatmul.mubr.f32.gmra.mxu0 %v644
        %v791 = vpop.f32.mrf.mxu0
        %v792 = vadd.f32 %v595, %v791
        %v793 = vpop.f32.mrf.mxu0
        %794 = vdwg.mxu0
        %v795 = vmax.f32 %v717, 0.0
        %v796 = vmax.f32 %v722, 0.0
        %v797 = vmax.f32 %v727, 0.0
        %v798 = vmax.f32 %v732, 0.0
        %v799 = vmax.f32 %v737, 0.0
        %v800 = vmax.f32 %v742, 0.0
        %v801 = vmax.f32 %v747, 0.0
        %v802 = vmax.f32 %v752, 0.0
        %v803 = vmax.f32 %v757, 0.0
        %v804 = vmax.f32 %v762, 0.0
        %v805 = vmax.f32 %v767, 0.0
        %v806 = vmax.f32 %v772, 0.0
        %v807 = vmax.f32 %v777, 0.0
        %v808 = vmax.f32 %v782, 0.0
        %v809 = vmax.f32 %v787, 0.0
        %v810 = vmax.f32 %v792, 0.0
        %v811 = vld [vmem:[%s8] sm:$0xff]
        %v812 = vld [vmem:[%s8 + $0x8] sm:$0xff]
        %v813 = vld [vmem:[%s8 + $0x10] sm:$0xff]
        %v814 = vld [vmem:[%s8 + $0x18] sm:$0xff]
        %v815 = vld [vmem:[%s8 + $0x20] sm:$0xff]
        %v816 = vld [vmem:[%s8 + $0x28] sm:$0xff]
        %v817 = vld [vmem:[%s8 + $0x30] sm:$0xff]
        %v818 = vld [vmem:[%s8 + $0x38] sm:$0xff]
        %v819 = vld [vmem:[%s9] sm:$0x1]
        %v821 = vlaneseq
        %v822 = vshrl.u32 %v821, 7
        %v823 = vsub.s32 0, %v822
        %v824 = vrot.slane %v819, %v823
        %vm826 = vcmask 523264
        %v828 = vsel %vm826, %v795, 0
        %v831 = vsel %vm826, %v796, 0
        %v834 = vsel %vm826, %v797, 0
        %v837 = vsel %vm826, %v798, 0
        %v840 = vsel %vm826, %v799, 0
        %v843 = vsel %vm826, %v800, 0
        %v846 = vsel %vm826, %v801, 0
        %v849 = vsel %vm826, %v802, 0
        %v852 = vsel %vm826, %v803, 0
        %v855 = vsel %vm826, %v804, 0
        %v858 = vsel %vm826, %v805, 0
        %v861 = vsel %vm826, %v806, 0
        %v864 = vsel %vm826, %v807, 0
        %v867 = vsel %vm826, %v808, 0
        %v870 = vsel %vm826, %v809, 0
        %v873 = vsel %vm826, %v810, 0
        %875 = vmatprep.subr.mxu0 0.0
        %876 = vmatpush1.msra.mxu0 0.0
        %877 = vmatprep.subr.mxu0 0.0
        %878 = vmatpush1.msra.mxu0 0.0
        %879 = vmatprep.subr.mxu0 0.0
        %880 = vmatpush1.msra.mxu0 0.0
        %881 = vmatprep.subr.mxu0 0.0
        %882 = vmatpush1.msra.mxu0 0.0
        %883 = vmatprep.subr.mxu0 0.0
        %884 = vmatpush1.msra.mxu0 0.0
        %885 = vmatprep.subr.mxu0 0.0
        %886 = vmatpush1.msra.mxu0 0.0
        %887 = vmatprep.subr.mxu0 0.0
        %888 = vmatpush1.msra.mxu0 0.0
        %889 = vmatprep.subr.mxu0 0.0
        %890 = vmatpush1.msra.mxu0 0.0
        %891 = vmatprep.subr.mxu0 0.0
        %892 = vmatpush1.msra.mxu0 %v818
        %893 = vmatprep.subr.mxu0 0.0
        %894 = vmatpush1.msra.mxu0 %v817
        %895 = vmatprep.subr.mxu0 0.0
        %896 = vmatpush1.msra.mxu0 %v816
        %897 = vmatprep.subr.mxu0 0.0
        %898 = vmatpush1.msra.mxu0 %v815
        %899 = vmatprep.subr.mxu0 0.0
        %900 = vmatpush1.msra.mxu0 %v814
        %901 = vmatprep.subr.mxu0 0.0
        %902 = vmatpush1.msra.mxu0 %v813
        %903 = vmatprep.subr.mxu0 0.0
        %904 = vmatpush1.msra.mxu0 %v812
        %905 = vmatprep.subr.mxu0 0.0
        %906 = vmatpush1.msra.mxu0 %v811
        %907 = vmatprep.subr.mxu0 0.0
        %908 = vmatpush2.msra.mxu0 0.0
        %909 = vmatprep.subr.mxu0 0.0
        %910 = vmatpush2.msra.mxu0 0.0
        %911 = vmatprep.subr.mxu0 0.0
        %912 = vmatpush2.msra.mxu0 0.0
        %913 = vmatprep.subr.mxu0 0.0
        %914 = vmatpush2.msra.mxu0 0.0
        %915 = vmatprep.subr.mxu0 0.0
        %916 = vmatpush2.msra.mxu0 0.0
        %917 = vmatprep.subr.mxu0 0.0
        %918 = vmatpush2.msra.mxu0 0.0
        %919 = vmatprep.subr.mxu0 0.0
        %920 = vmatpush2.msra.mxu0 0.0
        %921 = vmatprep.subr.mxu0 0.0
        %922 = vmatpush2.msra.mxu0 0.0
        %923 = vmatprep.subr.mxu0 0.0
        %924 = vmatpush2.msra.mxu0 0.0
        %925 = vmatprep.subr.mxu0 0.0
        %926 = vmatpush2.msra.mxu0 0.0
        %927 = vmatprep.subr.mxu0 0.0
        %928 = vmatpush2.msra.mxu0 0.0
        %929 = vmatprep.subr.mxu0 0.0
        %930 = vmatpush2.msra.mxu0 0.0
        %931 = vmatprep.subr.mxu0 0.0
        %932 = vmatpush2.msra.mxu0 0.0
        %933 = vmatprep.subr.mxu0 0.0
        %934 = vmatpush2.msra.mxu0 0.0
        %935 = vmatprep.subr.mxu0 0.0
        %936 = vmatpush2.msra.mxu0 0.0
        %937 = vmatprep.subr.mxu0 0.0
        %938 = vmatpush2.msra.mxu0 0.0
        %939 = vmatprep.mubr.f32.mxu0 0.0
        %940 = vmatmul.mubr.f32.gmra.mxu0 %v828
        %v941 = vpop.f32.mrf.mxu0
        %v942 = vadd.f32 %v824, %v941
        %v943 = vpop.f32.mrf.mxu0
        %944 = vmatprep.mubr.f32.mxu0 0.0
        %945 = vmatmul.mubr.f32.gmra.mxu0 %v831
        %v946 = vpop.f32.mrf.mxu0
        %v947 = vadd.f32 %v824, %v946
        %v948 = vpop.f32.mrf.mxu0
        %949 = vmatprep.mubr.f32.mxu0 0.0
        %950 = vmatmul.mubr.f32.gmra.mxu0 %v834
        %v951 = vpop.f32.mrf.mxu0
        %v952 = vadd.f32 %v824, %v951
        %v953 = vpop.f32.mrf.mxu0
        %954 = vmatprep.mubr.f32.mxu0 0.0
        %955 = vmatmul.mubr.f32.gmra.mxu0 %v837
        %v956 = vpop.f32.mrf.mxu0
        %v957 = vadd.f32 %v824, %v956
        %v958 = vpop.f32.mrf.mxu0
        %959 = vmatprep.mubr.f32.mxu0 0.0
        %960 = vmatmul.mubr.f32.gmra.mxu0 %v840
        %v961 = vpop.f32.mrf.mxu0
        %v962 = vadd.f32 %v824, %v961
        %v963 = vpop.f32.mrf.mxu0
        %964 = vmatprep.mubr.f32.mxu0 0.0
        %965 = vmatmul.mubr.f32.gmra.mxu0 %v843
        %v966 = vpop.f32.mrf.mxu0
        %v967 = vadd.f32 %v824, %v966
        %v968 = vpop.f32.mrf.mxu0
        %969 = vmatprep.mubr.f32.mxu0 0.0
        %970 = vmatmul.mubr.f32.gmra.mxu0 %v846
        %v971 = vpop.f32.mrf.mxu0
        %v972 = vadd.f32 %v824, %v971
        %v973 = vpop.f32.mrf.mxu0
        %974 = vmatprep.mubr.f32.mxu0 0.0
        %975 = vmatmul.mubr.f32.gmra.mxu0 %v849
        %v976 = vpop.f32.mrf.mxu0
        %v977 = vadd.f32 %v824, %v976
        %v978 = vpop.f32.mrf.mxu0
        %979 = vmatprep.mubr.f32.mxu0 0.0
        %980 = vmatmul.mubr.f32.gmra.mxu0 %v852
        %v981 = vpop.f32.mrf.mxu0
        %v982 = vadd.f32 %v824, %v981
        %v983 = vpop.f32.mrf.mxu0
        %984 = vmatprep.mubr.f32.mxu0 0.0
        %985 = vmatmul.mubr.f32.gmra.mxu0 %v855
        %v986 = vpop.f32.mrf.mxu0
        %v987 = vadd.f32 %v824, %v986
        %v988 = vpop.f32.mrf.mxu0
        %989 = vmatprep.mubr.f32.mxu0 0.0
        %990 = vmatmul.mubr.f32.gmra.mxu0 %v858
        %v991 = vpop.f32.mrf.mxu0
        %v992 = vadd.f32 %v824, %v991
        %v993 = vpop.f32.mrf.mxu0
        %994 = vmatprep.mubr.f32.mxu0 0.0
        %995 = vmatmul.mubr.f32.gmra.mxu0 %v861
        %v996 = vpop.f32.mrf.mxu0
        %v997 = vadd.f32 %v824, %v996
        %v998 = vpop.f32.mrf.mxu0
        %999 = vmatprep.mubr.f32.mxu0 0.0
        %1000 = vmatmul.mubr.f32.gmra.mxu0 %v864
        %v1001 = vpop.f32.mrf.mxu0
        %v1002 = vadd.f32 %v824, %v1001
        %v1003 = vpop.f32.mrf.mxu0
        %1004 = vmatprep.mubr.f32.mxu0 0.0
        %1005 = vmatmul.mubr.f32.gmra.mxu0 %v867
        %v1006 = vpop.f32.mrf.mxu0
        %v1007 = vadd.f32 %v824, %v1006
        %v1008 = vpop.f32.mrf.mxu0
        %1009 = vmatprep.mubr.f32.mxu0 0.0
        %1010 = vmatmul.mubr.f32.gmra.mxu0 %v870
        %v1011 = vpop.f32.mrf.mxu0
        %v1012 = vadd.f32 %v824, %v1011
        %v1013 = vpop.f32.mrf.mxu0
        %1014 = vmatprep.mubr.f32.mxu0 0.0
        %1015 = vmatmul.mubr.f32.gmra.mxu0 %v873
        %v1016 = vpop.f32.mrf.mxu0
        %v1017 = vadd.f32 %v824, %v1016
        %v1018 = vpop.f32.mrf.mxu0
        %1019 = vdwg.mxu0
        %v1020 = vmax.f32 %v942, 0.0
        %v1021 = vmax.f32 %v947, 0.0
        %v1022 = vmax.f32 %v952, 0.0
        %v1023 = vmax.f32 %v957, 0.0
        %v1024 = vmax.f32 %v962, 0.0
        %v1025 = vmax.f32 %v967, 0.0
        %v1026 = vmax.f32 %v972, 0.0
        %v1027 = vmax.f32 %v977, 0.0
        %v1028 = vmax.f32 %v982, 0.0
        %v1029 = vmax.f32 %v987, 0.0
        %v1030 = vmax.f32 %v992, 0.0
        %v1031 = vmax.f32 %v997, 0.0
        %v1032 = vmax.f32 %v1002, 0.0
        %v1033 = vmax.f32 %v1007, 0.0
        %v1034 = vmax.f32 %v1012, 0.0
        %v1035 = vmax.f32 %v1017, 0.0
        %v1036 = vld [vmem:[%s570] sm:$0xff]
        %v1037 = vld [vmem:[%s570 + $0x8] sm:$0xff]
        %v1038 = vld [vmem:[%s570 + $0x10] sm:$0xff]
        %v1039 = vld [vmem:[%s570 + $0x18] sm:$0xff]
        %v1040 = vld [vmem:[%s570 + $0x20] sm:$0xff]
        %v1041 = vld [vmem:[%s570 + $0x28] sm:$0xff]
        %v1042 = vld [vmem:[%s570 + $0x30] sm:$0xff]
        %v1043 = vld [vmem:[%s570 + $0x38] sm:$0xff]
        %v1044 = vld [vmem:[%s570 + $0x40] sm:$0xff]
        %v1045 = vld [vmem:[%s570 + $0x48] sm:$0xff]
        %v1046 = vld [vmem:[%s570 + $0x50] sm:$0xff]
        %v1047 = vld [vmem:[%s570 + $0x58] sm:$0xff]
        %v1048 = vld [vmem:[%s570 + $0x60] sm:$0xff]
        %v1049 = vld [vmem:[%s570 + $0x68] sm:$0xff]
        %v1050 = vld [vmem:[%s570 + $0x70] sm:$0xff]
        %v1051 = vld [vmem:[%s570 + $0x78] sm:$0xff]
        %v1052 = vlaneseq
        %v1053 = vand.u32 %v1052, 127
        %1054 = vset.pattern.permute.xlu0 0
        %1055 = vperm.xlu0 %1054, %v1036
        %v1056 = vpop.permute.xlu0 %1055
        %1057 = vset.pattern.permute.xlu0 0
        %1058 = vperm.xlu0 %1057, %v1037
        %v1059 = vpop.permute.xlu0 %1058
        %1060 = vset.pattern.permute.xlu0 0
        %1061 = vperm.xlu0 %1060, %v1038
        %v1062 = vpop.permute.xlu0 %1061
        %1063 = vset.pattern.permute.xlu0 0
        %1064 = vperm.xlu0 %1063, %v1039
        %v1065 = vpop.permute.xlu0 %1064
        %1066 = vset.pattern.permute.xlu0 0
        %1067 = vperm.xlu0 %1066, %v1040
        %v1068 = vpop.permute.xlu0 %1067
        %1069 = vset.pattern.permute.xlu0 0
        %1070 = vperm.xlu0 %1069, %v1041
        %v1071 = vpop.permute.xlu0 %1070
        %1072 = vset.pattern.permute.xlu0 0
        %1073 = vperm.xlu0 %1072, %v1042
        %v1074 = vpop.permute.xlu0 %1073
        %1075 = vset.pattern.permute.xlu0 0
        %1076 = vperm.xlu0 %1075, %v1043
        %v1077 = vpop.permute.xlu0 %1076
        %1078 = vset.pattern.permute.xlu0 0
        %1079 = vperm.xlu0 %1078, %v1044
        %v1080 = vpop.permute.xlu0 %1079
        %1081 = vset.pattern.permute.xlu0 0
        %1082 = vperm.xlu0 %1081, %v1045
        %v1083 = vpop.permute.xlu0 %1082
        %1084 = vset.pattern.permute.xlu0 0
        %1085 = vperm.xlu0 %1084, %v1046
        %v1086 = vpop.permute.xlu0 %1085
        %1087 = vset.pattern.permute.xlu0 0
        %1088 = vperm.xlu0 %1087, %v1047
        %v1089 = vpop.permute.xlu0 %1088
        %1090 = vset.pattern.permute.xlu0 0
        %1091 = vperm.xlu0 %1090, %v1048
        %v1092 = vpop.permute.xlu0 %1091
        %1093 = vset.pattern.permute.xlu0 0
        %1094 = vperm.xlu0 %1093, %v1049
        %v1095 = vpop.permute.xlu0 %1094
        %1096 = vset.pattern.permute.xlu0 0
        %1097 = vperm.xlu0 %1096, %v1050
        %v1098 = vpop.permute.xlu0 %1097
        %1099 = vset.pattern.permute.xlu0 0
        %1100 = vperm.xlu0 %1099, %v1051
        %v1101 = vpop.permute.xlu0 %1100
        %vm1102 = vcmp.eq.s32.totalorder %v1053, %v1056
        %vm1103 = vcmp.eq.s32.totalorder %v1053, %v1059
        %vm1104 = vcmp.eq.s32.totalorder %v1053, %v1062
        %vm1105 = vcmp.eq.s32.totalorder %v1053, %v1065
        %vm1106 = vcmp.eq.s32.totalorder %v1053, %v1068
        %vm1107 = vcmp.eq.s32.totalorder %v1053, %v1071
        %vm1108 = vcmp.eq.s32.totalorder %v1053, %v1074
        %vm1109 = vcmp.eq.s32.totalorder %v1053, %v1077
        %vm1110 = vcmp.eq.s32.totalorder %v1053, %v1080
        %vm1111 = vcmp.eq.s32.totalorder %v1053, %v1083
        %vm1112 = vcmp.eq.s32.totalorder %v1053, %v1086
        %vm1113 = vcmp.eq.s32.totalorder %v1053, %v1089
        %vm1114 = vcmp.eq.s32.totalorder %v1053, %v1092
        %vm1115 = vcmp.eq.s32.totalorder %v1053, %v1095
        %vm1116 = vcmp.eq.s32.totalorder %v1053, %v1098
        %vm1117 = vcmp.eq.s32.totalorder %v1053, %v1101
        %v1118 = vsel %vm1102, 1, 0
        %v1119 = vsel %vm1103, 1, 0
        %v1120 = vsel %vm1104, 1, 0
        %v1121 = vsel %vm1105, 1, 0
        %v1122 = vsel %vm1106, 1, 0
        %v1123 = vsel %vm1107, 1, 0
        %v1124 = vsel %vm1108, 1, 0
        %v1125 = vsel %vm1109, 1, 0
        %v1126 = vsel %vm1110, 1, 0
        %v1127 = vsel %vm1111, 1, 0
        %v1128 = vsel %vm1112, 1, 0
        %v1129 = vsel %vm1113, 1, 0
        %v1130 = vsel %vm1114, 1, 0
        %v1131 = vsel %vm1115, 1, 0
        %v1132 = vsel %vm1116, 1, 0
        %v1133 = vsel %vm1117, 1, 0
        %v1134 = vcvt.s32.f32 %v1118
        %v1135 = vcvt.s32.f32 %v1119
        %v1136 = vcvt.s32.f32 %v1120
        %v1137 = vcvt.s32.f32 %v1121
        %v1138 = vcvt.s32.f32 %v1122
        %v1139 = vcvt.s32.f32 %v1123
        %v1140 = vcvt.s32.f32 %v1124
        %v1141 = vcvt.s32.f32 %v1125
        %v1142 = vcvt.s32.f32 %v1126
        %v1143 = vcvt.s32.f32 %v1127
        %v1144 = vcvt.s32.f32 %v1128
        %v1145 = vcvt.s32.f32 %v1129
        %v1146 = vcvt.s32.f32 %v1130
        %v1147 = vcvt.s32.f32 %v1131
        %v1148 = vcvt.s32.f32 %v1132
        %v1149 = vcvt.s32.f32 %v1133
        %v1150 = vld [vmem:[%s2] sm:$0xff]
        %v1151 = vld [vmem:[%s2 + $0x8] sm:$0xff]
        %v1152 = vld [vmem:[%s2 + $0x10] sm:$0xf]
        %vm1153 = vcmask 162816
        %v1155 = vsel %vm1153, %v1134, 0
        %v1158 = vsel %vm1153, %v1135, 0
        %v1161 = vsel %vm1153, %v1136, 0
        %v1164 = vsel %vm1153, %v1137, 0
        %v1167 = vsel %vm1153, %v1138, 0
        %v1170 = vsel %vm1153, %v1139, 0
        %v1173 = vsel %vm1153, %v1140, 0
        %v1176 = vsel %vm1153, %v1141, 0
        %v1179 = vsel %vm1153, %v1142, 0
        %v1182 = vsel %vm1153, %v1143, 0
        %v1185 = vsel %vm1153, %v1144, 0
        %v1188 = vsel %vm1153, %v1145, 0
        %v1191 = vsel %vm1153, %v1146, 0
        %v1194 = vsel %vm1153, %v1147, 0
        %v1197 = vsel %vm1153, %v1148, 0
        %v1200 = vsel %vm1153, %v1149, 0
        %vm1202 = vcmask 1043456
        %v1204 = vsel %vm1202, %v1152, 0
        %1206 = vmatprep.subr.mxu0 0.0
        %1207 = vmatpush1.msra.mxu0 0.0
        %1208 = vmatprep.subr.mxu0 0.0
        %1209 = vmatpush1.msra.mxu0 0.0
        %1210 = vmatprep.subr.mxu0 0.0
        %1211 = vmatpush1.msra.mxu0 0.0
        %1212 = vmatprep.subr.mxu0 0.0
        %1213 = vmatpush1.msra.mxu0 0.0
        %1214 = vmatprep.subr.mxu0 0.0
        %1215 = vmatpush1.msra.mxu0 0.0
        %1216 = vmatprep.subr.mxu0 0.0
        %1217 = vmatpush1.msra.mxu0 0.0
        %1218 = vmatprep.subr.mxu0 0.0
        %1219 = vmatpush1.msra.mxu0 0.0
        %1220 = vmatprep.subr.mxu0 0.0
        %1221 = vmatpush1.msra.mxu0 0.0
        %1222 = vmatprep.subr.mxu0 0.0
        %1223 = vmatpush1.msra.mxu0 0.0
        %1224 = vmatprep.subr.mxu0 0.0
        %1225 = vmatpush1.msra.mxu0 0.0
        %1226 = vmatprep.subr.mxu0 0.0
        %1227 = vmatpush1.msra.mxu0 0.0
        %1228 = vmatprep.subr.mxu0 0.0
        %1229 = vmatpush1.msra.mxu0 0.0
        %1230 = vmatprep.subr.mxu0 0.0
        %1231 = vmatpush1.msra.mxu0 0.0
        %1232 = vmatprep.subr.mxu0 0.0
        %1233 = vmatpush1.msra.mxu0 %v1204
        %1234 = vmatprep.subr.mxu0 0.0
        %1235 = vmatpush1.msra.mxu0 %v1151
        %1236 = vmatprep.subr.mxu0 0.0
        %1237 = vmatpush1.msra.mxu0 %v1150
        %1238 = vmatprep.subr.mxu0 0.0
        %1239 = vmatpush2.msra.mxu0 0.0
        %1240 = vmatprep.subr.mxu0 0.0
        %1241 = vmatpush2.msra.mxu0 0.0
        %1242 = vmatprep.subr.mxu0 0.0
        %1243 = vmatpush2.msra.mxu0 0.0
        %1244 = vmatprep.subr.mxu0 0.0
        %1245 = vmatpush2.msra.mxu0 0.0
        %1246 = vmatprep.subr.mxu0 0.0
        %1247 = vmatpush2.msra.mxu0 0.0
        %1248 = vmatprep.subr.mxu0 0.0
        %1249 = vmatpush2.msra.mxu0 0.0
        %1250 = vmatprep.subr.mxu0 0.0
        %1251 = vmatpush2.msra.mxu0 0.0
        %1252 = vmatprep.subr.mxu0 0.0
        %1253 = vmatpush2.msra.mxu0 0.0
        %1254 = vmatprep.subr.mxu0 0.0
        %1255 = vmatpush2.msra.mxu0 0.0
        %1256 = vmatprep.subr.mxu0 0.0
        %1257 = vmatpush2.msra.mxu0 0.0
        %1258 = vmatprep.subr.mxu0 0.0
        %1259 = vmatpush2.msra.mxu0 0.0
        %1260 = vmatprep.subr.mxu0 0.0
        %1261 = vmatpush2.msra.mxu0 0.0
        %1262 = vmatprep.subr.mxu0 0.0
        %1263 = vmatpush2.msra.mxu0 0.0
        %1264 = vmatprep.subr.mxu0 0.0
        %1265 = vmatpush2.msra.mxu0 0.0
        %1266 = vmatprep.subr.mxu0 0.0
        %1267 = vmatpush2.msra.mxu0 0.0
        %1268 = vmatprep.subr.mxu0 0.0
        %1269 = vmatpush2.msra.mxu0 0.0
        %1270 = vmatprep.mubr.f32.mxu0 0.0
        %1271 = vmatmul.mubr.f32.gmra.mxu0 %v1155
        %v1272 = vpop.f32.mrf.mxu0
        %v1273 = vadd.f32 0.0, %v1272
        %v1274 = vpop.f32.mrf.mxu0
        %1275 = vmatprep.mubr.f32.mxu0 0.0
        %1276 = vmatmul.mubr.f32.gmra.mxu0 %v1158
        %v1277 = vpop.f32.mrf.mxu0
        %v1278 = vadd.f32 0.0, %v1277
        %v1279 = vpop.f32.mrf.mxu0
        %1280 = vmatprep.mubr.f32.mxu0 0.0
        %1281 = vmatmul.mubr.f32.gmra.mxu0 %v1161
        %v1282 = vpop.f32.mrf.mxu0
        %v1283 = vadd.f32 0.0, %v1282
        %v1284 = vpop.f32.mrf.mxu0
        %1285 = vmatprep.mubr.f32.mxu0 0.0
        %1286 = vmatmul.mubr.f32.gmra.mxu0 %v1164
        %v1287 = vpop.f32.mrf.mxu0
        %v1288 = vadd.f32 0.0, %v1287
        %v1289 = vpop.f32.mrf.mxu0
        %1290 = vmatprep.mubr.f32.mxu0 0.0
        %1291 = vmatmul.mubr.f32.gmra.mxu0 %v1167
        %v1292 = vpop.f32.mrf.mxu0
        %v1293 = vadd.f32 0.0, %v1292
        %v1294 = vpop.f32.mrf.mxu0
        %1295 = vmatprep.mubr.f32.mxu0 0.0
        %1296 = vmatmul.mubr.f32.gmra.mxu0 %v1170
        %v1297 = vpop.f32.mrf.mxu0
        %v1298 = vadd.f32 0.0, %v1297
        %v1299 = vpop.f32.mrf.mxu0
        %1300 = vmatprep.mubr.f32.mxu0 0.0
        %1301 = vmatmul.mubr.f32.gmra.mxu0 %v1173
        %v1302 = vpop.f32.mrf.mxu0
        %v1303 = vadd.f32 0.0, %v1302
        %v1304 = vpop.f32.mrf.mxu0
        %1305 = vmatprep.mubr.f32.mxu0 0.0
        %1306 = vmatmul.mubr.f32.gmra.mxu0 %v1176
        %v1307 = vpop.f32.mrf.mxu0
        %v1308 = vadd.f32 0.0, %v1307
        %v1309 = vpop.f32.mrf.mxu0
        %1310 = vmatprep.mubr.f32.mxu0 0.0
        %1311 = vmatmul.mubr.f32.gmra.mxu0 %v1179
        %v1312 = vpop.f32.mrf.mxu0
        %v1313 = vadd.f32 0.0, %v1312
        %v1314 = vpop.f32.mrf.mxu0
        %1315 = vmatprep.mubr.f32.mxu0 0.0
        %1316 = vmatmul.mubr.f32.gmra.mxu0 %v1182
        %v1317 = vpop.f32.mrf.mxu0
        %v1318 = vadd.f32 0.0, %v1317
        %v1319 = vpop.f32.mrf.mxu0
        %1320 = vmatprep.mubr.f32.mxu0 0.0
        %1321 = vmatmul.mubr.f32.gmra.mxu0 %v1185
        %v1322 = vpop.f32.mrf.mxu0
        %v1323 = vadd.f32 0.0, %v1322
        %v1324 = vpop.f32.mrf.mxu0
        %1325 = vmatprep.mubr.f32.mxu0 0.0
        %1326 = vmatmul.mubr.f32.gmra.mxu0 %v1188
        %v1327 = vpop.f32.mrf.mxu0
        %v1328 = vadd.f32 0.0, %v1327
        %v1329 = vpop.f32.mrf.mxu0
        %1330 = vmatprep.mubr.f32.mxu0 0.0
        %1331 = vmatmul.mubr.f32.gmra.mxu0 %v1191
        %v1332 = vpop.f32.mrf.mxu0
        %v1333 = vadd.f32 0.0, %v1332
        %v1334 = vpop.f32.mrf.mxu0
        %1335 = vmatprep.mubr.f32.mxu0 0.0
        %1336 = vmatmul.mubr.f32.gmra.mxu0 %v1194
        %v1337 = vpop.f32.mrf.mxu0
        %v1338 = vadd.f32 0.0, %v1337
        %v1339 = vpop.f32.mrf.mxu0
        %1340 = vmatprep.mubr.f32.mxu0 0.0
        %1341 = vmatmul.mubr.f32.gmra.mxu0 %v1197
        %v1342 = vpop.f32.mrf.mxu0
        %v1343 = vadd.f32 0.0, %v1342
        %v1344 = vpop.f32.mrf.mxu0
        %1345 = vmatprep.mubr.f32.mxu0 0.0
        %1346 = vmatmul.mubr.f32.gmra.mxu0 %v1200
        %v1347 = vpop.f32.mrf.mxu0
        %v1348 = vadd.f32 0.0, %v1347
        %v1349 = vpop.f32.mrf.mxu0
        %1350 = vdwg.mxu0
        %1351 = vset.pattern.permute.xlu0 1
        %1352 = vperm.xlu0 %1351, %v1036
        %v1353 = vpop.permute.xlu0 %1352
        %1354 = vset.pattern.permute.xlu0 1
        %1355 = vperm.xlu0 %1354, %v1037
        %v1356 = vpop.permute.xlu0 %1355
        %1357 = vset.pattern.permute.xlu0 1
        %1358 = vperm.xlu0 %1357, %v1038
        %v1359 = vpop.permute.xlu0 %1358
        %1360 = vset.pattern.permute.xlu0 1
        %1361 = vperm.xlu0 %1360, %v1039
        %v1362 = vpop.permute.xlu0 %1361
        %1363 = vset.pattern.permute.xlu0 1
        %1364 = vperm.xlu0 %1363, %v1040
        %v1365 = vpop.permute.xlu0 %1364
        %1366 = vset.pattern.permute.xlu0 1
        %1367 = vperm.xlu0 %1366, %v1041
        %v1368 = vpop.permute.xlu0 %1367
        %1369 = vset.pattern.permute.xlu0 1
        %1370 = vperm.xlu0 %1369, %v1042
        %v1371 = vpop.permute.xlu0 %1370
        %1372 = vset.pattern.permute.xlu0 1
        %1373 = vperm.xlu0 %1372, %v1043
        %v1374 = vpop.permute.xlu0 %1373
        %1375 = vset.pattern.permute.xlu0 1
        %1376 = vperm.xlu0 %1375, %v1044
        %v1377 = vpop.permute.xlu0 %1376
        %1378 = vset.pattern.permute.xlu0 1
        %1379 = vperm.xlu0 %1378, %v1045
        %v1380 = vpop.permute.xlu0 %1379
        %1381 = vset.pattern.permute.xlu0 1
        %1382 = vperm.xlu0 %1381, %v1046
        %v1383 = vpop.permute.xlu0 %1382
        %1384 = vset.pattern.permute.xlu0 1
        %1385 = vperm.xlu0 %1384, %v1047
        %v1386 = vpop.permute.xlu0 %1385
        %1387 = vset.pattern.permute.xlu0 1
        %1388 = vperm.xlu0 %1387, %v1048
        %v1389 = vpop.permute.xlu0 %1388
        %1390 = vset.pattern.permute.xlu0 1
        %1391 = vperm.xlu0 %1390, %v1049
        %v1392 = vpop.permute.xlu0 %1391
        %1393 = vset.pattern.permute.xlu0 1
        %1394 = vperm.xlu0 %1393, %v1050
        %v1395 = vpop.permute.xlu0 %1394
        %1396 = vset.pattern.permute.xlu0 1
        %1397 = vperm.xlu0 %1396, %v1051
        %v1398 = vpop.permute.xlu0 %1397
        %vm1399 = vcmp.eq.s32.totalorder %v1053, %v1353
        %vm1400 = vcmp.eq.s32.totalorder %v1053, %v1356
        %vm1401 = vcmp.eq.s32.totalorder %v1053, %v1359
        %vm1402 = vcmp.eq.s32.totalorder %v1053, %v1362
        %vm1403 = vcmp.eq.s32.totalorder %v1053, %v1365
        %vm1404 = vcmp.eq.s32.totalorder %v1053, %v1368
        %vm1405 = vcmp.eq.s32.totalorder %v1053, %v1371
        %vm1406 = vcmp.eq.s32.totalorder %v1053, %v1374
        %vm1407 = vcmp.eq.s32.totalorder %v1053, %v1377
        %vm1408 = vcmp.eq.s32.totalorder %v1053, %v1380
        %vm1409 = vcmp.eq.s32.totalorder %v1053, %v1383
        %vm1410 = vcmp.eq.s32.totalorder %v1053, %v1386
        %vm1411 = vcmp.eq.s32.totalorder %v1053, %v1389
        %vm1412 = vcmp.eq.s32.totalorder %v1053, %v1392
        %vm1413 = vcmp.eq.s32.totalorder %v1053, %v1395
        %vm1414 = vcmp.eq.s32.totalorder %v1053, %v1398
        %v1415 = vsel %vm1399, 1, 0
        %v1416 = vsel %vm1400, 1, 0
        %v1417 = vsel %vm1401, 1, 0
        %v1418 = vsel %vm1402, 1, 0
        %v1419 = vsel %vm1403, 1, 0
        %v1420 = vsel %vm1404, 1, 0
        %v1421 = vsel %vm1405, 1, 0
        %v1422 = vsel %vm1406, 1, 0
        %v1423 = vsel %vm1407, 1, 0
        %v1424 = vsel %vm1408, 1, 0
        %v1425 = vsel %vm1409, 1, 0
        %v1426 = vsel %vm1410, 1, 0
        %v1427 = vsel %vm1411, 1, 0
        %v1428 = vsel %vm1412, 1, 0
        %v1429 = vsel %vm1413, 1, 0
        %v1430 = vsel %vm1414, 1, 0
        %v1431 = vcvt.s32.f32 %v1415
        %v1432 = vcvt.s32.f32 %v1416
        %v1433 = vcvt.s32.f32 %v1417
        %v1434 = vcvt.s32.f32 %v1418
        %v1435 = vcvt.s32.f32 %v1419
        %v1436 = vcvt.s32.f32 %v1420
        %v1437 = vcvt.s32.f32 %v1421
        %v1438 = vcvt.s32.f32 %v1422
        %v1439 = vcvt.s32.f32 %v1423
        %v1440 = vcvt.s32.f32 %v1424
        %v1441 = vcvt.s32.f32 %v1425
        %v1442 = vcvt.s32.f32 %v1426
        %v1443 = vcvt.s32.f32 %v1427
        %v1444 = vcvt.s32.f32 %v1428
        %v1445 = vcvt.s32.f32 %v1429
        %v1446 = vcvt.s32.f32 %v1430
        %v1447 = vld [vmem:[%s3] sm:$0xff]
        %v1448 = vld [vmem:[%s3 + $0x8] sm:$0xff]
        %v1449 = vld [vmem:[%s3 + $0x10] sm:$0xff]
        %v1450 = vld [vmem:[%s3 + $0x18] sm:$0x3f]
        %vm1451 = vcmask 244736
        %v1453 = vsel %vm1451, %v1431, 0
        %v1456 = vsel %vm1451, %v1432, 0
        %v1459 = vsel %vm1451, %v1433, 0
        %v1462 = vsel %vm1451, %v1434, 0
        %v1465 = vsel %vm1451, %v1435, 0
        %v1468 = vsel %vm1451, %v1436, 0
        %v1471 = vsel %vm1451, %v1437, 0
        %v1474 = vsel %vm1451, %v1438, 0
        %v1477 = vsel %vm1451, %v1439, 0
        %v1480 = vsel %vm1451, %v1440, 0
        %v1483 = vsel %vm1451, %v1441, 0
        %v1486 = vsel %vm1451, %v1442, 0
        %v1489 = vsel %vm1451, %v1443, 0
        %v1492 = vsel %vm1451, %v1444, 0
        %v1495 = vsel %vm1451, %v1445, 0
        %v1498 = vsel %vm1451, %v1446, 0
        %vm1500 = vcmask 1045504
        %v1502 = vsel %vm1500, %v1450, 0
        %1504 = vmatprep.subr.mxu0 0.0
        %1505 = vmatpush1.msra.mxu0 0.0
        %1506 = vmatprep.subr.mxu0 0.0
        %1507 = vmatpush1.msra.mxu0 0.0
        %1508 = vmatprep.subr.mxu0 0.0
        %1509 = vmatpush1.msra.mxu0 0.0
        %1510 = vmatprep.subr.mxu0 0.0
        %1511 = vmatpush1.msra.mxu0 0.0
        %1512 = vmatprep.subr.mxu0 0.0
        %1513 = vmatpush1.msra.mxu0 0.0
        %1514 = vmatprep.subr.mxu0 0.0
        %1515 = vmatpush1.msra.mxu0 0.0
        %1516 = vmatprep.subr.mxu0 0.0
        %1517 = vmatpush1.msra.mxu0 0.0
        %1518 = vmatprep.subr.mxu0 0.0
        %1519 = vmatpush1.msra.mxu0 0.0
        %1520 = vmatprep.subr.mxu0 0.0
        %1521 = vmatpush1.msra.mxu0 0.0
        %1522 = vmatprep.subr.mxu0 0.0
        %1523 = vmatpush1.msra.mxu0 0.0
        %1524 = vmatprep.subr.mxu0 0.0
        %1525 = vmatpush1.msra.mxu0 0.0
        %1526 = vmatprep.subr.mxu0 0.0
        %1527 = vmatpush1.msra.mxu0 0.0
        %1528 = vmatprep.subr.mxu0 0.0
        %1529 = vmatpush1.msra.mxu0 %v1502
        %1530 = vmatprep.subr.mxu0 0.0
        %1531 = vmatpush1.msra.mxu0 %v1449
        %1532 = vmatprep.subr.mxu0 0.0
        %1533 = vmatpush1.msra.mxu0 %v1448
        %1534 = vmatprep.subr.mxu0 0.0
        %1535 = vmatpush1.msra.mxu0 %v1447
        %1536 = vmatprep.subr.mxu0 0.0
        %1537 = vmatpush2.msra.mxu0 0.0
        %1538 = vmatprep.subr.mxu0 0.0
        %1539 = vmatpush2.msra.mxu0 0.0
        %1540 = vmatprep.subr.mxu0 0.0
        %1541 = vmatpush2.msra.mxu0 0.0
        %1542 = vmatprep.subr.mxu0 0.0
        %1543 = vmatpush2.msra.mxu0 0.0
        %1544 = vmatprep.subr.mxu0 0.0
        %1545 = vmatpush2.msra.mxu0 0.0
        %1546 = vmatprep.subr.mxu0 0.0
        %1547 = vmatpush2.msra.mxu0 0.0
        %1548 = vmatprep.subr.mxu0 0.0
        %1549 = vmatpush2.msra.mxu0 0.0
        %1550 = vmatprep.subr.mxu0 0.0
        %1551 = vmatpush2.msra.mxu0 0.0
        %1552 = vmatprep.subr.mxu0 0.0
        %1553 = vmatpush2.msra.mxu0 0.0
        %1554 = vmatprep.subr.mxu0 0.0
        %1555 = vmatpush2.msra.mxu0 0.0
        %1556 = vmatprep.subr.mxu0 0.0
        %1557 = vmatpush2.msra.mxu0 0.0
        %1558 = vmatprep.subr.mxu0 0.0
        %1559 = vmatpush2.msra.mxu0 0.0
        %1560 = vmatprep.subr.mxu0 0.0
        %1561 = vmatpush2.msra.mxu0 0.0
        %1562 = vmatprep.subr.mxu0 0.0
        %1563 = vmatpush2.msra.mxu0 0.0
        %1564 = vmatprep.subr.mxu0 0.0
        %1565 = vmatpush2.msra.mxu0 0.0
        %1566 = vmatprep.subr.mxu0 0.0
        %1567 = vmatpush2.msra.mxu0 0.0
        %1568 = vmatprep.mubr.f32.mxu0 0.0
        %1569 = vmatmul.mubr.f32.gmra.mxu0 %v1453
        %v1570 = vpop.f32.mrf.mxu0
        %v1571 = vadd.f32 0.0, %v1570
        %v1572 = vpop.f32.mrf.mxu0
        %1573 = vmatprep.mubr.f32.mxu0 0.0
        %1574 = vmatmul.mubr.f32.gmra.mxu0 %v1456
        %v1575 = vpop.f32.mrf.mxu0
        %v1576 = vadd.f32 0.0, %v1575
        %v1577 = vpop.f32.mrf.mxu0
        %1578 = vmatprep.mubr.f32.mxu0 0.0
        %1579 = vmatmul.mubr.f32.gmra.mxu0 %v1459
        %v1580 = vpop.f32.mrf.mxu0
        %v1581 = vadd.f32 0.0, %v1580
        %v1582 = vpop.f32.mrf.mxu0
        %1583 = vmatprep.mubr.f32.mxu0 0.0
        %1584 = vmatmul.mubr.f32.gmra.mxu0 %v1462
        %v1585 = vpop.f32.mrf.mxu0
        %v1586 = vadd.f32 0.0, %v1585
        %v1587 = vpop.f32.mrf.mxu0
        %1588 = vmatprep.mubr.f32.mxu0 0.0
        %1589 = vmatmul.mubr.f32.gmra.mxu0 %v1465
        %v1590 = vpop.f32.mrf.mxu0
        %v1591 = vadd.f32 0.0, %v1590
        %v1592 = vpop.f32.mrf.mxu0
        %1593 = vmatprep.mubr.f32.mxu0 0.0
        %1594 = vmatmul.mubr.f32.gmra.mxu0 %v1468
        %v1595 = vpop.f32.mrf.mxu0
        %v1596 = vadd.f32 0.0, %v1595
        %v1597 = vpop.f32.mrf.mxu0
        %1598 = vmatprep.mubr.f32.mxu0 0.0
        %1599 = vmatmul.mubr.f32.gmra.mxu0 %v1471
        %v1600 = vpop.f32.mrf.mxu0
        %v1601 = vadd.f32 0.0, %v1600
        %v1602 = vpop.f32.mrf.mxu0
        %1603 = vmatprep.mubr.f32.mxu0 0.0
        %1604 = vmatmul.mubr.f32.gmra.mxu0 %v1474
        %v1605 = vpop.f32.mrf.mxu0
        %v1606 = vadd.f32 0.0, %v1605
        %v1607 = vpop.f32.mrf.mxu0
        %1608 = vmatprep.mubr.f32.mxu0 0.0
        %1609 = vmatmul.mubr.f32.gmra.mxu0 %v1477
        %v1610 = vpop.f32.mrf.mxu0
        %v1611 = vadd.f32 0.0, %v1610
        %v1612 = vpop.f32.mrf.mxu0
        %1613 = vmatprep.mubr.f32.mxu0 0.0
        %1614 = vmatmul.mubr.f32.gmra.mxu0 %v1480
        %v1615 = vpop.f32.mrf.mxu0
        %v1616 = vadd.f32 0.0, %v1615
        %v1617 = vpop.f32.mrf.mxu0
        %1618 = vmatprep.mubr.f32.mxu0 0.0
        %1619 = vmatmul.mubr.f32.gmra.mxu0 %v1483
        %v1620 = vpop.f32.mrf.mxu0
        %v1621 = vadd.f32 0.0, %v1620
        %v1622 = vpop.f32.mrf.mxu0
        %1623 = vmatprep.mubr.f32.mxu0 0.0
        %1624 = vmatmul.mubr.f32.gmra.mxu0 %v1486
        %v1625 = vpop.f32.mrf.mxu0
        %v1626 = vadd.f32 0.0, %v1625
        %v1627 = vpop.f32.mrf.mxu0
        %1628 = vmatprep.mubr.f32.mxu0 0.0
        %1629 = vmatmul.mubr.f32.gmra.mxu0 %v1489
        %v1630 = vpop.f32.mrf.mxu0
        %v1631 = vadd.f32 0.0, %v1630
        %v1632 = vpop.f32.mrf.mxu0
        %1633 = vmatprep.mubr.f32.mxu0 0.0
        %1634 = vmatmul.mubr.f32.gmra.mxu0 %v1492
        %v1635 = vpop.f32.mrf.mxu0
        %v1636 = vadd.f32 0.0, %v1635
        %v1637 = vpop.f32.mrf.mxu0
        %1638 = vmatprep.mubr.f32.mxu0 0.0
        %1639 = vmatmul.mubr.f32.gmra.mxu0 %v1495
        %v1640 = vpop.f32.mrf.mxu0
        %v1641 = vadd.f32 0.0, %v1640
        %v1642 = vpop.f32.mrf.mxu0
        %1643 = vmatprep.mubr.f32.mxu0 0.0
        %1644 = vmatmul.mubr.f32.gmra.mxu0 %v1498
        %v1645 = vpop.f32.mrf.mxu0
        %v1646 = vadd.f32 0.0, %v1645
        %v1647 = vpop.f32.mrf.mxu0
        %1648 = vdwg.mxu0
        %1649 = vset.pattern.permute.xlu0 2
        %1650 = vperm.xlu0 %1649, %v1036
        %v1651 = vpop.permute.xlu0 %1650
        %1652 = vset.pattern.permute.xlu0 2
        %1653 = vperm.xlu0 %1652, %v1037
        %v1654 = vpop.permute.xlu0 %1653
        %1655 = vset.pattern.permute.xlu0 2
        %1656 = vperm.xlu0 %1655, %v1038
        %v1657 = vpop.permute.xlu0 %1656
        %1658 = vset.pattern.permute.xlu0 2
        %1659 = vperm.xlu0 %1658, %v1039
        %v1660 = vpop.permute.xlu0 %1659
        %1661 = vset.pattern.permute.xlu0 2
        %1662 = vperm.xlu0 %1661, %v1040
        %v1663 = vpop.permute.xlu0 %1662
        %1664 = vset.pattern.permute.xlu0 2
        %1665 = vperm.xlu0 %1664, %v1041
        %v1666 = vpop.permute.xlu0 %1665
        %1667 = vset.pattern.permute.xlu0 2
        %1668 = vperm.xlu0 %1667, %v1042
        %v1669 = vpop.permute.xlu0 %1668
        %1670 = vset.pattern.permute.xlu0 2
        %1671 = vperm.xlu0 %1670, %v1043
        %v1672 = vpop.permute.xlu0 %1671
        %1673 = vset.pattern.permute.xlu0 2
        %1674 = vperm.xlu0 %1673, %v1044
        %v1675 = vpop.permute.xlu0 %1674
        %1676 = vset.pattern.permute.xlu0 2
        %1677 = vperm.xlu0 %1676, %v1045
        %v1678 = vpop.permute.xlu0 %1677
        %1679 = vset.pattern.permute.xlu0 2
        %1680 = vperm.xlu0 %1679, %v1046
        %v1681 = vpop.permute.xlu0 %1680
        %1682 = vset.pattern.permute.xlu0 2
        %1683 = vperm.xlu0 %1682, %v1047
        %v1684 = vpop.permute.xlu0 %1683
        %1685 = vset.pattern.permute.xlu0 2
        %1686 = vperm.xlu0 %1685, %v1048
        %v1687 = vpop.permute.xlu0 %1686
        %1688 = vset.pattern.permute.xlu0 2
        %1689 = vperm.xlu0 %1688, %v1049
        %v1690 = vpop.permute.xlu0 %1689
        %1691 = vset.pattern.permute.xlu0 2
        %1692 = vperm.xlu0 %1691, %v1050
        %v1693 = vpop.permute.xlu0 %1692
        %1694 = vset.pattern.permute.xlu0 2
        %1695 = vperm.xlu0 %1694, %v1051
        %v1696 = vpop.permute.xlu0 %1695
        %vm1697 = vcmp.eq.s32.totalorder %v1053, %v1651
        %vm1698 = vcmp.eq.s32.totalorder %v1053, %v1654
        %vm1699 = vcmp.eq.s32.totalorder %v1053, %v1657
        %vm1700 = vcmp.eq.s32.totalorder %v1053, %v1660
        %vm1701 = vcmp.eq.s32.totalorder %v1053, %v1663
        %vm1702 = vcmp.eq.s32.totalorder %v1053, %v1666
        %vm1703 = vcmp.eq.s32.totalorder %v1053, %v1669
        %vm1704 = vcmp.eq.s32.totalorder %v1053, %v1672
        %vm1705 = vcmp.eq.s32.totalorder %v1053, %v1675
        %vm1706 = vcmp.eq.s32.totalorder %v1053, %v1678
        %vm1707 = vcmp.eq.s32.totalorder %v1053, %v1681
        %vm1708 = vcmp.eq.s32.totalorder %v1053, %v1684
        %vm1709 = vcmp.eq.s32.totalorder %v1053, %v1687
        %vm1710 = vcmp.eq.s32.totalorder %v1053, %v1690
        %vm1711 = vcmp.eq.s32.totalorder %v1053, %v1693
        %vm1712 = vcmp.eq.s32.totalorder %v1053, %v1696
        %v1713 = vsel %vm1697, 1, 0
        %v1714 = vsel %vm1698, 1, 0
        %v1715 = vsel %vm1699, 1, 0
        %v1716 = vsel %vm1700, 1, 0
        %v1717 = vsel %vm1701, 1, 0
        %v1718 = vsel %vm1702, 1, 0
        %v1719 = vsel %vm1703, 1, 0
        %v1720 = vsel %vm1704, 1, 0
        %v1721 = vsel %vm1705, 1, 0
        %v1722 = vsel %vm1706, 1, 0
        %v1723 = vsel %vm1707, 1, 0
        %v1724 = vsel %vm1708, 1, 0
        %v1725 = vsel %vm1709, 1, 0
        %v1726 = vsel %vm1710, 1, 0
        %v1727 = vsel %vm1711, 1, 0
        %v1728 = vsel %vm1712, 1, 0
        %v1729 = vcvt.s32.f32 %v1713
        %v1730 = vcvt.s32.f32 %v1714
        %v1731 = vcvt.s32.f32 %v1715
        %v1732 = vcvt.s32.f32 %v1716
        %v1733 = vcvt.s32.f32 %v1717
        %v1734 = vcvt.s32.f32 %v1718
        %v1735 = vcvt.s32.f32 %v1719
        %v1736 = vcvt.s32.f32 %v1720
        %v1737 = vcvt.s32.f32 %v1721
        %v1738 = vcvt.s32.f32 %v1722
        %v1739 = vcvt.s32.f32 %v1723
        %v1740 = vcvt.s32.f32 %v1724
        %v1741 = vcvt.s32.f32 %v1725
        %v1742 = vcvt.s32.f32 %v1726
        %v1743 = vcvt.s32.f32 %v1727
        %v1744 = vcvt.s32.f32 %v1728
        %v1745 = vld [vmem:[%s4] sm:$0xff]
        %v1746 = vld [vmem:[%s4 + $0x8] sm:$0xff]
        %v1747 = vld [vmem:[%s4 + $0x10] sm:$0xff]
        %v1748 = vld [vmem:[%s4 + $0x18] sm:$0xff]
        %v1749 = vld [vmem:[%s4 + $0x20] sm:$0xff]
        %vm1750 = vcmask 326656
        %v1752 = vsel %vm1750, %v1729, 0
        %v1755 = vsel %vm1750, %v1730, 0
        %v1758 = vsel %vm1750, %v1731, 0
        %v1761 = vsel %vm1750, %v1732, 0
        %v1764 = vsel %vm1750, %v1733, 0
        %v1767 = vsel %vm1750, %v1734, 0
        %v1770 = vsel %vm1750, %v1735, 0
        %v1773 = vsel %vm1750, %v1736, 0
        %v1776 = vsel %vm1750, %v1737, 0
        %v1779 = vsel %vm1750, %v1738, 0
        %v1782 = vsel %vm1750, %v1739, 0
        %v1785 = vsel %vm1750, %v1740, 0
        %v1788 = vsel %vm1750, %v1741, 0
        %v1791 = vsel %vm1750, %v1742, 0
        %v1794 = vsel %vm1750, %v1743, 0
        %v1797 = vsel %vm1750, %v1744, 0
        %1799 = vmatprep.subr.mxu0 0.0
        %1800 = vmatpush1.msra.mxu0 0.0
        %1801 = vmatprep.subr.mxu0 0.0
        %1802 = vmatpush1.msra.mxu0 0.0
        %1803 = vmatprep.subr.mxu0 0.0
        %1804 = vmatpush1.msra.mxu0 0.0
        %1805 = vmatprep.subr.mxu0 0.0
        %1806 = vmatpush1.msra.mxu0 0.0
        %1807 = vmatprep.subr.mxu0 0.0
        %1808 = vmatpush1.msra.mxu0 0.0
        %1809 = vmatprep.subr.mxu0 0.0
        %1810 = vmatpush1.msra.mxu0 0.0
        %1811 = vmatprep.subr.mxu0 0.0
        %1812 = vmatpush1.msra.mxu0 0.0
        %1813 = vmatprep.subr.mxu0 0.0
        %1814 = vmatpush1.msra.mxu0 0.0
        %1815 = vmatprep.subr.mxu0 0.0
        %1816 = vmatpush1.msra.mxu0 0.0
        %1817 = vmatprep.subr.mxu0 0.0
        %1818 = vmatpush1.msra.mxu0 0.0
        %1819 = vmatprep.subr.mxu0 0.0
        %1820 = vmatpush1.msra.mxu0 0.0
        %1821 = vmatprep.subr.mxu0 0.0
        %1822 = vmatpush1.msra.mxu0 %v1749
        %1823 = vmatprep.subr.mxu0 0.0
        %1824 = vmatpush1.msra.mxu0 %v1748
        %1825 = vmatprep.subr.mxu0 0.0
        %1826 = vmatpush1.msra.mxu0 %v1747
        %1827 = vmatprep.subr.mxu0 0.0
        %1828 = vmatpush1.msra.mxu0 %v1746
        %1829 = vmatprep.subr.mxu0 0.0
        %1830 = vmatpush1.msra.mxu0 %v1745
        %1831 = vmatprep.subr.mxu0 0.0
        %1832 = vmatpush2.msra.mxu0 0.0
        %1833 = vmatprep.subr.mxu0 0.0
        %1834 = vmatpush2.msra.mxu0 0.0
        %1835 = vmatprep.subr.mxu0 0.0
        %1836 = vmatpush2.msra.mxu0 0.0
        %1837 = vmatprep.subr.mxu0 0.0
        %1838 = vmatpush2.msra.mxu0 0.0
        %1839 = vmatprep.subr.mxu0 0.0
        %1840 = vmatpush2.msra.mxu0 0.0
        %1841 = vmatprep.subr.mxu0 0.0
        %1842 = vmatpush2.msra.mxu0 0.0
        %1843 = vmatprep.subr.mxu0 0.0
        %1844 = vmatpush2.msra.mxu0 0.0
        %1845 = vmatprep.subr.mxu0 0.0
        %1846 = vmatpush2.msra.mxu0 0.0
        %1847 = vmatprep.subr.mxu0 0.0
        %1848 = vmatpush2.msra.mxu0 0.0
        %1849 = vmatprep.subr.mxu0 0.0
        %1850 = vmatpush2.msra.mxu0 0.0
        %1851 = vmatprep.subr.mxu0 0.0
        %1852 = vmatpush2.msra.mxu0 0.0
        %1853 = vmatprep.subr.mxu0 0.0
        %1854 = vmatpush2.msra.mxu0 0.0
        %1855 = vmatprep.subr.mxu0 0.0
        %1856 = vmatpush2.msra.mxu0 0.0
        %1857 = vmatprep.subr.mxu0 0.0
        %1858 = vmatpush2.msra.mxu0 0.0
        %1859 = vmatprep.subr.mxu0 0.0
        %1860 = vmatpush2.msra.mxu0 0.0
        %1861 = vmatprep.subr.mxu0 0.0
        %1862 = vmatpush2.msra.mxu0 0.0
        %1863 = vmatprep.mubr.f32.mxu0 0.0
        %1864 = vmatmul.mubr.f32.gmra.mxu0 %v1752
        %v1865 = vpop.f32.mrf.mxu0
        %v1866 = vadd.f32 0.0, %v1865
        %v1867 = vpop.f32.mrf.mxu0
        %1868 = vmatprep.mubr.f32.mxu0 0.0
        %1869 = vmatmul.mubr.f32.gmra.mxu0 %v1755
        %v1870 = vpop.f32.mrf.mxu0
        %v1871 = vadd.f32 0.0, %v1870
        %v1872 = vpop.f32.mrf.mxu0
        %1873 = vmatprep.mubr.f32.mxu0 0.0
        %1874 = vmatmul.mubr.f32.gmra.mxu0 %v1758
        %v1875 = vpop.f32.mrf.mxu0
        %v1876 = vadd.f32 0.0, %v1875
        %v1877 = vpop.f32.mrf.mxu0
        %1878 = vmatprep.mubr.f32.mxu0 0.0
        %1879 = vmatmul.mubr.f32.gmra.mxu0 %v1761
        %v1880 = vpop.f32.mrf.mxu0
        %v1881 = vadd.f32 0.0, %v1880
        %v1882 = vpop.f32.mrf.mxu0
        %1883 = vmatprep.mubr.f32.mxu0 0.0
        %1884 = vmatmul.mubr.f32.gmra.mxu0 %v1764
        %v1885 = vpop.f32.mrf.mxu0
        %v1886 = vadd.f32 0.0, %v1885
        %v1887 = vpop.f32.mrf.mxu0
        %1888 = vmatprep.mubr.f32.mxu0 0.0
        %1889 = vmatmul.mubr.f32.gmra.mxu0 %v1767
        %v1890 = vpop.f32.mrf.mxu0
        %v1891 = vadd.f32 0.0, %v1890
        %v1892 = vpop.f32.mrf.mxu0
        %1893 = vmatprep.mubr.f32.mxu0 0.0
        %1894 = vmatmul.mubr.f32.gmra.mxu0 %v1770
        %v1895 = vpop.f32.mrf.mxu0
        %v1896 = vadd.f32 0.0, %v1895
        %v1897 = vpop.f32.mrf.mxu0
        %1898 = vmatprep.mubr.f32.mxu0 0.0
        %1899 = vmatmul.mubr.f32.gmra.mxu0 %v1773
        %v1900 = vpop.f32.mrf.mxu0
        %v1901 = vadd.f32 0.0, %v1900
        %v1902 = vpop.f32.mrf.mxu0
        %1903 = vmatprep.mubr.f32.mxu0 0.0
        %1904 = vmatmul.mubr.f32.gmra.mxu0 %v1776
        %v1905 = vpop.f32.mrf.mxu0
        %v1906 = vadd.f32 0.0, %v1905
        %v1907 = vpop.f32.mrf.mxu0
        %1908 = vmatprep.mubr.f32.mxu0 0.0
        %1909 = vmatmul.mubr.f32.gmra.mxu0 %v1779
        %v1910 = vpop.f32.mrf.mxu0
        %v1911 = vadd.f32 0.0, %v1910
        %v1912 = vpop.f32.mrf.mxu0
        %1913 = vmatprep.mubr.f32.mxu0 0.0
        %1914 = vmatmul.mubr.f32.gmra.mxu0 %v1782
        %v1915 = vpop.f32.mrf.mxu0
        %v1916 = vadd.f32 0.0, %v1915
        %v1917 = vpop.f32.mrf.mxu0
        %1918 = vmatprep.mubr.f32.mxu0 0.0
        %1919 = vmatmul.mubr.f32.gmra.mxu0 %v1785
        %v1920 = vpop.f32.mrf.mxu0
        %v1921 = vadd.f32 0.0, %v1920
        %v1922 = vpop.f32.mrf.mxu0
        %1923 = vmatprep.mubr.f32.mxu0 0.0
        %1924 = vmatmul.mubr.f32.gmra.mxu0 %v1788
        %v1925 = vpop.f32.mrf.mxu0
        %v1926 = vadd.f32 0.0, %v1925
        %v1927 = vpop.f32.mrf.mxu0
        %1928 = vmatprep.mubr.f32.mxu0 0.0
        %1929 = vmatmul.mubr.f32.gmra.mxu0 %v1791
        %v1930 = vpop.f32.mrf.mxu0
        %v1931 = vadd.f32 0.0, %v1930
        %v1932 = vpop.f32.mrf.mxu0
        %1933 = vmatprep.mubr.f32.mxu0 0.0
        %1934 = vmatmul.mubr.f32.gmra.mxu0 %v1794
        %v1935 = vpop.f32.mrf.mxu0
        %v1936 = vadd.f32 0.0, %v1935
        %v1937 = vpop.f32.mrf.mxu0
        %1938 = vmatprep.mubr.f32.mxu0 0.0
        %1939 = vmatmul.mubr.f32.gmra.mxu0 %v1797
        %v1940 = vpop.f32.mrf.mxu0
        %v1941 = vadd.f32 0.0, %v1940
        %v1942 = vpop.f32.mrf.mxu0
        %1943 = vdwg.mxu0
        %1944 = vset.pattern.permute.xlu0 3
        %1945 = vperm.xlu0 %1944, %v1036
        %v1946 = vpop.permute.xlu0 %1945
        %1947 = vset.pattern.permute.xlu0 3
        %1948 = vperm.xlu0 %1947, %v1037
        %v1949 = vpop.permute.xlu0 %1948
        %1950 = vset.pattern.permute.xlu0 3
        %1951 = vperm.xlu0 %1950, %v1038
        %v1952 = vpop.permute.xlu0 %1951
        %1953 = vset.pattern.permute.xlu0 3
        %1954 = vperm.xlu0 %1953, %v1039
        %v1955 = vpop.permute.xlu0 %1954
        %1956 = vset.pattern.permute.xlu0 3
        %1957 = vperm.xlu0 %1956, %v1040
        %v1958 = vpop.permute.xlu0 %1957
        %1959 = vset.pattern.permute.xlu0 3
        %1960 = vperm.xlu0 %1959, %v1041
        %v1961 = vpop.permute.xlu0 %1960
        %1962 = vset.pattern.permute.xlu0 3
        %1963 = vperm.xlu0 %1962, %v1042
        %v1964 = vpop.permute.xlu0 %1963
        %1965 = vset.pattern.permute.xlu0 3
        %1966 = vperm.xlu0 %1965, %v1043
        %v1967 = vpop.permute.xlu0 %1966
        %1968 = vset.pattern.permute.xlu0 3
        %1969 = vperm.xlu0 %1968, %v1044
        %v1970 = vpop.permute.xlu0 %1969
        %1971 = vset.pattern.permute.xlu0 3
        %1972 = vperm.xlu0 %1971, %v1045
        %v1973 = vpop.permute.xlu0 %1972
        %1974 = vset.pattern.permute.xlu0 3
        %1975 = vperm.xlu0 %1974, %v1046
        %v1976 = vpop.permute.xlu0 %1975
        %1977 = vset.pattern.permute.xlu0 3
        %1978 = vperm.xlu0 %1977, %v1047
        %v1979 = vpop.permute.xlu0 %1978
        %1980 = vset.pattern.permute.xlu0 3
        %1981 = vperm.xlu0 %1980, %v1048
        %v1982 = vpop.permute.xlu0 %1981
        %1983 = vset.pattern.permute.xlu0 3
        %1984 = vperm.xlu0 %1983, %v1049
        %v1985 = vpop.permute.xlu0 %1984
        %1986 = vset.pattern.permute.xlu0 3
        %1987 = vperm.xlu0 %1986, %v1050
        %v1988 = vpop.permute.xlu0 %1987
        %1989 = vset.pattern.permute.xlu0 3
        %1990 = vperm.xlu0 %1989, %v1051
        %v1991 = vpop.permute.xlu0 %1990
        %vm1992 = vcmp.eq.s32.totalorder %v1053, %v1946
        %vm1993 = vcmp.eq.s32.totalorder %v1053, %v1949
        %vm1994 = vcmp.eq.s32.totalorder %v1053, %v1952
        %vm1995 = vcmp.eq.s32.totalorder %v1053, %v1955
        %vm1996 = vcmp.eq.s32.totalorder %v1053, %v1958
        %vm1997 = vcmp.eq.s32.totalorder %v1053, %v1961
        %vm1998 = vcmp.eq.s32.totalorder %v1053, %v1964
        %vm1999 = vcmp.eq.s32.totalorder %v1053, %v1967
        %vm2000 = vcmp.eq.s32.totalorder %v1053, %v1970
        %vm2001 = vcmp.eq.s32.totalorder %v1053, %v1973
        %vm2002 = vcmp.eq.s32.totalorder %v1053, %v1976
        %vm2003 = vcmp.eq.s32.totalorder %v1053, %v1979
        %vm2004 = vcmp.eq.s32.totalorder %v1053, %v1982
        %vm2005 = vcmp.eq.s32.totalorder %v1053, %v1985
        %vm2006 = vcmp.eq.s32.totalorder %v1053, %v1988
        %vm2007 = vcmp.eq.s32.totalorder %v1053, %v1991
        %v2008 = vsel %vm1992, 1, 0
        %v2009 = vsel %vm1993, 1, 0
        %v2010 = vsel %vm1994, 1, 0
        %v2011 = vsel %vm1995, 1, 0
        %v2012 = vsel %vm1996, 1, 0
        %v2013 = vsel %vm1997, 1, 0
        %v2014 = vsel %vm1998, 1, 0
        %v2015 = vsel %vm1999, 1, 0
        %v2016 = vsel %vm2000, 1, 0
        %v2017 = vsel %vm2001, 1, 0
        %v2018 = vsel %vm2002, 1, 0
        %v2019 = vsel %vm2003, 1, 0
        %v2020 = vsel %vm2004, 1, 0
        %v2021 = vsel %vm2005, 1, 0
        %v2022 = vsel %vm2006, 1, 0
        %v2023 = vsel %vm2007, 1, 0
        %v2024 = vcvt.s32.f32 %v2008
        %v2025 = vcvt.s32.f32 %v2009
        %v2026 = vcvt.s32.f32 %v2010
        %v2027 = vcvt.s32.f32 %v2011
        %v2028 = vcvt.s32.f32 %v2012
        %v2029 = vcvt.s32.f32 %v2013
        %v2030 = vcvt.s32.f32 %v2014
        %v2031 = vcvt.s32.f32 %v2015
        %v2032 = vcvt.s32.f32 %v2016
        %v2033 = vcvt.s32.f32 %v2017
        %v2034 = vcvt.s32.f32 %v2018
        %v2035 = vcvt.s32.f32 %v2019
        %v2036 = vcvt.s32.f32 %v2020
        %v2037 = vcvt.s32.f32 %v2021
        %v2038 = vcvt.s32.f32 %v2022
        %v2039 = vcvt.s32.f32 %v2023
        %v2040 = vld [vmem:[%s5] sm:$0xff]
        %v2041 = vld [vmem:[%s5 + $0x8] sm:$0xff]
        %v2042 = vld [vmem:[%s5 + $0x10] sm:$0xff]
        %v2043 = vld [vmem:[%s5 + $0x18] sm:$0xff]
        %v2044 = vld [vmem:[%s5 + $0x20] sm:$0xff]
        %v2045 = vld [vmem:[%s5 + $0x28] sm:$0xff]
        %v2046 = vld [vmem:[%s5 + $0x30] sm:$0x3]
        %vm2047 = vcmask 408576
        %v2049 = vsel %vm2047, %v2024, 0
        %v2052 = vsel %vm2047, %v2025, 0
        %v2055 = vsel %vm2047, %v2026, 0
        %v2058 = vsel %vm2047, %v2027, 0
        %v2061 = vsel %vm2047, %v2028, 0
        %v2064 = vsel %vm2047, %v2029, 0
        %v2067 = vsel %vm2047, %v2030, 0
        %v2070 = vsel %vm2047, %v2031, 0
        %v2073 = vsel %vm2047, %v2032, 0
        %v2076 = vsel %vm2047, %v2033, 0
        %v2079 = vsel %vm2047, %v2034, 0
        %v2082 = vsel %vm2047, %v2035, 0
        %v2085 = vsel %vm2047, %v2036, 0
        %v2088 = vsel %vm2047, %v2037, 0
        %v2091 = vsel %vm2047, %v2038, 0
        %v2094 = vsel %vm2047, %v2039, 0
        %vm2096 = vcmask 1041408
        %v2098 = vsel %vm2096, %v2046, 0
        %2100 = vmatprep.subr.mxu0 0.0
        %2101 = vmatpush1.msra.mxu0 0.0
        %2102 = vmatprep.subr.mxu0 0.0
        %2103 = vmatpush1.msra.mxu0 0.0
        %2104 = vmatprep.subr.mxu0 0.0
        %2105 = vmatpush1.msra.mxu0 0.0
        %2106 = vmatprep.subr.mxu0 0.0
        %2107 = vmatpush1.msra.mxu0 0.0
        %2108 = vmatprep.subr.mxu0 0.0
        %2109 = vmatpush1.msra.mxu0 0.0
        %2110 = vmatprep.subr.mxu0 0.0
        %2111 = vmatpush1.msra.mxu0 0.0
        %2112 = vmatprep.subr.mxu0 0.0
        %2113 = vmatpush1.msra.mxu0 0.0
        %2114 = vmatprep.subr.mxu0 0.0
        %2115 = vmatpush1.msra.mxu0 0.0
        %2116 = vmatprep.subr.mxu0 0.0
        %2117 = vmatpush1.msra.mxu0 0.0
        %2118 = vmatprep.subr.mxu0 0.0
        %2119 = vmatpush1.msra.mxu0 %v2098
        %2120 = vmatprep.subr.mxu0 0.0
        %2121 = vmatpush1.msra.mxu0 %v2045
        %2122 = vmatprep.subr.mxu0 0.0
        %2123 = vmatpush1.msra.mxu0 %v2044
        %2124 = vmatprep.subr.mxu0 0.0
        %2125 = vmatpush1.msra.mxu0 %v2043
        %2126 = vmatprep.subr.mxu0 0.0
        %2127 = vmatpush1.msra.mxu0 %v2042
        %2128 = vmatprep.subr.mxu0 0.0
        %2129 = vmatpush1.msra.mxu0 %v2041
        %2130 = vmatprep.subr.mxu0 0.0
        %2131 = vmatpush1.msra.mxu0 %v2040
        %2132 = vmatprep.subr.mxu0 0.0
        %2133 = vmatpush2.msra.mxu0 0.0
        %2134 = vmatprep.subr.mxu0 0.0
        %2135 = vmatpush2.msra.mxu0 0.0
        %2136 = vmatprep.subr.mxu0 0.0
        %2137 = vmatpush2.msra.mxu0 0.0
        %2138 = vmatprep.subr.mxu0 0.0
        %2139 = vmatpush2.msra.mxu0 0.0
        %2140 = vmatprep.subr.mxu0 0.0
        %2141 = vmatpush2.msra.mxu0 0.0
        %2142 = vmatprep.subr.mxu0 0.0
        %2143 = vmatpush2.msra.mxu0 0.0
        %2144 = vmatprep.subr.mxu0 0.0
        %2145 = vmatpush2.msra.mxu0 0.0
        %2146 = vmatprep.subr.mxu0 0.0
        %2147 = vmatpush2.msra.mxu0 0.0
        %2148 = vmatprep.subr.mxu0 0.0
        %2149 = vmatpush2.msra.mxu0 0.0
        %2150 = vmatprep.subr.mxu0 0.0
        %2151 = vmatpush2.msra.mxu0 0.0
        %2152 = vmatprep.subr.mxu0 0.0
        %2153 = vmatpush2.msra.mxu0 0.0
        %2154 = vmatprep.subr.mxu0 0.0
        %2155 = vmatpush2.msra.mxu0 0.0
        %2156 = vmatprep.subr.mxu0 0.0
        %2157 = vmatpush2.msra.mxu0 0.0
        %2158 = vmatprep.subr.mxu0 0.0
        %2159 = vmatpush2.msra.mxu0 0.0
        %2160 = vmatprep.subr.mxu0 0.0
        %2161 = vmatpush2.msra.mxu0 0.0
        %2162 = vmatprep.subr.mxu0 0.0
        %2163 = vmatpush2.msra.mxu0 0.0
        %2164 = vmatprep.mubr.f32.mxu0 0.0
        %2165 = vmatmul.mubr.f32.gmra.mxu0 %v2049
        %v2166 = vpop.f32.mrf.mxu0
        %v2167 = vadd.f32 0.0, %v2166
        %v2168 = vpop.f32.mrf.mxu0
        %2169 = vmatprep.mubr.f32.mxu0 0.0
        %2170 = vmatmul.mubr.f32.gmra.mxu0 %v2052
        %v2171 = vpop.f32.mrf.mxu0
        %v2172 = vadd.f32 0.0, %v2171
        %v2173 = vpop.f32.mrf.mxu0
        %2174 = vmatprep.mubr.f32.mxu0 0.0
        %2175 = vmatmul.mubr.f32.gmra.mxu0 %v2055
        %v2176 = vpop.f32.mrf.mxu0
        %v2177 = vadd.f32 0.0, %v2176
        %v2178 = vpop.f32.mrf.mxu0
        %2179 = vmatprep.mubr.f32.mxu0 0.0
        %2180 = vmatmul.mubr.f32.gmra.mxu0 %v2058
        %v2181 = vpop.f32.mrf.mxu0
        %v2182 = vadd.f32 0.0, %v2181
        %v2183 = vpop.f32.mrf.mxu0
        %2184 = vmatprep.mubr.f32.mxu0 0.0
        %2185 = vmatmul.mubr.f32.gmra.mxu0 %v2061
        %v2186 = vpop.f32.mrf.mxu0
        %v2187 = vadd.f32 0.0, %v2186
        %v2188 = vpop.f32.mrf.mxu0
        %2189 = vmatprep.mubr.f32.mxu0 0.0
        %2190 = vmatmul.mubr.f32.gmra.mxu0 %v2064
        %v2191 = vpop.f32.mrf.mxu0
        %v2192 = vadd.f32 0.0, %v2191
        %v2193 = vpop.f32.mrf.mxu0
        %2194 = vmatprep.mubr.f32.mxu0 0.0
        %2195 = vmatmul.mubr.f32.gmra.mxu0 %v2067
        %v2196 = vpop.f32.mrf.mxu0
        %v2197 = vadd.f32 0.0, %v2196
        %v2198 = vpop.f32.mrf.mxu0
        %2199 = vmatprep.mubr.f32.mxu0 0.0
        %2200 = vmatmul.mubr.f32.gmra.mxu0 %v2070
        %v2201 = vpop.f32.mrf.mxu0
        %v2202 = vadd.f32 0.0, %v2201
        %v2203 = vpop.f32.mrf.mxu0
        %2204 = vmatprep.mubr.f32.mxu0 0.0
        %2205 = vmatmul.mubr.f32.gmra.mxu0 %v2073
        %v2206 = vpop.f32.mrf.mxu0
        %v2207 = vadd.f32 0.0, %v2206
        %v2208 = vpop.f32.mrf.mxu0
        %2209 = vmatprep.mubr.f32.mxu0 0.0
        %2210 = vmatmul.mubr.f32.gmra.mxu0 %v2076
        %v2211 = vpop.f32.mrf.mxu0
        %v2212 = vadd.f32 0.0, %v2211
        %v2213 = vpop.f32.mrf.mxu0
        %2214 = vmatprep.mubr.f32.mxu0 0.0
        %2215 = vmatmul.mubr.f32.gmra.mxu0 %v2079
        %v2216 = vpop.f32.mrf.mxu0
        %v2217 = vadd.f32 0.0, %v2216
        %v2218 = vpop.f32.mrf.mxu0
        %2219 = vmatprep.mubr.f32.mxu0 0.0
        %2220 = vmatmul.mubr.f32.gmra.mxu0 %v2082
        %v2221 = vpop.f32.mrf.mxu0
        %v2222 = vadd.f32 0.0, %v2221
        %v2223 = vpop.f32.mrf.mxu0
        %2224 = vmatprep.mubr.f32.mxu0 0.0
        %2225 = vmatmul.mubr.f32.gmra.mxu0 %v2085
        %v2226 = vpop.f32.mrf.mxu0
        %v2227 = vadd.f32 0.0, %v2226
        %v2228 = vpop.f32.mrf.mxu0
        %2229 = vmatprep.mubr.f32.mxu0 0.0
        %2230 = vmatmul.mubr.f32.gmra.mxu0 %v2088
        %v2231 = vpop.f32.mrf.mxu0
        %v2232 = vadd.f32 0.0, %v2231
        %v2233 = vpop.f32.mrf.mxu0
        %2234 = vmatprep.mubr.f32.mxu0 0.0
        %2235 = vmatmul.mubr.f32.gmra.mxu0 %v2091
        %v2236 = vpop.f32.mrf.mxu0
        %v2237 = vadd.f32 0.0, %v2236
        %v2238 = vpop.f32.mrf.mxu0
        %2239 = vmatprep.mubr.f32.mxu0 0.0
        %2240 = vmatmul.mubr.f32.gmra.mxu0 %v2094
        %v2241 = vpop.f32.mrf.mxu0
        %v2242 = vadd.f32 0.0, %v2241
        %v2243 = vpop.f32.mrf.mxu0
        %2244 = vdwg.mxu0
        %v2245 = vld [vmem:[%s10] sm:$0xff]
        %v2246 = vld [vmem:[%s10 + $0x8] sm:$0xff]
        %v2247 = vld [vmem:[%s10 + $0x10] sm:$0xff]
        %v2248 = vld [vmem:[%s10 + $0x18] sm:$0xff]
        %v2249 = vld [vmem:[%s12] sm:$0x1]
        %v2251 = vlaneseq
        %v2252 = vshrl.u32 %v2251, 7
        %v2253 = vsub.s32 0, %v2252
        %v2254 = vrot.slane %v2249, %v2253
        %vm2256 = vcmask 261120
        %v2258 = vsel %vm2256, %v1020, 0
        %v2261 = vsel %vm2256, %v1021, 0
        %v2264 = vsel %vm2256, %v1022, 0
        %v2267 = vsel %vm2256, %v1023, 0
        %v2270 = vsel %vm2256, %v1024, 0
        %v2273 = vsel %vm2256, %v1025, 0
        %v2276 = vsel %vm2256, %v1026, 0
        %v2279 = vsel %vm2256, %v1027, 0
        %v2282 = vsel %vm2256, %v1028, 0
        %v2285 = vsel %vm2256, %v1029, 0
        %v2288 = vsel %vm2256, %v1030, 0
        %v2291 = vsel %vm2256, %v1031, 0
        %v2294 = vsel %vm2256, %v1032, 0
        %v2297 = vsel %vm2256, %v1033, 0
        %v2300 = vsel %vm2256, %v1034, 0
        %v2303 = vsel %vm2256, %v1035, 0
        %2305 = vmatprep.subr.mxu0 0.0
        %2306 = vmatpush1.msra.mxu0 0.0
        %2307 = vmatprep.subr.mxu0 0.0
        %2308 = vmatpush1.msra.mxu0 0.0
        %2309 = vmatprep.subr.mxu0 0.0
        %2310 = vmatpush1.msra.mxu0 0.0
        %2311 = vmatprep.subr.mxu0 0.0
        %2312 = vmatpush1.msra.mxu0 0.0
        %2313 = vmatprep.subr.mxu0 0.0
        %2314 = vmatpush1.msra.mxu0 0.0
        %2315 = vmatprep.subr.mxu0 0.0
        %2316 = vmatpush1.msra.mxu0 0.0
        %2317 = vmatprep.subr.mxu0 0.0
        %2318 = vmatpush1.msra.mxu0 0.0
        %2319 = vmatprep.subr.mxu0 0.0
        %2320 = vmatpush1.msra.mxu0 0.0
        %2321 = vmatprep.subr.mxu0 0.0
        %2322 = vmatpush1.msra.mxu0 0.0
        %2323 = vmatprep.subr.mxu0 0.0
        %2324 = vmatpush1.msra.mxu0 0.0
        %2325 = vmatprep.subr.mxu0 0.0
        %2326 = vmatpush1.msra.mxu0 0.0
        %2327 = vmatprep.subr.mxu0 0.0
        %2328 = vmatpush1.msra.mxu0 0.0
        %2329 = vmatprep.subr.mxu0 0.0
        %2330 = vmatpush1.msra.mxu0 %v2248
        %2331 = vmatprep.subr.mxu0 0.0
        %2332 = vmatpush1.msra.mxu0 %v2247
        %2333 = vmatprep.subr.mxu0 0.0
        %2334 = vmatpush1.msra.mxu0 %v2246
        %2335 = vmatprep.subr.mxu0 0.0
        %2336 = vmatpush1.msra.mxu0 %v2245
        %2337 = vmatprep.subr.mxu0 0.0
        %2338 = vmatpush2.msra.mxu0 0.0
        %2339 = vmatprep.subr.mxu0 0.0
        %2340 = vmatpush2.msra.mxu0 0.0
        %2341 = vmatprep.subr.mxu0 0.0
        %2342 = vmatpush2.msra.mxu0 0.0
        %2343 = vmatprep.subr.mxu0 0.0
        %2344 = vmatpush2.msra.mxu0 0.0
        %2345 = vmatprep.subr.mxu0 0.0
        %2346 = vmatpush2.msra.mxu0 0.0
        %2347 = vmatprep.subr.mxu0 0.0
        %2348 = vmatpush2.msra.mxu0 0.0
        %2349 = vmatprep.subr.mxu0 0.0
        %2350 = vmatpush2.msra.mxu0 0.0
        %2351 = vmatprep.subr.mxu0 0.0
        %2352 = vmatpush2.msra.mxu0 0.0
        %2353 = vmatprep.subr.mxu0 0.0
        %2354 = vmatpush2.msra.mxu0 0.0
        %2355 = vmatprep.subr.mxu0 0.0
        %2356 = vmatpush2.msra.mxu0 0.0
        %2357 = vmatprep.subr.mxu0 0.0
        %2358 = vmatpush2.msra.mxu0 0.0
        %2359 = vmatprep.subr.mxu0 0.0
        %2360 = vmatpush2.msra.mxu0 0.0
        %2361 = vmatprep.subr.mxu0 0.0
        %2362 = vmatpush2.msra.mxu0 0.0
        %2363 = vmatprep.subr.mxu0 0.0
        %2364 = vmatpush2.msra.mxu0 0.0
        %2365 = vmatprep.subr.mxu0 0.0
        %2366 = vmatpush2.msra.mxu0 0.0
        %2367 = vmatprep.subr.mxu0 0.0
        %2368 = vmatpush2.msra.mxu0 0.0
        %2369 = vmatprep.mubr.f32.mxu0 0.0
        %2370 = vmatmul.mubr.f32.gmra.mxu0 %v2258
        %v2371 = vpop.f32.mrf.mxu0
        %v2372 = vadd.f32 %v2254, %v2371
        %v2373 = vpop.f32.mrf.mxu0
        %2374 = vmatprep.mubr.f32.mxu0 0.0
        %2375 = vmatmul.mubr.f32.gmra.mxu0 %v2261
        %v2376 = vpop.f32.mrf.mxu0
        %v2377 = vadd.f32 %v2254, %v2376
        %v2378 = vpop.f32.mrf.mxu0
        %2379 = vmatprep.mubr.f32.mxu0 0.0
        %2380 = vmatmul.mubr.f32.gmra.mxu0 %v2264
        %v2381 = vpop.f32.mrf.mxu0
        %v2382 = vadd.f32 %v2254, %v2381
        %v2383 = vpop.f32.mrf.mxu0
        %2384 = vmatprep.mubr.f32.mxu0 0.0
        %2385 = vmatmul.mubr.f32.gmra.mxu0 %v2267
        %v2386 = vpop.f32.mrf.mxu0
        %v2387 = vadd.f32 %v2254, %v2386
        %v2388 = vpop.f32.mrf.mxu0
        %2389 = vmatprep.mubr.f32.mxu0 0.0
        %2390 = vmatmul.mubr.f32.gmra.mxu0 %v2270
        %v2391 = vpop.f32.mrf.mxu0
        %v2392 = vadd.f32 %v2254, %v2391
        %v2393 = vpop.f32.mrf.mxu0
        %2394 = vmatprep.mubr.f32.mxu0 0.0
        %2395 = vmatmul.mubr.f32.gmra.mxu0 %v2273
        %v2396 = vpop.f32.mrf.mxu0
        %v2397 = vadd.f32 %v2254, %v2396
        %v2398 = vpop.f32.mrf.mxu0
        %2399 = vmatprep.mubr.f32.mxu0 0.0
        %2400 = vmatmul.mubr.f32.gmra.mxu0 %v2276
        %v2401 = vpop.f32.mrf.mxu0
        %v2402 = vadd.f32 %v2254, %v2401
        %v2403 = vpop.f32.mrf.mxu0
        %2404 = vmatprep.mubr.f32.mxu0 0.0
        %2405 = vmatmul.mubr.f32.gmra.mxu0 %v2279
        %v2406 = vpop.f32.mrf.mxu0
        %v2407 = vadd.f32 %v2254, %v2406
        %v2408 = vpop.f32.mrf.mxu0
        %2409 = vmatprep.mubr.f32.mxu0 0.0
        %2410 = vmatmul.mubr.f32.gmra.mxu0 %v2282
        %v2411 = vpop.f32.mrf.mxu0
        %v2412 = vadd.f32 %v2254, %v2411
        %v2413 = vpop.f32.mrf.mxu0
        %2414 = vmatprep.mubr.f32.mxu0 0.0
        %2415 = vmatmul.mubr.f32.gmra.mxu0 %v2285
        %v2416 = vpop.f32.mrf.mxu0
        %v2417 = vadd.f32 %v2254, %v2416
        %v2418 = vpop.f32.mrf.mxu0
        %2419 = vmatprep.mubr.f32.mxu0 0.0
        %2420 = vmatmul.mubr.f32.gmra.mxu0 %v2288
        %v2421 = vpop.f32.mrf.mxu0
        %v2422 = vadd.f32 %v2254, %v2421
        %v2423 = vpop.f32.mrf.mxu0
        %2424 = vmatprep.mubr.f32.mxu0 0.0
        %2425 = vmatmul.mubr.f32.gmra.mxu0 %v2291
        %v2426 = vpop.f32.mrf.mxu0
        %v2427 = vadd.f32 %v2254, %v2426
        %v2428 = vpop.f32.mrf.mxu0
        %2429 = vmatprep.mubr.f32.mxu0 0.0
        %2430 = vmatmul.mubr.f32.gmra.mxu0 %v2294
        %v2431 = vpop.f32.mrf.mxu0
        %v2432 = vadd.f32 %v2254, %v2431
        %v2433 = vpop.f32.mrf.mxu0
        %2434 = vmatprep.mubr.f32.mxu0 0.0
        %2435 = vmatmul.mubr.f32.gmra.mxu0 %v2297
        %v2436 = vpop.f32.mrf.mxu0
        %v2437 = vadd.f32 %v2254, %v2436
        %v2438 = vpop.f32.mrf.mxu0
        %2439 = vmatprep.mubr.f32.mxu0 0.0
        %2440 = vmatmul.mubr.f32.gmra.mxu0 %v2300
        %v2441 = vpop.f32.mrf.mxu0
        %v2442 = vadd.f32 %v2254, %v2441
        %v2443 = vpop.f32.mrf.mxu0
        %2444 = vmatprep.mubr.f32.mxu0 0.0
        %2445 = vmatmul.mubr.f32.gmra.mxu0 %v2303
        %v2446 = vpop.f32.mrf.mxu0
        %v2447 = vadd.f32 %v2254, %v2446
        %v2448 = vpop.f32.mrf.mxu0
        %2449 = vdwg.mxu0
        %v2450 = vmul.f32 %v1273, %v1020
        %v2451 = vmul.f32 %v1278, %v1021
        %v2452 = vmul.f32 %v1283, %v1022
        %v2453 = vmul.f32 %v1288, %v1023
        %v2454 = vmul.f32 %v1293, %v1024
        %v2455 = vmul.f32 %v1298, %v1025
        %v2456 = vmul.f32 %v1303, %v1026
        %v2457 = vmul.f32 %v1308, %v1027
        %v2458 = vmul.f32 %v1313, %v1028
        %v2459 = vmul.f32 %v1318, %v1029
        %v2460 = vmul.f32 %v1323, %v1030
        %v2461 = vmul.f32 %v1328, %v1031
        %v2462 = vmul.f32 %v1333, %v1032
        %v2463 = vmul.f32 %v1338, %v1033
        %v2464 = vmul.f32 %v1343, %v1034
        %v2465 = vmul.f32 %v1348, %v1035
        %v2466 = vsel %vm2256, %v2450, 0.0
        %2467 = vadd.xlane.f32.xlu0 %v2466
        %v2468 = vpop.xlane.xlu0 %2467
        %v2469 = vsel %vm2256, %v2451, 0.0
        %2470 = vadd.xlane.f32.xlu0 %v2469
        %v2471 = vpop.xlane.xlu0 %2470
        %v2472 = vsel %vm2256, %v2452, 0.0
        %2473 = vadd.xlane.f32.xlu0 %v2472
        %v2474 = vpop.xlane.xlu0 %2473
        %v2475 = vsel %vm2256, %v2453, 0.0
        %2476 = vadd.xlane.f32.xlu0 %v2475
        %v2477 = vpop.xlane.xlu0 %2476
        %v2478 = vsel %vm2256, %v2454, 0.0
        %2479 = vadd.xlane.f32.xlu0 %v2478
        %v2480 = vpop.xlane.xlu0 %2479
        %v2481 = vsel %vm2256, %v2455, 0.0
        %2482 = vadd.xlane.f32.xlu0 %v2481
        %v2483 = vpop.xlane.xlu0 %2482
        %v2484 = vsel %vm2256, %v2456, 0.0
        %2485 = vadd.xlane.f32.xlu0 %v2484
        %v2486 = vpop.xlane.xlu0 %2485
        %v2487 = vsel %vm2256, %v2457, 0.0
        %2488 = vadd.xlane.f32.xlu0 %v2487
        %v2489 = vpop.xlane.xlu0 %2488
        %v2490 = vsel %vm2256, %v2458, 0.0
        %2491 = vadd.xlane.f32.xlu0 %v2490
        %v2492 = vpop.xlane.xlu0 %2491
        %v2493 = vsel %vm2256, %v2459, 0.0
        %2494 = vadd.xlane.f32.xlu0 %v2493
        %v2495 = vpop.xlane.xlu0 %2494
        %v2496 = vsel %vm2256, %v2460, 0.0
        %2497 = vadd.xlane.f32.xlu0 %v2496
        %v2498 = vpop.xlane.xlu0 %2497
        %v2499 = vsel %vm2256, %v2461, 0.0
        %2500 = vadd.xlane.f32.xlu0 %v2499
        %v2501 = vpop.xlane.xlu0 %2500
        %v2502 = vsel %vm2256, %v2462, 0.0
        %2503 = vadd.xlane.f32.xlu0 %v2502
        %v2504 = vpop.xlane.xlu0 %2503
        %v2505 = vsel %vm2256, %v2463, 0.0
        %2506 = vadd.xlane.f32.xlu0 %v2505
        %v2507 = vpop.xlane.xlu0 %2506
        %v2508 = vsel %vm2256, %v2464, 0.0
        %2509 = vadd.xlane.f32.xlu0 %v2508
        %v2510 = vpop.xlane.xlu0 %2509
        %v2511 = vsel %vm2256, %v2465, 0.0
        %2512 = vadd.xlane.f32.xlu0 %v2511
        %v2513 = vpop.xlane.xlu0 %2512
        %v2514 = vld [vmem:[%s11] sm:$0x1]
        %v2515 = vlaneseq
        %v2516 = vshrl.u32 %v2515, 7
        %v2517 = vsub.s32 0, %v2516
        %v2518 = vrot.slane %v2514, %v2517
        %v2519 = vmul.f32 %v2468, %v2518
        %v2520 = vmul.f32 %v2471, %v2518
        %v2521 = vmul.f32 %v2474, %v2518
        %v2522 = vmul.f32 %v2477, %v2518
        %v2523 = vmul.f32 %v2480, %v2518
        %v2524 = vmul.f32 %v2483, %v2518
        %v2525 = vmul.f32 %v2486, %v2518
        %v2526 = vmul.f32 %v2489, %v2518
        %v2527 = vmul.f32 %v2492, %v2518
        %v2528 = vmul.f32 %v2495, %v2518
        %v2529 = vmul.f32 %v2498, %v2518
        %v2530 = vmul.f32 %v2501, %v2518
        %v2531 = vmul.f32 %v2504, %v2518
        %v2532 = vmul.f32 %v2507, %v2518
        %v2533 = vmul.f32 %v2510, %v2518
        %v2534 = vmul.f32 %v2513, %v2518
        %v2535 = vadd.f32 %v2372, %v2519
        %v2536 = vadd.f32 %v2377, %v2520
        %v2537 = vadd.f32 %v2382, %v2521
        %v2538 = vadd.f32 %v2387, %v2522
        %v2539 = vadd.f32 %v2392, %v2523
        %v2540 = vadd.f32 %v2397, %v2524
        %v2541 = vadd.f32 %v2402, %v2525
        %v2542 = vadd.f32 %v2407, %v2526
        %v2543 = vadd.f32 %v2412, %v2527
        %v2544 = vadd.f32 %v2417, %v2528
        %v2545 = vadd.f32 %v2422, %v2529
        %v2546 = vadd.f32 %v2427, %v2530
        %v2547 = vadd.f32 %v2432, %v2531
        %v2548 = vadd.f32 %v2437, %v2532
        %v2549 = vadd.f32 %v2442, %v2533
        %v2550 = vadd.f32 %v2447, %v2534
        %v2551 = vmul.f32 %v1571, %v1020
        %v2552 = vmul.f32 %v1576, %v1021
        %v2553 = vmul.f32 %v1581, %v1022
        %v2554 = vmul.f32 %v1586, %v1023
        %v2555 = vmul.f32 %v1591, %v1024
        %v2556 = vmul.f32 %v1596, %v1025
        %v2557 = vmul.f32 %v1601, %v1026
        %v2558 = vmul.f32 %v1606, %v1027
        %v2559 = vmul.f32 %v1611, %v1028
        %v2560 = vmul.f32 %v1616, %v1029
        %v2561 = vmul.f32 %v1621, %v1030
        %v2562 = vmul.f32 %v1626, %v1031
        %v2563 = vmul.f32 %v1631, %v1032
        %v2564 = vmul.f32 %v1636, %v1033
        %v2565 = vmul.f32 %v1641, %v1034
        %v2566 = vmul.f32 %v1646, %v1035
        %v2567 = vsel %vm2256, %v2551, 0.0
        %2568 = vadd.xlane.f32.xlu0 %v2567
        %v2569 = vpop.xlane.xlu0 %2568
        %v2570 = vsel %vm2256, %v2552, 0.0
        %2571 = vadd.xlane.f32.xlu0 %v2570
        %v2572 = vpop.xlane.xlu0 %2571
        %v2573 = vsel %vm2256, %v2553, 0.0
        %2574 = vadd.xlane.f32.xlu0 %v2573
        %v2575 = vpop.xlane.xlu0 %2574
        %v2576 = vsel %vm2256, %v2554, 0.0
        %2577 = vadd.xlane.f32.xlu0 %v2576
        %v2578 = vpop.xlane.xlu0 %2577
        %v2579 = vsel %vm2256, %v2555, 0.0
        %2580 = vadd.xlane.f32.xlu0 %v2579
        %v2581 = vpop.xlane.xlu0 %2580
        %v2582 = vsel %vm2256, %v2556, 0.0
        %2583 = vadd.xlane.f32.xlu0 %v2582
        %v2584 = vpop.xlane.xlu0 %2583
        %v2585 = vsel %vm2256, %v2557, 0.0
        %2586 = vadd.xlane.f32.xlu0 %v2585
        %v2587 = vpop.xlane.xlu0 %2586
        %v2588 = vsel %vm2256, %v2558, 0.0
        %2589 = vadd.xlane.f32.xlu0 %v2588
        %v2590 = vpop.xlane.xlu0 %2589
        %v2591 = vsel %vm2256, %v2559, 0.0
        %2592 = vadd.xlane.f32.xlu0 %v2591
        %v2593 = vpop.xlane.xlu0 %2592
        %v2594 = vsel %vm2256, %v2560, 0.0
        %2595 = vadd.xlane.f32.xlu0 %v2594
        %v2596 = vpop.xlane.xlu0 %2595
        %v2597 = vsel %vm2256, %v2561, 0.0
        %2598 = vadd.xlane.f32.xlu0 %v2597
        %v2599 = vpop.xlane.xlu0 %2598
        %v2600 = vsel %vm2256, %v2562, 0.0
        %2601 = vadd.xlane.f32.xlu0 %v2600
        %v2602 = vpop.xlane.xlu0 %2601
        %v2603 = vsel %vm2256, %v2563, 0.0
        %2604 = vadd.xlane.f32.xlu0 %v2603
        %v2605 = vpop.xlane.xlu0 %2604
        %v2606 = vsel %vm2256, %v2564, 0.0
        %2607 = vadd.xlane.f32.xlu0 %v2606
        %v2608 = vpop.xlane.xlu0 %2607
        %v2609 = vsel %vm2256, %v2565, 0.0
        %2610 = vadd.xlane.f32.xlu0 %v2609
        %v2611 = vpop.xlane.xlu0 %2610
        %v2612 = vsel %vm2256, %v2566, 0.0
        %2613 = vadd.xlane.f32.xlu0 %v2612
        %v2614 = vpop.xlane.xlu0 %2613
        %v2615 = vld [vmem:[%s11 + $0x1] sm:$0x1]
        %v2616 = vlaneseq
        %v2617 = vshrl.u32 %v2616, 7
        %v2618 = vsub.s32 0, %v2617
        %v2619 = vrot.slane %v2615, %v2618
        %v2620 = vmul.f32 %v2569, %v2619
        %v2621 = vmul.f32 %v2572, %v2619
        %v2622 = vmul.f32 %v2575, %v2619
        %v2623 = vmul.f32 %v2578, %v2619
        %v2624 = vmul.f32 %v2581, %v2619
        %v2625 = vmul.f32 %v2584, %v2619
        %v2626 = vmul.f32 %v2587, %v2619
        %v2627 = vmul.f32 %v2590, %v2619
        %v2628 = vmul.f32 %v2593, %v2619
        %v2629 = vmul.f32 %v2596, %v2619
        %v2630 = vmul.f32 %v2599, %v2619
        %v2631 = vmul.f32 %v2602, %v2619
        %v2632 = vmul.f32 %v2605, %v2619
        %v2633 = vmul.f32 %v2608, %v2619
        %v2634 = vmul.f32 %v2611, %v2619
        %v2635 = vmul.f32 %v2614, %v2619
        %v2636 = vadd.f32 %v2535, %v2620
        %v2637 = vadd.f32 %v2536, %v2621
        %v2638 = vadd.f32 %v2537, %v2622
        %v2639 = vadd.f32 %v2538, %v2623
        %v2640 = vadd.f32 %v2539, %v2624
        %v2641 = vadd.f32 %v2540, %v2625
        %v2642 = vadd.f32 %v2541, %v2626
        %v2643 = vadd.f32 %v2542, %v2627
        %v2644 = vadd.f32 %v2543, %v2628
        %v2645 = vadd.f32 %v2544, %v2629
        %v2646 = vadd.f32 %v2545, %v2630
        %v2647 = vadd.f32 %v2546, %v2631
        %v2648 = vadd.f32 %v2547, %v2632
        %v2649 = vadd.f32 %v2548, %v2633
        %v2650 = vadd.f32 %v2549, %v2634
        %v2651 = vadd.f32 %v2550, %v2635
        %v2652 = vmul.f32 %v1571, %v1273
        %v2653 = vmul.f32 %v1576, %v1278
        %v2654 = vmul.f32 %v1581, %v1283
        %v2655 = vmul.f32 %v1586, %v1288
        %v2656 = vmul.f32 %v1591, %v1293
        %v2657 = vmul.f32 %v1596, %v1298
        %v2658 = vmul.f32 %v1601, %v1303
        %v2659 = vmul.f32 %v1606, %v1308
        %v2660 = vmul.f32 %v1611, %v1313
        %v2661 = vmul.f32 %v1616, %v1318
        %v2662 = vmul.f32 %v1621, %v1323
        %v2663 = vmul.f32 %v1626, %v1328
        %v2664 = vmul.f32 %v1631, %v1333
        %v2665 = vmul.f32 %v1636, %v1338
        %v2666 = vmul.f32 %v1641, %v1343
        %v2667 = vmul.f32 %v1646, %v1348
        %v2668 = vsel %vm2256, %v2652, 0.0
        %2669 = vadd.xlane.f32.xlu0 %v2668
        %v2670 = vpop.xlane.xlu0 %2669
        %v2671 = vsel %vm2256, %v2653, 0.0
        %2672 = vadd.xlane.f32.xlu0 %v2671
        %v2673 = vpop.xlane.xlu0 %2672
        %v2674 = vsel %vm2256, %v2654, 0.0
        %2675 = vadd.xlane.f32.xlu0 %v2674
        %v2676 = vpop.xlane.xlu0 %2675
        %v2677 = vsel %vm2256, %v2655, 0.0
        %2678 = vadd.xlane.f32.xlu0 %v2677
        %v2679 = vpop.xlane.xlu0 %2678
        %v2680 = vsel %vm2256, %v2656, 0.0
        %2681 = vadd.xlane.f32.xlu0 %v2680
        %v2682 = vpop.xlane.xlu0 %2681
        %v2683 = vsel %vm2256, %v2657, 0.0
        %2684 = vadd.xlane.f32.xlu0 %v2683
        %v2685 = vpop.xlane.xlu0 %2684
        %v2686 = vsel %vm2256, %v2658, 0.0
        %2687 = vadd.xlane.f32.xlu0 %v2686
        %v2688 = vpop.xlane.xlu0 %2687
        %v2689 = vsel %vm2256, %v2659, 0.0
        %2690 = vadd.xlane.f32.xlu0 %v2689
        %v2691 = vpop.xlane.xlu0 %2690
        %v2692 = vsel %vm2256, %v2660, 0.0
        %2693 = vadd.xlane.f32.xlu0 %v2692
        %v2694 = vpop.xlane.xlu0 %2693
        %v2695 = vsel %vm2256, %v2661, 0.0
        %2696 = vadd.xlane.f32.xlu0 %v2695
        %v2697 = vpop.xlane.xlu0 %2696
        %v2698 = vsel %vm2256, %v2662, 0.0
        %2699 = vadd.xlane.f32.xlu0 %v2698
        %v2700 = vpop.xlane.xlu0 %2699
        %v2701 = vsel %vm2256, %v2663, 0.0
        %2702 = vadd.xlane.f32.xlu0 %v2701
        %v2703 = vpop.xlane.xlu0 %2702
        %v2704 = vsel %vm2256, %v2664, 0.0
        %2705 = vadd.xlane.f32.xlu0 %v2704
        %v2706 = vpop.xlane.xlu0 %2705
        %v2707 = vsel %vm2256, %v2665, 0.0
        %2708 = vadd.xlane.f32.xlu0 %v2707
        %v2709 = vpop.xlane.xlu0 %2708
        %v2710 = vsel %vm2256, %v2666, 0.0
        %2711 = vadd.xlane.f32.xlu0 %v2710
        %v2712 = vpop.xlane.xlu0 %2711
        %v2713 = vsel %vm2256, %v2667, 0.0
        %2714 = vadd.xlane.f32.xlu0 %v2713
        %v2715 = vpop.xlane.xlu0 %2714
        %v2716 = vld [vmem:[%s11 + $0x2] sm:$0x1]
        %v2717 = vlaneseq
        %v2718 = vshrl.u32 %v2717, 7
        %v2719 = vsub.s32 0, %v2718
        %v2720 = vrot.slane %v2716, %v2719
        %v2721 = vmul.f32 %v2670, %v2720
        %v2722 = vmul.f32 %v2673, %v2720
        %v2723 = vmul.f32 %v2676, %v2720
        %v2724 = vmul.f32 %v2679, %v2720
        %v2725 = vmul.f32 %v2682, %v2720
        %v2726 = vmul.f32 %v2685, %v2720
        %v2727 = vmul.f32 %v2688, %v2720
        %v2728 = vmul.f32 %v2691, %v2720
        %v2729 = vmul.f32 %v2694, %v2720
        %v2730 = vmul.f32 %v2697, %v2720
        %v2731 = vmul.f32 %v2700, %v2720
        %v2732 = vmul.f32 %v2703, %v2720
        %v2733 = vmul.f32 %v2706, %v2720
        %v2734 = vmul.f32 %v2709, %v2720
        %v2735 = vmul.f32 %v2712, %v2720
        %v2736 = vmul.f32 %v2715, %v2720
        %v2737 = vadd.f32 %v2636, %v2721
        %v2738 = vadd.f32 %v2637, %v2722
        %v2739 = vadd.f32 %v2638, %v2723
        %v2740 = vadd.f32 %v2639, %v2724
        %v2741 = vadd.f32 %v2640, %v2725
        %v2742 = vadd.f32 %v2641, %v2726
        %v2743 = vadd.f32 %v2642, %v2727
        %v2744 = vadd.f32 %v2643, %v2728
        %v2745 = vadd.f32 %v2644, %v2729
        %v2746 = vadd.f32 %v2645, %v2730
        %v2747 = vadd.f32 %v2646, %v2731
        %v2748 = vadd.f32 %v2647, %v2732
        %v2749 = vadd.f32 %v2648, %v2733
        %v2750 = vadd.f32 %v2649, %v2734
        %v2751 = vadd.f32 %v2650, %v2735
        %v2752 = vadd.f32 %v2651, %v2736
        %v2753 = vmul.f32 %v1866, %v1020
        %v2754 = vmul.f32 %v1871, %v1021
        %v2755 = vmul.f32 %v1876, %v1022
        %v2756 = vmul.f32 %v1881, %v1023
        %v2757 = vmul.f32 %v1886, %v1024
        %v2758 = vmul.f32 %v1891, %v1025
        %v2759 = vmul.f32 %v1896, %v1026
        %v2760 = vmul.f32 %v1901, %v1027
        %v2761 = vmul.f32 %v1906, %v1028
        %v2762 = vmul.f32 %v1911, %v1029
        %v2763 = vmul.f32 %v1916, %v1030
        %v2764 = vmul.f32 %v1921, %v1031
        %v2765 = vmul.f32 %v1926, %v1032
        %v2766 = vmul.f32 %v1931, %v1033
        %v2767 = vmul.f32 %v1936, %v1034
        %v2768 = vmul.f32 %v1941, %v1035
        %v2769 = vsel %vm2256, %v2753, 0.0
        %2770 = vadd.xlane.f32.xlu0 %v2769
        %v2771 = vpop.xlane.xlu0 %2770
        %v2772 = vsel %vm2256, %v2754, 0.0
        %2773 = vadd.xlane.f32.xlu0 %v2772
        %v2774 = vpop.xlane.xlu0 %2773
        %v2775 = vsel %vm2256, %v2755, 0.0
        %2776 = vadd.xlane.f32.xlu0 %v2775
        %v2777 = vpop.xlane.xlu0 %2776
        %v2778 = vsel %vm2256, %v2756, 0.0
        %2779 = vadd.xlane.f32.xlu0 %v2778
        %v2780 = vpop.xlane.xlu0 %2779
        %v2781 = vsel %vm2256, %v2757, 0.0
        %2782 = vadd.xlane.f32.xlu0 %v2781
        %v2783 = vpop.xlane.xlu0 %2782
        %v2784 = vsel %vm2256, %v2758, 0.0
        %2785 = vadd.xlane.f32.xlu0 %v2784
        %v2786 = vpop.xlane.xlu0 %2785
        %v2787 = vsel %vm2256, %v2759, 0.0
        %2788 = vadd.xlane.f32.xlu0 %v2787
        %v2789 = vpop.xlane.xlu0 %2788
        %v2790 = vsel %vm2256, %v2760, 0.0
        %2791 = vadd.xlane.f32.xlu0 %v2790
        %v2792 = vpop.xlane.xlu0 %2791
        %v2793 = vsel %vm2256, %v2761, 0.0
        %2794 = vadd.xlane.f32.xlu0 %v2793
        %v2795 = vpop.xlane.xlu0 %2794
        %v2796 = vsel %vm2256, %v2762, 0.0
        %2797 = vadd.xlane.f32.xlu0 %v2796
        %v2798 = vpop.xlane.xlu0 %2797
        %v2799 = vsel %vm2256, %v2763, 0.0
        %2800 = vadd.xlane.f32.xlu0 %v2799
        %v2801 = vpop.xlane.xlu0 %2800
        %v2802 = vsel %vm2256, %v2764, 0.0
        %2803 = vadd.xlane.f32.xlu0 %v2802
        %v2804 = vpop.xlane.xlu0 %2803
        %v2805 = vsel %vm2256, %v2765, 0.0
        %2806 = vadd.xlane.f32.xlu0 %v2805
        %v2807 = vpop.xlane.xlu0 %2806
        %v2808 = vsel %vm2256, %v2766, 0.0
        %2809 = vadd.xlane.f32.xlu0 %v2808
        %v2810 = vpop.xlane.xlu0 %2809
        %v2811 = vsel %vm2256, %v2767, 0.0
        %2812 = vadd.xlane.f32.xlu0 %v2811
        %v2813 = vpop.xlane.xlu0 %2812
        %v2814 = vsel %vm2256, %v2768, 0.0
        %2815 = vadd.xlane.f32.xlu0 %v2814
        %v2816 = vpop.xlane.xlu0 %2815
        %v2817 = vld [vmem:[%s11 + $0x3] sm:$0x1]
        %v2818 = vlaneseq
        %v2819 = vshrl.u32 %v2818, 7
        %v2820 = vsub.s32 0, %v2819
        %v2821 = vrot.slane %v2817, %v2820
        %v2822 = vmul.f32 %v2771, %v2821
        %v2823 = vmul.f32 %v2774, %v2821
        %v2824 = vmul.f32 %v2777, %v2821
        %v2825 = vmul.f32 %v2780, %v2821
        %v2826 = vmul.f32 %v2783, %v2821
        %v2827 = vmul.f32 %v2786, %v2821
        %v2828 = vmul.f32 %v2789, %v2821
        %v2829 = vmul.f32 %v2792, %v2821
        %v2830 = vmul.f32 %v2795, %v2821
        %v2831 = vmul.f32 %v2798, %v2821
        %v2832 = vmul.f32 %v2801, %v2821
        %v2833 = vmul.f32 %v2804, %v2821
        %v2834 = vmul.f32 %v2807, %v2821
        %v2835 = vmul.f32 %v2810, %v2821
        %v2836 = vmul.f32 %v2813, %v2821
        %v2837 = vmul.f32 %v2816, %v2821
        %v2838 = vadd.f32 %v2737, %v2822
        %v2839 = vadd.f32 %v2738, %v2823
        %v2840 = vadd.f32 %v2739, %v2824
        %v2841 = vadd.f32 %v2740, %v2825
        %v2842 = vadd.f32 %v2741, %v2826
        %v2843 = vadd.f32 %v2742, %v2827
        %v2844 = vadd.f32 %v2743, %v2828
        %v2845 = vadd.f32 %v2744, %v2829
        %v2846 = vadd.f32 %v2745, %v2830
        %v2847 = vadd.f32 %v2746, %v2831
        %v2848 = vadd.f32 %v2747, %v2832
        %v2849 = vadd.f32 %v2748, %v2833
        %v2850 = vadd.f32 %v2749, %v2834
        %v2851 = vadd.f32 %v2750, %v2835
        %v2852 = vadd.f32 %v2751, %v2836
        %v2853 = vadd.f32 %v2752, %v2837
        %v2854 = vmul.f32 %v1866, %v1273
        %v2855 = vmul.f32 %v1871, %v1278
        %v2856 = vmul.f32 %v1876, %v1283
        %v2857 = vmul.f32 %v1881, %v1288
        %v2858 = vmul.f32 %v1886, %v1293
        %v2859 = vmul.f32 %v1891, %v1298
        %v2860 = vmul.f32 %v1896, %v1303
        %v2861 = vmul.f32 %v1901, %v1308
        %v2862 = vmul.f32 %v1906, %v1313
        %v2863 = vmul.f32 %v1911, %v1318
        %v2864 = vmul.f32 %v1916, %v1323
        %v2865 = vmul.f32 %v1921, %v1328
        %v2866 = vmul.f32 %v1926, %v1333
        %v2867 = vmul.f32 %v1931, %v1338
        %v2868 = vmul.f32 %v1936, %v1343
        %v2869 = vmul.f32 %v1941, %v1348
        %v2870 = vsel %vm2256, %v2854, 0.0
        %2871 = vadd.xlane.f32.xlu0 %v2870
        %v2872 = vpop.xlane.xlu0 %2871
        %v2873 = vsel %vm2256, %v2855, 0.0
        %2874 = vadd.xlane.f32.xlu0 %v2873
        %v2875 = vpop.xlane.xlu0 %2874
        %v2876 = vsel %vm2256, %v2856, 0.0
        %2877 = vadd.xlane.f32.xlu0 %v2876
        %v2878 = vpop.xlane.xlu0 %2877
        %v2879 = vsel %vm2256, %v2857, 0.0
        %2880 = vadd.xlane.f32.xlu0 %v2879
        %v2881 = vpop.xlane.xlu0 %2880
        %v2882 = vsel %vm2256, %v2858, 0.0
        %2883 = vadd.xlane.f32.xlu0 %v2882
        %v2884 = vpop.xlane.xlu0 %2883
        %v2885 = vsel %vm2256, %v2859, 0.0
        %2886 = vadd.xlane.f32.xlu0 %v2885
        %v2887 = vpop.xlane.xlu0 %2886
        %v2888 = vsel %vm2256, %v2860, 0.0
        %2889 = vadd.xlane.f32.xlu0 %v2888
        %v2890 = vpop.xlane.xlu0 %2889
        %v2891 = vsel %vm2256, %v2861, 0.0
        %2892 = vadd.xlane.f32.xlu0 %v2891
        %v2893 = vpop.xlane.xlu0 %2892
        %v2894 = vsel %vm2256, %v2862, 0.0
        %2895 = vadd.xlane.f32.xlu0 %v2894
        %v2896 = vpop.xlane.xlu0 %2895
        %v2897 = vsel %vm2256, %v2863, 0.0
        %2898 = vadd.xlane.f32.xlu0 %v2897
        %v2899 = vpop.xlane.xlu0 %2898
        %v2900 = vsel %vm2256, %v2864, 0.0
        %2901 = vadd.xlane.f32.xlu0 %v2900
        %v2902 = vpop.xlane.xlu0 %2901
        %v2903 = vsel %vm2256, %v2865, 0.0
        %2904 = vadd.xlane.f32.xlu0 %v2903
        %v2905 = vpop.xlane.xlu0 %2904
        %v2906 = vsel %vm2256, %v2866, 0.0
        %2907 = vadd.xlane.f32.xlu0 %v2906
        %v2908 = vpop.xlane.xlu0 %2907
        %v2909 = vsel %vm2256, %v2867, 0.0
        %2910 = vadd.xlane.f32.xlu0 %v2909
        %v2911 = vpop.xlane.xlu0 %2910
        %v2912 = vsel %vm2256, %v2868, 0.0
        %2913 = vadd.xlane.f32.xlu0 %v2912
        %v2914 = vpop.xlane.xlu0 %2913
        %v2915 = vsel %vm2256, %v2869, 0.0
        %2916 = vadd.xlane.f32.xlu0 %v2915
        %v2917 = vpop.xlane.xlu0 %2916
        %v2918 = vld [vmem:[%s11 + $0x4] sm:$0x1]
        %v2919 = vlaneseq
        %v2920 = vshrl.u32 %v2919, 7
        %v2921 = vsub.s32 0, %v2920
        %v2922 = vrot.slane %v2918, %v2921
        %v2923 = vmul.f32 %v2872, %v2922
        %v2924 = vmul.f32 %v2875, %v2922
        %v2925 = vmul.f32 %v2878, %v2922
        %v2926 = vmul.f32 %v2881, %v2922
        %v2927 = vmul.f32 %v2884, %v2922
        %v2928 = vmul.f32 %v2887, %v2922
        %v2929 = vmul.f32 %v2890, %v2922
        %v2930 = vmul.f32 %v2893, %v2922
        %v2931 = vmul.f32 %v2896, %v2922
        %v2932 = vmul.f32 %v2899, %v2922
        %v2933 = vmul.f32 %v2902, %v2922
        %v2934 = vmul.f32 %v2905, %v2922
        %v2935 = vmul.f32 %v2908, %v2922
        %v2936 = vmul.f32 %v2911, %v2922
        %v2937 = vmul.f32 %v2914, %v2922
        %v2938 = vmul.f32 %v2917, %v2922
        %v2939 = vadd.f32 %v2838, %v2923
        %v2940 = vadd.f32 %v2839, %v2924
        %v2941 = vadd.f32 %v2840, %v2925
        %v2942 = vadd.f32 %v2841, %v2926
        %v2943 = vadd.f32 %v2842, %v2927
        %v2944 = vadd.f32 %v2843, %v2928
        %v2945 = vadd.f32 %v2844, %v2929
        %v2946 = vadd.f32 %v2845, %v2930
        %v2947 = vadd.f32 %v2846, %v2931
        %v2948 = vadd.f32 %v2847, %v2932
        %v2949 = vadd.f32 %v2848, %v2933
        %v2950 = vadd.f32 %v2849, %v2934
        %v2951 = vadd.f32 %v2850, %v2935
        %v2952 = vadd.f32 %v2851, %v2936
        %v2953 = vadd.f32 %v2852, %v2937
        %v2954 = vadd.f32 %v2853, %v2938
        %v2955 = vmul.f32 %v1866, %v1571
        %v2956 = vmul.f32 %v1871, %v1576
        %v2957 = vmul.f32 %v1876, %v1581
        %v2958 = vmul.f32 %v1881, %v1586
        %v2959 = vmul.f32 %v1886, %v1591
        %v2960 = vmul.f32 %v1891, %v1596
        %v2961 = vmul.f32 %v1896, %v1601
        %v2962 = vmul.f32 %v1901, %v1606
        %v2963 = vmul.f32 %v1906, %v1611
        %v2964 = vmul.f32 %v1911, %v1616
        %v2965 = vmul.f32 %v1916, %v1621
        %v2966 = vmul.f32 %v1921, %v1626
        %v2967 = vmul.f32 %v1926, %v1631
        %v2968 = vmul.f32 %v1931, %v1636
        %v2969 = vmul.f32 %v1936, %v1641
        %v2970 = vmul.f32 %v1941, %v1646
        %v2971 = vsel %vm2256, %v2955, 0.0
        %2972 = vadd.xlane.f32.xlu0 %v2971
        %v2973 = vpop.xlane.xlu0 %2972
        %v2974 = vsel %vm2256, %v2956, 0.0
        %2975 = vadd.xlane.f32.xlu0 %v2974
        %v2976 = vpop.xlane.xlu0 %2975
        %v2977 = vsel %vm2256, %v2957, 0.0
        %2978 = vadd.xlane.f32.xlu0 %v2977
        %v2979 = vpop.xlane.xlu0 %2978
        %v2980 = vsel %vm2256, %v2958, 0.0
        %2981 = vadd.xlane.f32.xlu0 %v2980
        %v2982 = vpop.xlane.xlu0 %2981
        %v2983 = vsel %vm2256, %v2959, 0.0
        %2984 = vadd.xlane.f32.xlu0 %v2983
        %v2985 = vpop.xlane.xlu0 %2984
        %v2986 = vsel %vm2256, %v2960, 0.0
        %2987 = vadd.xlane.f32.xlu0 %v2986
        %v2988 = vpop.xlane.xlu0 %2987
        %v2989 = vsel %vm2256, %v2961, 0.0
        %2990 = vadd.xlane.f32.xlu0 %v2989
        %v2991 = vpop.xlane.xlu0 %2990
        %v2992 = vsel %vm2256, %v2962, 0.0
        %2993 = vadd.xlane.f32.xlu0 %v2992
        %v2994 = vpop.xlane.xlu0 %2993
        %v2995 = vsel %vm2256, %v2963, 0.0
        %2996 = vadd.xlane.f32.xlu0 %v2995
        %v2997 = vpop.xlane.xlu0 %2996
        %v2998 = vsel %vm2256, %v2964, 0.0
        %2999 = vadd.xlane.f32.xlu0 %v2998
        %v3000 = vpop.xlane.xlu0 %2999
        %v3001 = vsel %vm2256, %v2965, 0.0
        %3002 = vadd.xlane.f32.xlu0 %v3001
        %v3003 = vpop.xlane.xlu0 %3002
        %v3004 = vsel %vm2256, %v2966, 0.0
        %3005 = vadd.xlane.f32.xlu0 %v3004
        %v3006 = vpop.xlane.xlu0 %3005
        %v3007 = vsel %vm2256, %v2967, 0.0
        %3008 = vadd.xlane.f32.xlu0 %v3007
        %v3009 = vpop.xlane.xlu0 %3008
        %v3010 = vsel %vm2256, %v2968, 0.0
        %3011 = vadd.xlane.f32.xlu0 %v3010
        %v3012 = vpop.xlane.xlu0 %3011
        %v3013 = vsel %vm2256, %v2969, 0.0
        %3014 = vadd.xlane.f32.xlu0 %v3013
        %v3015 = vpop.xlane.xlu0 %3014
        %v3016 = vsel %vm2256, %v2970, 0.0
        %3017 = vadd.xlane.f32.xlu0 %v3016
        %v3018 = vpop.xlane.xlu0 %3017
        %v3019 = vld [vmem:[%s11 + $0x5] sm:$0x1]
        %v3020 = vlaneseq
        %v3021 = vshrl.u32 %v3020, 7
        %v3022 = vsub.s32 0, %v3021
        %v3023 = vrot.slane %v3019, %v3022
        %v3024 = vmul.f32 %v2973, %v3023
        %v3025 = vmul.f32 %v2976, %v3023
        %v3026 = vmul.f32 %v2979, %v3023
        %v3027 = vmul.f32 %v2982, %v3023
        %v3028 = vmul.f32 %v2985, %v3023
        %v3029 = vmul.f32 %v2988, %v3023
        %v3030 = vmul.f32 %v2991, %v3023
        %v3031 = vmul.f32 %v2994, %v3023
        %v3032 = vmul.f32 %v2997, %v3023
        %v3033 = vmul.f32 %v3000, %v3023
        %v3034 = vmul.f32 %v3003, %v3023
        %v3035 = vmul.f32 %v3006, %v3023
        %v3036 = vmul.f32 %v3009, %v3023
        %v3037 = vmul.f32 %v3012, %v3023
        %v3038 = vmul.f32 %v3015, %v3023
        %v3039 = vmul.f32 %v3018, %v3023
        %v3040 = vadd.f32 %v2939, %v3024
        %v3041 = vadd.f32 %v2940, %v3025
        %v3042 = vadd.f32 %v2941, %v3026
        %v3043 = vadd.f32 %v2942, %v3027
        %v3044 = vadd.f32 %v2943, %v3028
        %v3045 = vadd.f32 %v2944, %v3029
        %v3046 = vadd.f32 %v2945, %v3030
        %v3047 = vadd.f32 %v2946, %v3031
        %v3048 = vadd.f32 %v2947, %v3032
        %v3049 = vadd.f32 %v2948, %v3033
        %v3050 = vadd.f32 %v2949, %v3034
        %v3051 = vadd.f32 %v2950, %v3035
        %v3052 = vadd.f32 %v2951, %v3036
        %v3053 = vadd.f32 %v2952, %v3037
        %v3054 = vadd.f32 %v2953, %v3038
        %v3055 = vadd.f32 %v2954, %v3039
        %v3056 = vmul.f32 %v2167, %v1020
        %v3057 = vmul.f32 %v2172, %v1021
        %v3058 = vmul.f32 %v2177, %v1022
        %v3059 = vmul.f32 %v2182, %v1023
        %v3060 = vmul.f32 %v2187, %v1024
        %v3061 = vmul.f32 %v2192, %v1025
        %v3062 = vmul.f32 %v2197, %v1026
        %v3063 = vmul.f32 %v2202, %v1027
        %v3064 = vmul.f32 %v2207, %v1028
        %v3065 = vmul.f32 %v2212, %v1029
        %v3066 = vmul.f32 %v2217, %v1030
        %v3067 = vmul.f32 %v2222, %v1031
        %v3068 = vmul.f32 %v2227, %v1032
        %v3069 = vmul.f32 %v2232, %v1033
        %v3070 = vmul.f32 %v2237, %v1034
        %v3071 = vmul.f32 %v2242, %v1035
        %v3072 = vsel %vm2256, %v3056, 0.0
        %3073 = vadd.xlane.f32.xlu0 %v3072
        %v3074 = vpop.xlane.xlu0 %3073
        %v3075 = vsel %vm2256, %v3057, 0.0
        %3076 = vadd.xlane.f32.xlu0 %v3075
        %v3077 = vpop.xlane.xlu0 %3076
        %v3078 = vsel %vm2256, %v3058, 0.0
        %3079 = vadd.xlane.f32.xlu0 %v3078
        %v3080 = vpop.xlane.xlu0 %3079
        %v3081 = vsel %vm2256, %v3059, 0.0
        %3082 = vadd.xlane.f32.xlu0 %v3081
        %v3083 = vpop.xlane.xlu0 %3082
        %v3084 = vsel %vm2256, %v3060, 0.0
        %3085 = vadd.xlane.f32.xlu0 %v3084
        %v3086 = vpop.xlane.xlu0 %3085
        %v3087 = vsel %vm2256, %v3061, 0.0
        %3088 = vadd.xlane.f32.xlu0 %v3087
        %v3089 = vpop.xlane.xlu0 %3088
        %v3090 = vsel %vm2256, %v3062, 0.0
        %3091 = vadd.xlane.f32.xlu0 %v3090
        %v3092 = vpop.xlane.xlu0 %3091
        %v3093 = vsel %vm2256, %v3063, 0.0
        %3094 = vadd.xlane.f32.xlu0 %v3093
        %v3095 = vpop.xlane.xlu0 %3094
        %v3096 = vsel %vm2256, %v3064, 0.0
        %3097 = vadd.xlane.f32.xlu0 %v3096
        %v3098 = vpop.xlane.xlu0 %3097
        %v3099 = vsel %vm2256, %v3065, 0.0
        %3100 = vadd.xlane.f32.xlu0 %v3099
        %v3101 = vpop.xlane.xlu0 %3100
        %v3102 = vsel %vm2256, %v3066, 0.0
        %3103 = vadd.xlane.f32.xlu0 %v3102
        %v3104 = vpop.xlane.xlu0 %3103
        %v3105 = vsel %vm2256, %v3067, 0.0
        %3106 = vadd.xlane.f32.xlu0 %v3105
        %v3107 = vpop.xlane.xlu0 %3106
        %v3108 = vsel %vm2256, %v3068, 0.0
        %3109 = vadd.xlane.f32.xlu0 %v3108
        %v3110 = vpop.xlane.xlu0 %3109
        %v3111 = vsel %vm2256, %v3069, 0.0
        %3112 = vadd.xlane.f32.xlu0 %v3111
        %v3113 = vpop.xlane.xlu0 %3112
        %v3114 = vsel %vm2256, %v3070, 0.0
        %3115 = vadd.xlane.f32.xlu0 %v3114
        %v3116 = vpop.xlane.xlu0 %3115
        %v3117 = vsel %vm2256, %v3071, 0.0
        %3118 = vadd.xlane.f32.xlu0 %v3117
        %v3119 = vpop.xlane.xlu0 %3118
        %v3120 = vld [vmem:[%s11 + $0x6] sm:$0x1]
        %v3121 = vlaneseq
        %v3122 = vshrl.u32 %v3121, 7
        %v3123 = vsub.s32 0, %v3122
        %v3124 = vrot.slane %v3120, %v3123
        %v3125 = vmul.f32 %v3074, %v3124
        %v3126 = vmul.f32 %v3077, %v3124
        %v3127 = vmul.f32 %v3080, %v3124
        %v3128 = vmul.f32 %v3083, %v3124
        %v3129 = vmul.f32 %v3086, %v3124
        %v3130 = vmul.f32 %v3089, %v3124
        %v3131 = vmul.f32 %v3092, %v3124
        %v3132 = vmul.f32 %v3095, %v3124
        %v3133 = vmul.f32 %v3098, %v3124
        %v3134 = vmul.f32 %v3101, %v3124
        %v3135 = vmul.f32 %v3104, %v3124
        %v3136 = vmul.f32 %v3107, %v3124
        %v3137 = vmul.f32 %v3110, %v3124
        %v3138 = vmul.f32 %v3113, %v3124
        %v3139 = vmul.f32 %v3116, %v3124
        %v3140 = vmul.f32 %v3119, %v3124
        %v3141 = vadd.f32 %v3040, %v3125
        %v3142 = vadd.f32 %v3041, %v3126
        %v3143 = vadd.f32 %v3042, %v3127
        %v3144 = vadd.f32 %v3043, %v3128
        %v3145 = vadd.f32 %v3044, %v3129
        %v3146 = vadd.f32 %v3045, %v3130
        %v3147 = vadd.f32 %v3046, %v3131
        %v3148 = vadd.f32 %v3047, %v3132
        %v3149 = vadd.f32 %v3048, %v3133
        %v3150 = vadd.f32 %v3049, %v3134
        %v3151 = vadd.f32 %v3050, %v3135
        %v3152 = vadd.f32 %v3051, %v3136
        %v3153 = vadd.f32 %v3052, %v3137
        %v3154 = vadd.f32 %v3053, %v3138
        %v3155 = vadd.f32 %v3054, %v3139
        %v3156 = vadd.f32 %v3055, %v3140
        %v3157 = vmul.f32 %v2167, %v1273
        %v3158 = vmul.f32 %v2172, %v1278
        %v3159 = vmul.f32 %v2177, %v1283
        %v3160 = vmul.f32 %v2182, %v1288
        %v3161 = vmul.f32 %v2187, %v1293
        %v3162 = vmul.f32 %v2192, %v1298
        %v3163 = vmul.f32 %v2197, %v1303
        %v3164 = vmul.f32 %v2202, %v1308
        %v3165 = vmul.f32 %v2207, %v1313
        %v3166 = vmul.f32 %v2212, %v1318
        %v3167 = vmul.f32 %v2217, %v1323
        %v3168 = vmul.f32 %v2222, %v1328
        %v3169 = vmul.f32 %v2227, %v1333
        %v3170 = vmul.f32 %v2232, %v1338
        %v3171 = vmul.f32 %v2237, %v1343
        %v3172 = vmul.f32 %v2242, %v1348
        %v3173 = vsel %vm2256, %v3157, 0.0
        %3174 = vadd.xlane.f32.xlu0 %v3173
        %v3175 = vpop.xlane.xlu0 %3174
        %v3176 = vsel %vm2256, %v3158, 0.0
        %3177 = vadd.xlane.f32.xlu0 %v3176
        %v3178 = vpop.xlane.xlu0 %3177
        %v3179 = vsel %vm2256, %v3159, 0.0
        %3180 = vadd.xlane.f32.xlu0 %v3179
        %v3181 = vpop.xlane.xlu0 %3180
        %v3182 = vsel %vm2256, %v3160, 0.0
        %3183 = vadd.xlane.f32.xlu0 %v3182
        %v3184 = vpop.xlane.xlu0 %3183
        %v3185 = vsel %vm2256, %v3161, 0.0
        %3186 = vadd.xlane.f32.xlu0 %v3185
        %v3187 = vpop.xlane.xlu0 %3186
        %v3188 = vsel %vm2256, %v3162, 0.0
        %3189 = vadd.xlane.f32.xlu0 %v3188
        %v3190 = vpop.xlane.xlu0 %3189
        %v3191 = vsel %vm2256, %v3163, 0.0
        %3192 = vadd.xlane.f32.xlu0 %v3191
        %v3193 = vpop.xlane.xlu0 %3192
        %v3194 = vsel %vm2256, %v3164, 0.0
        %3195 = vadd.xlane.f32.xlu0 %v3194
        %v3196 = vpop.xlane.xlu0 %3195
        %v3197 = vsel %vm2256, %v3165, 0.0
        %3198 = vadd.xlane.f32.xlu0 %v3197
        %v3199 = vpop.xlane.xlu0 %3198
        %v3200 = vsel %vm2256, %v3166, 0.0
        %3201 = vadd.xlane.f32.xlu0 %v3200
        %v3202 = vpop.xlane.xlu0 %3201
        %v3203 = vsel %vm2256, %v3167, 0.0
        %3204 = vadd.xlane.f32.xlu0 %v3203
        %v3205 = vpop.xlane.xlu0 %3204
        %v3206 = vsel %vm2256, %v3168, 0.0
        %3207 = vadd.xlane.f32.xlu0 %v3206
        %v3208 = vpop.xlane.xlu0 %3207
        %v3209 = vsel %vm2256, %v3169, 0.0
        %3210 = vadd.xlane.f32.xlu0 %v3209
        %v3211 = vpop.xlane.xlu0 %3210
        %v3212 = vsel %vm2256, %v3170, 0.0
        %3213 = vadd.xlane.f32.xlu0 %v3212
        %v3214 = vpop.xlane.xlu0 %3213
        %v3215 = vsel %vm2256, %v3171, 0.0
        %3216 = vadd.xlane.f32.xlu0 %v3215
        %v3217 = vpop.xlane.xlu0 %3216
        %v3218 = vsel %vm2256, %v3172, 0.0
        %3219 = vadd.xlane.f32.xlu0 %v3218
        %v3220 = vpop.xlane.xlu0 %3219
        %v3221 = vld [vmem:[%s11 + $0x7] sm:$0x1]
        %v3222 = vlaneseq
        %v3223 = vshrl.u32 %v3222, 7
        %v3224 = vsub.s32 0, %v3223
        %v3225 = vrot.slane %v3221, %v3224
        %v3226 = vmul.f32 %v3175, %v3225
        %v3227 = vmul.f32 %v3178, %v3225
        %v3228 = vmul.f32 %v3181, %v3225
        %v3229 = vmul.f32 %v3184, %v3225
        %v3230 = vmul.f32 %v3187, %v3225
        %v3231 = vmul.f32 %v3190, %v3225
        %v3232 = vmul.f32 %v3193, %v3225
        %v3233 = vmul.f32 %v3196, %v3225
        %v3234 = vmul.f32 %v3199, %v3225
        %v3235 = vmul.f32 %v3202, %v3225
        %v3236 = vmul.f32 %v3205, %v3225
        %v3237 = vmul.f32 %v3208, %v3225
        %v3238 = vmul.f32 %v3211, %v3225
        %v3239 = vmul.f32 %v3214, %v3225
        %v3240 = vmul.f32 %v3217, %v3225
        %v3241 = vmul.f32 %v3220, %v3225
        %v3242 = vadd.f32 %v3141, %v3226
        %v3243 = vadd.f32 %v3142, %v3227
        %v3244 = vadd.f32 %v3143, %v3228
        %v3245 = vadd.f32 %v3144, %v3229
        %v3246 = vadd.f32 %v3145, %v3230
        %v3247 = vadd.f32 %v3146, %v3231
        %v3248 = vadd.f32 %v3147, %v3232
        %v3249 = vadd.f32 %v3148, %v3233
        %v3250 = vadd.f32 %v3149, %v3234
        %v3251 = vadd.f32 %v3150, %v3235
        %v3252 = vadd.f32 %v3151, %v3236
        %v3253 = vadd.f32 %v3152, %v3237
        %v3254 = vadd.f32 %v3153, %v3238
        %v3255 = vadd.f32 %v3154, %v3239
        %v3256 = vadd.f32 %v3155, %v3240
        %v3257 = vadd.f32 %v3156, %v3241
        %v3258 = vmul.f32 %v2167, %v1571
        %v3259 = vmul.f32 %v2172, %v1576
        %v3260 = vmul.f32 %v2177, %v1581
        %v3261 = vmul.f32 %v2182, %v1586
        %v3262 = vmul.f32 %v2187, %v1591
        %v3263 = vmul.f32 %v2192, %v1596
        %v3264 = vmul.f32 %v2197, %v1601
        %v3265 = vmul.f32 %v2202, %v1606
        %v3266 = vmul.f32 %v2207, %v1611
        %v3267 = vmul.f32 %v2212, %v1616
        %v3268 = vmul.f32 %v2217, %v1621
        %v3269 = vmul.f32 %v2222, %v1626
        %v3270 = vmul.f32 %v2227, %v1631
        %v3271 = vmul.f32 %v2232, %v1636
        %v3272 = vmul.f32 %v2237, %v1641
        %v3273 = vmul.f32 %v2242, %v1646
        %v3274 = vsel %vm2256, %v3258, 0.0
        %3275 = vadd.xlane.f32.xlu0 %v3274
        %v3276 = vpop.xlane.xlu0 %3275
        %v3277 = vsel %vm2256, %v3259, 0.0
        %3278 = vadd.xlane.f32.xlu0 %v3277
        %v3279 = vpop.xlane.xlu0 %3278
        %v3280 = vsel %vm2256, %v3260, 0.0
        %3281 = vadd.xlane.f32.xlu0 %v3280
        %v3282 = vpop.xlane.xlu0 %3281
        %v3283 = vsel %vm2256, %v3261, 0.0
        %3284 = vadd.xlane.f32.xlu0 %v3283
        %v3285 = vpop.xlane.xlu0 %3284
        %v3286 = vsel %vm2256, %v3262, 0.0
        %3287 = vadd.xlane.f32.xlu0 %v3286
        %v3288 = vpop.xlane.xlu0 %3287
        %v3289 = vsel %vm2256, %v3263, 0.0
        %3290 = vadd.xlane.f32.xlu0 %v3289
        %v3291 = vpop.xlane.xlu0 %3290
        %v3292 = vsel %vm2256, %v3264, 0.0
        %3293 = vadd.xlane.f32.xlu0 %v3292
        %v3294 = vpop.xlane.xlu0 %3293
        %v3295 = vsel %vm2256, %v3265, 0.0
        %3296 = vadd.xlane.f32.xlu0 %v3295
        %v3297 = vpop.xlane.xlu0 %3296
        %v3298 = vsel %vm2256, %v3266, 0.0
        %3299 = vadd.xlane.f32.xlu0 %v3298
        %v3300 = vpop.xlane.xlu0 %3299
        %v3301 = vsel %vm2256, %v3267, 0.0
        %3302 = vadd.xlane.f32.xlu0 %v3301
        %v3303 = vpop.xlane.xlu0 %3302
        %v3304 = vsel %vm2256, %v3268, 0.0
        %3305 = vadd.xlane.f32.xlu0 %v3304
        %v3306 = vpop.xlane.xlu0 %3305
        %v3307 = vsel %vm2256, %v3269, 0.0
        %3308 = vadd.xlane.f32.xlu0 %v3307
        %v3309 = vpop.xlane.xlu0 %3308
        %v3310 = vsel %vm2256, %v3270, 0.0
        %3311 = vadd.xlane.f32.xlu0 %v3310
        %v3312 = vpop.xlane.xlu0 %3311
        %v3313 = vsel %vm2256, %v3271, 0.0
        %3314 = vadd.xlane.f32.xlu0 %v3313
        %v3315 = vpop.xlane.xlu0 %3314
        %v3316 = vsel %vm2256, %v3272, 0.0
        %3317 = vadd.xlane.f32.xlu0 %v3316
        %v3318 = vpop.xlane.xlu0 %3317
        %v3319 = vsel %vm2256, %v3273, 0.0
        %3320 = vadd.xlane.f32.xlu0 %v3319
        %v3321 = vpop.xlane.xlu0 %3320
        %v3322 = vld [vmem:[%s11 + $0x8] sm:$0x1]
        %v3323 = vlaneseq
        %v3324 = vshrl.u32 %v3323, 7
        %v3325 = vsub.s32 0, %v3324
        %v3326 = vrot.slane %v3322, %v3325
        %v3327 = vmul.f32 %v3276, %v3326
        %v3328 = vmul.f32 %v3279, %v3326
        %v3329 = vmul.f32 %v3282, %v3326
        %v3330 = vmul.f32 %v3285, %v3326
        %v3331 = vmul.f32 %v3288, %v3326
        %v3332 = vmul.f32 %v3291, %v3326
        %v3333 = vmul.f32 %v3294, %v3326
        %v3334 = vmul.f32 %v3297, %v3326
        %v3335 = vmul.f32 %v3300, %v3326
        %v3336 = vmul.f32 %v3303, %v3326
        %v3337 = vmul.f32 %v3306, %v3326
        %v3338 = vmul.f32 %v3309, %v3326
        %v3339 = vmul.f32 %v3312, %v3326
        %v3340 = vmul.f32 %v3315, %v3326
        %v3341 = vmul.f32 %v3318, %v3326
        %v3342 = vmul.f32 %v3321, %v3326
        %v3343 = vadd.f32 %v3242, %v3327
        %v3344 = vadd.f32 %v3243, %v3328
        %v3345 = vadd.f32 %v3244, %v3329
        %v3346 = vadd.f32 %v3245, %v3330
        %v3347 = vadd.f32 %v3246, %v3331
        %v3348 = vadd.f32 %v3247, %v3332
        %v3349 = vadd.f32 %v3248, %v3333
        %v3350 = vadd.f32 %v3249, %v3334
        %v3351 = vadd.f32 %v3250, %v3335
        %v3352 = vadd.f32 %v3251, %v3336
        %v3353 = vadd.f32 %v3252, %v3337
        %v3354 = vadd.f32 %v3253, %v3338
        %v3355 = vadd.f32 %v3254, %v3339
        %v3356 = vadd.f32 %v3255, %v3340
        %v3357 = vadd.f32 %v3256, %v3341
        %v3358 = vadd.f32 %v3257, %v3342
        %v3359 = vmul.f32 %v2167, %v1866
        %v3360 = vmul.f32 %v2172, %v1871
        %v3361 = vmul.f32 %v2177, %v1876
        %v3362 = vmul.f32 %v2182, %v1881
        %v3363 = vmul.f32 %v2187, %v1886
        %v3364 = vmul.f32 %v2192, %v1891
        %v3365 = vmul.f32 %v2197, %v1896
        %v3366 = vmul.f32 %v2202, %v1901
        %v3367 = vmul.f32 %v2207, %v1906
        %v3368 = vmul.f32 %v2212, %v1911
        %v3369 = vmul.f32 %v2217, %v1916
        %v3370 = vmul.f32 %v2222, %v1921
        %v3371 = vmul.f32 %v2227, %v1926
        %v3372 = vmul.f32 %v2232, %v1931
        %v3373 = vmul.f32 %v2237, %v1936
        %v3374 = vmul.f32 %v2242, %v1941
        %v3375 = vsel %vm2256, %v3359, 0.0
        %3376 = vadd.xlane.f32.xlu0 %v3375
        %v3377 = vpop.xlane.xlu0 %3376
        %v3378 = vsel %vm2256, %v3360, 0.0
        %3379 = vadd.xlane.f32.xlu0 %v3378
        %v3380 = vpop.xlane.xlu0 %3379
        %v3381 = vsel %vm2256, %v3361, 0.0
        %3382 = vadd.xlane.f32.xlu0 %v3381
        %v3383 = vpop.xlane.xlu0 %3382
        %v3384 = vsel %vm2256, %v3362, 0.0
        %3385 = vadd.xlane.f32.xlu0 %v3384
        %v3386 = vpop.xlane.xlu0 %3385
        %v3387 = vsel %vm2256, %v3363, 0.0
        %3388 = vadd.xlane.f32.xlu0 %v3387
        %v3389 = vpop.xlane.xlu0 %3388
        %v3390 = vsel %vm2256, %v3364, 0.0
        %3391 = vadd.xlane.f32.xlu0 %v3390
        %v3392 = vpop.xlane.xlu0 %3391
        %v3393 = vsel %vm2256, %v3365, 0.0
        %3394 = vadd.xlane.f32.xlu0 %v3393
        %v3395 = vpop.xlane.xlu0 %3394
        %v3396 = vsel %vm2256, %v3366, 0.0
        %3397 = vadd.xlane.f32.xlu0 %v3396
        %v3398 = vpop.xlane.xlu0 %3397
        %v3399 = vsel %vm2256, %v3367, 0.0
        %3400 = vadd.xlane.f32.xlu0 %v3399
        %v3401 = vpop.xlane.xlu0 %3400
        %v3402 = vsel %vm2256, %v3368, 0.0
        %3403 = vadd.xlane.f32.xlu0 %v3402
        %v3404 = vpop.xlane.xlu0 %3403
        %v3405 = vsel %vm2256, %v3369, 0.0
        %3406 = vadd.xlane.f32.xlu0 %v3405
        %v3407 = vpop.xlane.xlu0 %3406
        %v3408 = vsel %vm2256, %v3370, 0.0
        %3409 = vadd.xlane.f32.xlu0 %v3408
        %v3410 = vpop.xlane.xlu0 %3409
        %v3411 = vsel %vm2256, %v3371, 0.0
        %3412 = vadd.xlane.f32.xlu0 %v3411
        %v3413 = vpop.xlane.xlu0 %3412
        %v3414 = vsel %vm2256, %v3372, 0.0
        %3415 = vadd.xlane.f32.xlu0 %v3414
        %v3416 = vpop.xlane.xlu0 %3415
        %v3417 = vsel %vm2256, %v3373, 0.0
        %3418 = vadd.xlane.f32.xlu0 %v3417
        %v3419 = vpop.xlane.xlu0 %3418
        %v3420 = vsel %vm2256, %v3374, 0.0
        %3421 = vadd.xlane.f32.xlu0 %v3420
        %v3422 = vpop.xlane.xlu0 %3421
        %v3423 = vld [vmem:[%s11 + $0x9] sm:$0x1]
        %v3424 = vlaneseq
        %v3425 = vshrl.u32 %v3424, 7
        %v3426 = vsub.s32 0, %v3425
        %v3427 = vrot.slane %v3423, %v3426
        %v3428 = vmul.f32 %v3377, %v3427
        %v3429 = vmul.f32 %v3380, %v3427
        %v3430 = vmul.f32 %v3383, %v3427
        %v3431 = vmul.f32 %v3386, %v3427
        %v3432 = vmul.f32 %v3389, %v3427
        %v3433 = vmul.f32 %v3392, %v3427
        %v3434 = vmul.f32 %v3395, %v3427
        %v3435 = vmul.f32 %v3398, %v3427
        %v3436 = vmul.f32 %v3401, %v3427
        %v3437 = vmul.f32 %v3404, %v3427
        %v3438 = vmul.f32 %v3407, %v3427
        %v3439 = vmul.f32 %v3410, %v3427
        %v3440 = vmul.f32 %v3413, %v3427
        %v3441 = vmul.f32 %v3416, %v3427
        %v3442 = vmul.f32 %v3419, %v3427
        %v3443 = vmul.f32 %v3422, %v3427
        %v3444 = vadd.f32 %v3343, %v3428
        %v3445 = vadd.f32 %v3344, %v3429
        %v3446 = vadd.f32 %v3345, %v3430
        %v3447 = vadd.f32 %v3346, %v3431
        %v3448 = vadd.f32 %v3347, %v3432
        %v3449 = vadd.f32 %v3348, %v3433
        %v3450 = vadd.f32 %v3349, %v3434
        %v3451 = vadd.f32 %v3350, %v3435
        %v3452 = vadd.f32 %v3351, %v3436
        %v3453 = vadd.f32 %v3352, %v3437
        %v3454 = vadd.f32 %v3353, %v3438
        %v3455 = vadd.f32 %v3354, %v3439
        %v3456 = vadd.f32 %v3355, %v3440
        %v3457 = vadd.f32 %v3356, %v3441
        %v3458 = vadd.f32 %v3357, %v3442
        %v3459 = vadd.f32 %v3358, %v3443
        %v3460 = vmax.f32 %v3444, 0.0
        %v3461 = vmax.f32 %v3445, 0.0
        %v3462 = vmax.f32 %v3446, 0.0
        %v3463 = vmax.f32 %v3447, 0.0
        %v3464 = vmax.f32 %v3448, 0.0
        %v3465 = vmax.f32 %v3449, 0.0
        %v3466 = vmax.f32 %v3450, 0.0
        %v3467 = vmax.f32 %v3451, 0.0
        %v3468 = vmax.f32 %v3452, 0.0
        %v3469 = vmax.f32 %v3453, 0.0
        %v3470 = vmax.f32 %v3454, 0.0
        %v3471 = vmax.f32 %v3455, 0.0
        %v3472 = vmax.f32 %v3456, 0.0
        %v3473 = vmax.f32 %v3457, 0.0
        %v3474 = vmax.f32 %v3458, 0.0
        %v3475 = vmax.f32 %v3459, 0.0
        %v3476 = vld [vmem:[%s13] sm:$0xff]
        %v3477 = vld [vmem:[%s13 + $0x8] sm:$0xff]
        %v3478 = vld [vmem:[%s13 + $0x10] sm:$0xff]
        %v3479 = vld [vmem:[%s13 + $0x18] sm:$0xff]
        %v3480 = vld [vmem:[%s13 + $0x20] sm:$0xff]
        %v3481 = vld [vmem:[%s13 + $0x28] sm:$0xff]
        %v3482 = vld [vmem:[%s13 + $0x30] sm:$0xff]
        %v3483 = vld [vmem:[%s13 + $0x38] sm:$0xff]
        %v3484 = vld [vmem:[%s14] sm:$0x1]
        %v3486 = vlaneseq
        %v3487 = vshrl.u32 %v3486, 7
        %v3488 = vsub.s32 0, %v3487
        %v3489 = vrot.slane %v3484, %v3488
        %v3492 = vsel %vm826, %v3460, 0
        %v3495 = vsel %vm826, %v3461, 0
        %v3498 = vsel %vm826, %v3462, 0
        %v3501 = vsel %vm826, %v3463, 0
        %v3504 = vsel %vm826, %v3464, 0
        %v3507 = vsel %vm826, %v3465, 0
        %v3510 = vsel %vm826, %v3466, 0
        %v3513 = vsel %vm826, %v3467, 0
        %v3516 = vsel %vm826, %v3468, 0
        %v3519 = vsel %vm826, %v3469, 0
        %v3522 = vsel %vm826, %v3470, 0
        %v3525 = vsel %vm826, %v3471, 0
        %v3528 = vsel %vm826, %v3472, 0
        %v3531 = vsel %vm826, %v3473, 0
        %v3534 = vsel %vm826, %v3474, 0
        %v3537 = vsel %vm826, %v3475, 0
        %3539 = vmatprep.subr.mxu0 0.0
        %3540 = vmatpush1.msra.mxu0 0.0
        %3541 = vmatprep.subr.mxu0 0.0
        %3542 = vmatpush1.msra.mxu0 0.0
        %3543 = vmatprep.subr.mxu0 0.0
        %3544 = vmatpush1.msra.mxu0 0.0
        %3545 = vmatprep.subr.mxu0 0.0
        %3546 = vmatpush1.msra.mxu0 0.0
        %3547 = vmatprep.subr.mxu0 0.0
        %3548 = vmatpush1.msra.mxu0 0.0
        %3549 = vmatprep.subr.mxu0 0.0
        %3550 = vmatpush1.msra.mxu0 0.0
        %3551 = vmatprep.subr.mxu0 0.0
        %3552 = vmatpush1.msra.mxu0 0.0
        %3553 = vmatprep.subr.mxu0 0.0
        %3554 = vmatpush1.msra.mxu0 0.0
        %3555 = vmatprep.subr.mxu0 0.0
        %3556 = vmatpush1.msra.mxu0 %v3483
        %3557 = vmatprep.subr.mxu0 0.0
        %3558 = vmatpush1.msra.mxu0 %v3482
        %3559 = vmatprep.subr.mxu0 0.0
        %3560 = vmatpush1.msra.mxu0 %v3481
        %3561 = vmatprep.subr.mxu0 0.0
        %3562 = vmatpush1.msra.mxu0 %v3480
        %3563 = vmatprep.subr.mxu0 0.0
        %3564 = vmatpush1.msra.mxu0 %v3479
        %3565 = vmatprep.subr.mxu0 0.0
        %3566 = vmatpush1.msra.mxu0 %v3478
        %3567 = vmatprep.subr.mxu0 0.0
        %3568 = vmatpush1.msra.mxu0 %v3477
        %3569 = vmatprep.subr.mxu0 0.0
        %3570 = vmatpush1.msra.mxu0 %v3476
        %3571 = vmatprep.subr.mxu0 0.0
        %3572 = vmatpush2.msra.mxu0 0.0
        %3573 = vmatprep.subr.mxu0 0.0
        %3574 = vmatpush2.msra.mxu0 0.0
        %3575 = vmatprep.subr.mxu0 0.0
        %3576 = vmatpush2.msra.mxu0 0.0
        %3577 = vmatprep.subr.mxu0 0.0
        %3578 = vmatpush2.msra.mxu0 0.0
        %3579 = vmatprep.subr.mxu0 0.0
        %3580 = vmatpush2.msra.mxu0 0.0
        %3581 = vmatprep.subr.mxu0 0.0
        %3582 = vmatpush2.msra.mxu0 0.0
        %3583 = vmatprep.subr.mxu0 0.0
        %3584 = vmatpush2.msra.mxu0 0.0
        %3585 = vmatprep.subr.mxu0 0.0
        %3586 = vmatpush2.msra.mxu0 0.0
        %3587 = vmatprep.subr.mxu0 0.0
        %3588 = vmatpush2.msra.mxu0 0.0
        %3589 = vmatprep.subr.mxu0 0.0
        %3590 = vmatpush2.msra.mxu0 0.0
        %3591 = vmatprep.subr.mxu0 0.0
        %3592 = vmatpush2.msra.mxu0 0.0
        %3593 = vmatprep.subr.mxu0 0.0
        %3594 = vmatpush2.msra.mxu0 0.0
        %3595 = vmatprep.subr.mxu0 0.0
        %3596 = vmatpush2.msra.mxu0 0.0
        %3597 = vmatprep.subr.mxu0 0.0
        %3598 = vmatpush2.msra.mxu0 0.0
        %3599 = vmatprep.subr.mxu0 0.0
        %3600 = vmatpush2.msra.mxu0 0.0
        %3601 = vmatprep.subr.mxu0 0.0
        %3602 = vmatpush2.msra.mxu0 0.0
        %3603 = vmatprep.mubr.f32.mxu0 0.0
        %3604 = vmatmul.mubr.f32.gmra.mxu0 %v3492
        %v3605 = vpop.f32.mrf.mxu0
        %v3606 = vadd.f32 %v3489, %v3605
        %v3607 = vpop.f32.mrf.mxu0
        %3608 = vmatprep.mubr.f32.mxu0 0.0
        %3609 = vmatmul.mubr.f32.gmra.mxu0 %v3495
        %v3610 = vpop.f32.mrf.mxu0
        %v3611 = vadd.f32 %v3489, %v3610
        %v3612 = vpop.f32.mrf.mxu0
        %3613 = vmatprep.mubr.f32.mxu0 0.0
        %3614 = vmatmul.mubr.f32.gmra.mxu0 %v3498
        %v3615 = vpop.f32.mrf.mxu0
        %v3616 = vadd.f32 %v3489, %v3615
        %v3617 = vpop.f32.mrf.mxu0
        %3618 = vmatprep.mubr.f32.mxu0 0.0
        %3619 = vmatmul.mubr.f32.gmra.mxu0 %v3501
        %v3620 = vpop.f32.mrf.mxu0
        %v3621 = vadd.f32 %v3489, %v3620
        %v3622 = vpop.f32.mrf.mxu0
        %3623 = vmatprep.mubr.f32.mxu0 0.0
        %3624 = vmatmul.mubr.f32.gmra.mxu0 %v3504
        %v3625 = vpop.f32.mrf.mxu0
        %v3626 = vadd.f32 %v3489, %v3625
        %v3627 = vpop.f32.mrf.mxu0
        %3628 = vmatprep.mubr.f32.mxu0 0.0
        %3629 = vmatmul.mubr.f32.gmra.mxu0 %v3507
        %v3630 = vpop.f32.mrf.mxu0
        %v3631 = vadd.f32 %v3489, %v3630
        %v3632 = vpop.f32.mrf.mxu0
        %3633 = vmatprep.mubr.f32.mxu0 0.0
        %3634 = vmatmul.mubr.f32.gmra.mxu0 %v3510
        %v3635 = vpop.f32.mrf.mxu0
        %v3636 = vadd.f32 %v3489, %v3635
        %v3637 = vpop.f32.mrf.mxu0
        %3638 = vmatprep.mubr.f32.mxu0 0.0
        %3639 = vmatmul.mubr.f32.gmra.mxu0 %v3513
        %v3640 = vpop.f32.mrf.mxu0
        %v3641 = vadd.f32 %v3489, %v3640
        %v3642 = vpop.f32.mrf.mxu0
        %3643 = vmatprep.mubr.f32.mxu0 0.0
        %3644 = vmatmul.mubr.f32.gmra.mxu0 %v3516
        %v3645 = vpop.f32.mrf.mxu0
        %v3646 = vadd.f32 %v3489, %v3645
        %v3647 = vpop.f32.mrf.mxu0
        %3648 = vmatprep.mubr.f32.mxu0 0.0
        %3649 = vmatmul.mubr.f32.gmra.mxu0 %v3519
        %v3650 = vpop.f32.mrf.mxu0
        %v3651 = vadd.f32 %v3489, %v3650
        %v3652 = vpop.f32.mrf.mxu0
        %3653 = vmatprep.mubr.f32.mxu0 0.0
        %3654 = vmatmul.mubr.f32.gmra.mxu0 %v3522
        %v3655 = vpop.f32.mrf.mxu0
        %v3656 = vadd.f32 %v3489, %v3655
        %v3657 = vpop.f32.mrf.mxu0
        %3658 = vmatprep.mubr.f32.mxu0 0.0
        %3659 = vmatmul.mubr.f32.gmra.mxu0 %v3525
        %v3660 = vpop.f32.mrf.mxu0
        %v3661 = vadd.f32 %v3489, %v3660
        %v3662 = vpop.f32.mrf.mxu0
        %3663 = vmatprep.mubr.f32.mxu0 0.0
        %3664 = vmatmul.mubr.f32.gmra.mxu0 %v3528
        %v3665 = vpop.f32.mrf.mxu0
        %v3666 = vadd.f32 %v3489, %v3665
        %v3667 = vpop.f32.mrf.mxu0
        %3668 = vmatprep.mubr.f32.mxu0 0.0
        %3669 = vmatmul.mubr.f32.gmra.mxu0 %v3531
        %v3670 = vpop.f32.mrf.mxu0
        %v3671 = vadd.f32 %v3489, %v3670
        %v3672 = vpop.f32.mrf.mxu0
        %3673 = vmatprep.mubr.f32.mxu0 0.0
        %3674 = vmatmul.mubr.f32.gmra.mxu0 %v3534
        %v3675 = vpop.f32.mrf.mxu0
        %v3676 = vadd.f32 %v3489, %v3675
        %v3677 = vpop.f32.mrf.mxu0
        %3678 = vmatprep.mubr.f32.mxu0 0.0
        %3679 = vmatmul.mubr.f32.gmra.mxu0 %v3537
        %v3680 = vpop.f32.mrf.mxu0
        %v3681 = vadd.f32 %v3489, %v3680
        %v3682 = vpop.f32.mrf.mxu0
        %3683 = vdwg.mxu0
        %v3684 = vmax.f32 %v3606, 0.0
        %v3685 = vmax.f32 %v3611, 0.0
        %v3686 = vmax.f32 %v3616, 0.0
        %v3687 = vmax.f32 %v3621, 0.0
        %v3688 = vmax.f32 %v3626, 0.0
        %v3689 = vmax.f32 %v3631, 0.0
        %v3690 = vmax.f32 %v3636, 0.0
        %v3691 = vmax.f32 %v3641, 0.0
        %v3692 = vmax.f32 %v3646, 0.0
        %v3693 = vmax.f32 %v3651, 0.0
        %v3694 = vmax.f32 %v3656, 0.0
        %v3695 = vmax.f32 %v3661, 0.0
        %v3696 = vmax.f32 %v3666, 0.0
        %v3697 = vmax.f32 %v3671, 0.0
        %v3698 = vmax.f32 %v3676, 0.0
        %v3699 = vmax.f32 %v3681, 0.0
        %v3700 = vld [vmem:[%s15] sm:$0x1]
        %v3701 = vld [vmem:[#allocation2] sm:$0x1]
        %3703 = vset.pattern.permute.xlu0 0
        %3704 = vperm.xlu0 %3703, %v3701
        %v3705 = vpop.permute.xlu0 %3704
        %v3707 = vlaneseq
        %v3708 = vshrl.u32 %v3707, 7
        %v3709 = vsub.s32 0, %v3708
        %v3710 = vrot.slane %v3705, %v3709
        %v3712 = vsel %vm2256, %v3700, 0
        %v3715 = vsel %vm2256, %v3684, 0
        %v3718 = vsel %vm2256, %v3685, 0
        %v3721 = vsel %vm2256, %v3686, 0
        %v3724 = vsel %vm2256, %v3687, 0
        %v3727 = vsel %vm2256, %v3688, 0
        %v3730 = vsel %vm2256, %v3689, 0
        %v3733 = vsel %vm2256, %v3690, 0
        %v3736 = vsel %vm2256, %v3691, 0
        %v3739 = vsel %vm2256, %v3692, 0
        %v3742 = vsel %vm2256, %v3693, 0
        %v3745 = vsel %vm2256, %v3694, 0
        %v3748 = vsel %vm2256, %v3695, 0
        %v3751 = vsel %vm2256, %v3696, 0
        %v3754 = vsel %vm2256, %v3697, 0
        %v3757 = vsel %vm2256, %v3698, 0
        %v3760 = vsel %vm2256, %v3699, 0
        %3762 = vmatprep.subr.mxu0 0.0
        %3763 = vmatpush1.xpose.msra.mxu0 %v3760
        %3764 = vmatprep.subr.mxu0 0.0
        %3765 = vmatpush1.xpose.msra.mxu0 %v3757
        %3766 = vmatprep.subr.mxu0 0.0
        %3767 = vmatpush1.xpose.msra.mxu0 %v3754
        %3768 = vmatprep.subr.mxu0 0.0
        %3769 = vmatpush1.xpose.msra.mxu0 %v3751
        %3770 = vmatprep.subr.mxu0 0.0
        %3771 = vmatpush1.xpose.msra.mxu0 %v3748
        %3772 = vmatprep.subr.mxu0 0.0
        %3773 = vmatpush1.xpose.msra.mxu0 %v3745
        %3774 = vmatprep.subr.mxu0 0.0
        %3775 = vmatpush1.xpose.msra.mxu0 %v3742
        %3776 = vmatprep.subr.mxu0 0.0
        %3777 = vmatpush1.xpose.msra.mxu0 %v3739
        %3778 = vmatprep.subr.mxu0 0.0
        %3779 = vmatpush1.xpose.msra.mxu0 %v3736
        %3780 = vmatprep.subr.mxu0 0.0
        %3781 = vmatpush1.xpose.msra.mxu0 %v3733
        %3782 = vmatprep.subr.mxu0 0.0
        %3783 = vmatpush1.xpose.msra.mxu0 %v3730
        %3784 = vmatprep.subr.mxu0 0.0
        %3785 = vmatpush1.xpose.msra.mxu0 %v3727
        %3786 = vmatprep.subr.mxu0 0.0
        %3787 = vmatpush1.xpose.msra.mxu0 %v3724
        %3788 = vmatprep.subr.mxu0 0.0
        %3789 = vmatpush1.xpose.msra.mxu0 %v3721
        %3790 = vmatprep.subr.mxu0 0.0
        %3791 = vmatpush1.xpose.msra.mxu0 %v3718
        %3792 = vmatprep.subr.mxu0 0.0
        %3793 = vmatpush1.xpose.msra.mxu0 %v3715
        %3794 = vmatprep.subr.mxu0 0.0
        %3795 = vmatpush2.xpose.msra.mxu0 0.0
        %3796 = vmatprep.subr.mxu0 0.0
        %3797 = vmatpush2.xpose.msra.mxu0 0.0
        %3798 = vmatprep.subr.mxu0 0.0
        %3799 = vmatpush2.xpose.msra.mxu0 0.0
        %3800 = vmatprep.subr.mxu0 0.0
        %3801 = vmatpush2.xpose.msra.mxu0 0.0
        %3802 = vmatprep.subr.mxu0 0.0
        %3803 = vmatpush2.xpose.msra.mxu0 0.0
        %3804 = vmatprep.subr.mxu0 0.0
        %3805 = vmatpush2.xpose.msra.mxu0 0.0
        %3806 = vmatprep.subr.mxu0 0.0
        %3807 = vmatpush2.xpose.msra.mxu0 0.0
        %3808 = vmatprep.subr.mxu0 0.0
        %3809 = vmatpush2.xpose.msra.mxu0 0.0
        %3810 = vmatprep.subr.mxu0 0.0
        %3811 = vmatpush2.xpose.msra.mxu0 0.0
        %3812 = vmatprep.subr.mxu0 0.0
        %3813 = vmatpush2.xpose.msra.mxu0 0.0
        %3814 = vmatprep.subr.mxu0 0.0
        %3815 = vmatpush2.xpose.msra.mxu0 0.0
        %3816 = vmatprep.subr.mxu0 0.0
        %3817 = vmatpush2.xpose.msra.mxu0 0.0
        %3818 = vmatprep.subr.mxu0 0.0
        %3819 = vmatpush2.xpose.msra.mxu0 0.0
        %3820 = vmatprep.subr.mxu0 0.0
        %3821 = vmatpush2.xpose.msra.mxu0 0.0
        %3822 = vmatprep.subr.mxu0 0.0
        %3823 = vmatpush2.xpose.msra.mxu0 0.0
        %3824 = vmatprep.subr.mxu0 0.0
        %3825 = vmatpush2.xpose.msra.mxu0 0.0
        %3826 = vmatprep.mubr.f32.mxu0 0.0
        %3827 = vmatmul.mubr.f32.gmra.mxu0 %v3712
        %v3828 = vpop.f32.mrf.mxu0
        %v3829 = vadd.f32 %v3710, %v3828
        %v3830 = vpop.f32.mrf.mxu0
        %3831 = vdwg.mxu0
        %v3832 = vxor.u32 %v3829, 2147483648
        %v3833 = vmul.f32 %v3832, 1.442695
        %v3834 = vpow.pop %v3833
        %v3835 = vadd.f32 %v3834, 1.0
        %v3836 = vrcp.pop %v3835
        %v3837 = vmul.f32 1.0, %v3836
        %3838 = vst [vmem:[%s559] sm:$0x1] %v3837
        %s3839 = sand.u32 %s408, 1
        %s3840 = scalar_lea.sflag [#allocation4], %s3839
        %s3841 = sand.u32 %s408, 1
        %s3842 = scalar_lea.vmem [#allocation3], %s3841
        // Predicated region
        $region89: #{tpu_custom_call.1} parent=87 // pred_check
          %p3843 = pneg %p418
        $region90: #{tpu_custom_call.1} parent=87 // pred_check_branch
          %3845 = sbr.rel (%p3843) target = $region92
        $region91: #{tpu_custom_call.1} parent=87 // pred_region
          %s3847 = ssub.s32 16, 16
          %3848 = vsyncadd %s3840, %s3847
          %s3849 = smul.addr %s33, 16
          %s3850 = scalar_lea.hbm %s17, %s3849
          %s3852 = sshll.u32 %s3842, 4
          %s3853 = int_to_ptr.vmem [resolvable:$true] %s3852
          %3855 = dma.vmem_to_hbm [thread:$0]  %s3853, 16, %s3850, %s3840
        $region92: #{tpu_custom_call.1} parent=87 // pred_fallthru
          _
      $region88: #{tpu_custom_call.1} parent=5 // pred_fallthru
        _
      %p3856 = scmp.le.s32.totalorder 2, %s28
      // Predicated region
      $region93: #{tpu_custom_call.1} parent=5 // pred_check
        %p3857 = pneg %p3856
      $region94: #{tpu_custom_call.1} parent=5 // pred_check_branch
        %3859 = sbr.rel (%p3857) target = $region96
      $region95: #{tpu_custom_call.1} parent=5 // pred_region
        %s3860 = ssub.s32 %s28, 2
        // Predicated region
        $region97: #{tpu_custom_call.1} parent=95 // pred_check
          %p3861 = pneg %p424
        $region98: #{tpu_custom_call.1} parent=95 // pred_check_branch
          %3863 = sbr.rel (%p3861) target = $region100
        $region99: #{tpu_custom_call.1} parent=95 // pred_region
          %s3864 = sand.u32 %s409, 1
          %s3865 = scalar_lea.sflag [#allocation4], %s3864
          %s3866 = sand.u32 %s409, 1
          %s3867 = scalar_lea.vmem [#allocation3], %s3866
          %3868 = dma.done %s3865, 16
        $region100: #{tpu_custom_call.1} parent=95 // pred_fallthru
          _
      $region96: #{tpu_custom_call.1} parent=5 // pred_fallthru
        _
    $region6: #{tpu_custom_call.1} parent=1 // loop_footer
      %s32 = sadd.s32 1, %s28
    $region7: #{tpu_custom_call.1} parent=1 // loop_footer_branch
      %27 = sbr.rel target = $region3
    $region8: #{tpu_custom_call.1} parent=1 // loop_exit
      _
    %3869 = vsyncpa [#allocation4], 1
    %s3870 = scalar_lea.sflag [#allocation4], 1
    %3871 = vsyncpa %s3870, 1

</llo_original>
